<compile_context>
chip_gen: v7x
topology: tpu7x:2x2x1
jax: 0.10.0
libtpu: 0.0.40
codegen_flags: <defaults>
</compile_context>

<pallas_src>
import functools

import jax
import jax.numpy as jnp
from jax.experimental import pallas as pl
from jax.experimental.pallas import tpu as pltpu

_LANES = 128   # TPU lane width; all channel dims padded to a multiple of this
_W0 = 8        # sublane-aligned column offset of the interior in the scratch


def _round_up(n, m):
    return (n + m - 1) // m * m


# ---------------------------------------------------------------------------
# Fused BottleNeck kernel
# ---------------------------------------------------------------------------
def _bottleneck_kernel(x_ref, w1_ref, b1_ref, wdw_ref, bdw_ref,
                       w2_ref, b2_ref, w3_ref, b3_ref, rproj_ref,
                       o_ref, exp_ref, *, s, Hp, Wp, residual):
    """One batch element per grid step; the expanded activation stays in VMEM."""
    P2 = s * s
    Tp = w1_ref.shape[1]

    # The halo ring (and unused left-pad columns) only needs to be zero; the
    # interior is fully overwritten every step and scratch persists across the
    # sequential ("arbitrary") grid, so zero exactly once.
    @pl.when(pl.program_id(0) == 0)
    def _init():
        exp_ref[...] = jnp.zeros(exp_ref.shape, exp_ref.dtype)

    # ---- 1x1 expand + folded BN1 + ReLU6 (MXU: bf16 operands, f32 acc) ----
    xf = x_ref[0]                                          # (P2*Hp*Wp, Cin) bf16
    y1 = jnp.dot(xf, w1_ref[...], preferred_element_type=jnp.float32)
    y1 = jnp.clip(y1 + b1_ref[...], 0.0, 6.0)
    # Sublane-aligned, lane-dense interior store of the bf16 expanded act.
    exp_ref[:, 1:Hp + 1, _W0:_W0 + Wp, :] = (
        y1.reshape(P2, Hp, Wp, Tp).astype(exp_ref.dtype))

    # ---- depthwise 3x3 (stride s): unrolled 9-tap FMA, f32 accumulation ----
    acc = None
    for dy in range(3):
        for dx in range(3):
            if s == 1:
                c0 = _W0 - 1 + dx
                tap = exp_ref[0, dy:dy + Hp, c0:c0 + Wp, :]
            else:  # s == 2: polyphase layout -> only contiguous static slices
                ph = ((dy + 1) % 2) * 2 + ((dx + 1) % 2)
                r0 = (dy + 1) // 2
                c0 = _W0 - 1 + (dx + 1) // 2
                tap = exp_ref[ph, r0:r0 + Hp, c0:c0 + Wp, :]
            contrib = tap.astype(jnp.float32) * wdw_ref[dy * 3 + dx, :]
            acc = contrib if acc is None else acc + contrib
    y2 = acc + bdw_ref[...]                                # (Hp, Wp, Tp) f32

    # ---- 1x1 "depth" conv + folded BN2 + ReLU6 ----
    y3 = jnp.dot(y2.reshape(Hp * Wp, Tp).astype(jnp.bfloat16), w2_ref[...],
                 preferred_element_type=jnp.float32)
    y3 = jnp.clip(y3 + b2_ref[...], 0.0, 6.0)

    # ---- 1x1 project + folded BN3 (+ residual via [I|0] identity matmul) ----
    y4 = jnp.dot(y3.astype(jnp.bfloat16), w3_ref[...],
                 preferred_element_type=jnp.float32) + b3_ref[...]
    if residual:                                           # s==1 and Cin==Cout
        y4 = y4 + jnp.dot(xf, rproj_ref[...],
                          preferred_element_type=jnp.float32)
    o_ref[0] = y4.astype(o_ref.dtype)                      # lane-dense (HW, 128)


# ---------------------------------------------------------------------------
# Host-side wrapper
# ---------------------------------------------------------------------------
def _to_phases_flat(x_nhwc, s):
    """(N,H,W,C) -> (N, s*s*(H//s)*(W//s), C); phase = (row%s)*s + (col%s)."""
    N, H, W, C = x_nhwc.shape
    if s == 1:
        return x_nhwc.reshape(N, H * W, C)
    assert H % s == 0 and W % s == 0
    Hp, Wp = H // s, W // s
    xr = x_nhwc.reshape(N, Hp, s, Wp, s, C).transpose(0, 2, 4, 1, 3, 5)
    return xr.reshape(N, s * s * Hp * Wp, C)


@functools.partial(jax.jit, static_argnames=("s", "cout"))
def bottleneck_forward(x_nchw, prep, *, s, cout):
    """Fused BottleNeck forward.  x_nchw: (N,Cin,H,W) -> (N,cout,H//s,W//s)."""
    x = jnp.transpose(x_nchw, (0, 2, 3, 1)).astype(jnp.bfloat16)   # NHWC bf16
    N, H, W, Cin = x.shape
    Tp = prep["w1"].shape[1]
    Cp = prep["w3"].shape[1]
    Hp, Wp = H // s, W // s
    P2 = s * s
    M = P2 * Hp * Wp
    HWo = Hp * Wp
    residual = (s == 1 and Cin == cout)
    xph = _to_phases_flat(x, s)                                    # (N, M, Cin)

    kernel = functools.partial(_bottleneck_kernel, s=s, Hp=Hp, Wp=Wp,
                               residual=residual)

    out = pl.pallas_call(
        kernel,
        out_shape=jax.ShapeDtypeStruct((N, HWo, Cp), jnp.float32),
        grid=(N,),
        in_specs=[
            pl.BlockSpec((1, M, Cin), lambda n: (n, 0, 0)),   # x (phases, flat)
            pl.BlockSpec((Cin, Tp), lambda n: (0, 0)),        # w1 (bf16)
            pl.BlockSpec((1, Tp), lambda n: (0, 0)),          # b1
            pl.BlockSpec((9, Tp), lambda n: (0, 0)),          # wdw
            pl.BlockSpec((1, Tp), lambda n: (0, 0)),          # bdw
            pl.BlockSpec((Tp, Tp), lambda n: (0, 0)),         # w2 (bf16)
            pl.BlockSpec((1, Tp), lambda n: (0, 0)),          # b2
            pl.BlockSpec((Tp, Cp), lambda n: (0, 0)),         # w3 (bf16)
            pl.BlockSpec((1, Cp), lambda n: (0, 0)),          # b3
            pl.BlockSpec((Cin, Cp), lambda n: (0, 0)),        # residual [I|0]
        ],
        out_specs=pl.BlockSpec((1, HWo, Cp), lambda n: (n, 0, 0)),
        scratch_shapes=[
            pltpu.VMEM((P2, Hp + 2, _W0 + Wp + 1, Tp), jnp.bfloat16)],
        compiler_params=pltpu.CompilerParams(
            # "arbitrary": grid runs sequentially on one core so the one-time
            # halo zeroing at program_id==0 stays valid for every step.
            dimension_semantics=("arbitrary",),
            vmem_limit_bytes=32 * 1024 * 1024),
    )(xph, prep["w1"], prep["b1"], prep["wdw"], prep["bdw"],
      prep["w2"], prep["b2"], prep["w3"], prep["b3"], prep["rproj"])

    out = out[:, :, :cout].reshape(N, Hp, Wp, cout)
    return jnp.transpose(out, (0, 3, 1, 2))                 # back to NCHW f32


# ---------------------------------------------------------------------------
# Parameter init (torch-layout) and BN-folded, lane-padded weight prep
# ---------------------------------------------------------------------------
class PRNG:
    def __init__(self, seed):
        self.key = jax.random.PRNGKey(seed)

    def next(self):
        self.key, k = jax.random.split(self.key)
        return k


def conv_params(rng, o, i, k):
    w = 0.1 * jax.random.normal(rng.next(), (o, i, k, k), jnp.float32)
    b = 0.05 * jax.random.normal(rng.next(), (o,), jnp.float32)
    return w, b


def dwconv_params(rng, c):
    w = 0.1 * jax.random.normal(rng.next(), (c, 1, 3, 3), jnp.float32)
    b = 0.05 * jax.random.normal(rng.next(), (c,), jnp.float32)
    return w, b


def bn_params(rng, c):
    gamma = 1.0 + 0.1 * jax.random.normal(rng.next(), (c,), jnp.float32)
    beta = 0.1 * jax.random.normal(rng.next(), (c,), jnp.float32)
    mean = 0.1 * jax.random.normal(rng.next(), (c,), jnp.float32)
    var = 1.0 + 0.1 * jnp.abs(jax.random.normal(rng.next(), (c,), jnp.float32))
    return (gamma, beta, mean, var)


def init_bottleneck(rng, in_filters, out_filters, t):
    tf = in_filters * t
    return dict(
        conv1=conv_params(rng, tf, in_filters, 1), bn1=bn_params(rng, tf),
        spatial2=dwconv_params(rng, tf),
        depth2=conv_params(rng, tf, tf, 1), bn2=bn_params(rng, tf),
        conv3=conv_params(rng, out_filters, tf, 1),
        bn3=bn_params(rng, out_filters),
    )


def _fold_bn(bn, eps=1e-5):
    gamma, beta, mean, var = bn
    scale = gamma / jnp.sqrt(var + eps)
    shift = beta - mean * scale
    return scale, shift


def _pad_last(a, n):
    pad = n - a.shape[-1]
    if pad == 0:
        return a
    return jnp.pad(a, [(0, 0)] * (a.ndim - 1) + [(0, pad)])


def prepare_bottleneck(raw, lanes=_LANES):
    """Fold BN into lane-padded (K,N)-layout bf16 weights; biases stay f32.

    Padded channels are inert: zero weights/biases keep them exactly zero
    through ReLU6 / depthwise / the final projection.
    """
    s1, sh1 = _fold_bn(raw["bn1"])
    s2, sh2 = _fold_bn(raw["bn2"])
    s3, sh3 = _fold_bn(raw["bn3"])
    w1, b1 = raw["conv1"]          # (T, Cin, 1, 1)
    wdw, bdw = raw["spatial2"]     # (T, 1, 3, 3)
    w2, b2 = raw["depth2"]         # (T, T, 1, 1)
    w3, b3 = raw["conv3"]          # (Cout, T, 1, 1)
    T, Cin = w1.shape[0], w1.shape[1]
    Cout = w3.shape[0]
    Tp = _round_up(T, lanes)
    Cp = _round_up(Cout, lanes)
    w2m = jnp.pad(w2[:, :, 0, 0].T * s2[None, :], ((0, Tp - T), (0, Tp - T)))
    w3m = jnp.pad(w3[:, :, 0, 0].T * s3[None, :], ((0, Tp - T), (0, Cp - Cout)))
    return dict(
        w1=_pad_last(w1[:, :, 0, 0].T * s1[None, :], Tp).astype(jnp.bfloat16),
        b1=_pad_last((b1 * s1 + sh1).reshape(1, T), Tp),
        wdw=_pad_last(jnp.transpose(wdw[:, 0], (1, 2, 0)).reshape(9, T), Tp),
        bdw=_pad_last(bdw.reshape(1, T), Tp),
        w2=w2m.astype(jnp.bfloat16),
        b2=_pad_last((b2 * s2 + sh2).reshape(1, T), Tp),
        w3=w3m.astype(jnp.bfloat16),
        b3=_pad_last((b3 * s3 + sh3).reshape(1, Cout), Cp),
        # [I | 0] residual injection matrix (exact bf16 identity on the MXU).
        rproj=jnp.eye(Cin, Cp, dtype=jnp.bfloat16),
    )


# ---------------------------------------------------------------------------
# Pure-JAX reference (same folded / bf16 numerics) for correctness checking
# ---------------------------------------------------------------------------
@functools.partial(jax.jit, static_argnames=("s", "cout"))
def bottleneck_ref(x_nchw, prep, *, s, cout):
    x = jnp.transpose(x_nchw, (0, 2, 3, 1)).astype(jnp.bfloat16)
    N, H, W, Cin = x.shape
    Tp = prep["w1"].shape[1]
    Cp = prep["w3"].shape[1]
    Hp, Wp = H // s, W // s
    y1 = jnp.dot(x.reshape(-1, Cin), prep["w1"],
                 preferred_element_type=jnp.float32) + prep["b1"]
    y1 = jnp.clip(y1, 0.0, 6.0).astype(jnp.bfloat16).astype(jnp.float32)
    yp = jnp.pad(y1.reshape(N, H, W, Tp), ((0, 0), (1, 1), (1, 1), (0, 0)))
    acc = jnp.zeros((N, Hp, Wp, Tp), jnp.float32)
    for dy in range(3):
        for dx in range(3):
            tap = yp[:, dy:dy + s * (Hp - 1) + 1:s,
                     dx:dx + s * (Wp - 1) + 1:s, :]
            acc = acc + tap * prep["wdw"][dy * 3 + dx]
    y2 = acc + prep["bdw"]
    y3 = jnp.dot(y2.reshape(-1, Tp).astype(jnp.bfloat16), prep["w2"],
                 preferred_element_type=jnp.float32) + prep["b2"]
    y3 = jnp.clip(y3, 0.0, 6.0)
    y4 = jnp.dot(y3.astype(jnp.bfloat16), prep["w3"],
                 preferred_element_type=jnp.float32) + prep["b3"]
    y4 = y4.reshape(N, Hp, Wp, Cp)[..., :cout]
    if s == 1 and Cin == cout:
        y4 = y4 + x.astype(jnp.float32)
    return jnp.transpose(y4, (0, 3, 1, 2))


if __name__ == "__main__":
    rng = PRNG(0)
    x = jax.random.normal(jax.random.PRNGKey(0), (2, 16, 16, 16), jnp.float32)

    configs = [
        dict(in_filters=16, out_filters=16, t=6, s=1),   # residual branch
        dict(in_filters=16, out_filters=24, t=6, s=2),   # strided branch
    ]
    for cfg in configs:
        raw = init_bottleneck(rng, cfg["in_filters"], cfg["out_filters"],
                              cfg["t"])
        prep = prepare_bottleneck(raw)
        out = bottleneck_forward(x, prep, s=cfg["s"], cout=cfg["out_filters"])
        ref = bottleneck_ref(x, prep, s=cfg["s"], cout=cfg["out_filters"])
        jax.block_until_ready((out, ref))
        assert out.shape == ref.shape, (out.shape, ref.shape)
        assert bool(jnp.all(jnp.isfinite(out)))
        err = float(jnp.max(jnp.abs(out - ref)))
        assert err < 2e-3, f"max abs error {err} (s={cfg['s']})"
    print("KERNEL_OK")
</pallas_src>

<mosaic_0001>
module attributes {stable_mosaic.version = 11 : i64} {
  func.func @_bottleneck_kernel(%arg0: i32, %arg1: memref<1x256x16xbf16, #tpu.memory_space<vmem>>, %arg2: memref<16x128xbf16, #tpu.memory_space<vmem>>, %arg3: memref<1x128xf32, #tpu.memory_space<vmem>>, %arg4: memref<9x128xf32, #tpu.memory_space<vmem>>, %arg5: memref<1x128xf32, #tpu.memory_space<vmem>>, %arg6: memref<128x128xbf16, #tpu.memory_space<vmem>>, %arg7: memref<1x128xf32, #tpu.memory_space<vmem>>, %arg8: memref<128x128xbf16, #tpu.memory_space<vmem>>, %arg9: memref<1x128xf32, #tpu.memory_space<vmem>>, %arg10: memref<16x128xbf16, #tpu.memory_space<vmem>>, %arg11: memref<1x256x128xf32, #tpu.memory_space<vmem>>, %arg12: memref<1x18x25x128xbf16, #tpu.memory_space<vmem>>) attributes {dimension_semantics = [#tpu.dimension_semantics<arbitrary>], iteration_bounds = array<i64: 2>, scalar_prefetch = 0 : i64, scratch_operands = 1 : i64, tpu.core_type = #tpu.core_type<tc>, window_params = [{transform_indices = @transform_0, window_bounds = array<i64: 1, 256, 16>}, {pipeline_mode = #tpu.pipeline_mode<synchronous>, transform_indices = @transform_1, window_bounds = array<i64: 16, 128>}, {pipeline_mode = #tpu.pipeline_mode<synchronous>, transform_indices = @transform_2, window_bounds = array<i64: 1, 128>}, {pipeline_mode = #tpu.pipeline_mode<synchronous>, transform_indices = @transform_3, window_bounds = array<i64: 9, 128>}, {pipeline_mode = #tpu.pipeline_mode<synchronous>, transform_indices = @transform_4, window_bounds = array<i64: 1, 128>}, {pipeline_mode = #tpu.pipeline_mode<synchronous>, transform_indices = @transform_5, window_bounds = array<i64: 128, 128>}, {pipeline_mode = #tpu.pipeline_mode<synchronous>, transform_indices = @transform_6, window_bounds = array<i64: 1, 128>}, {pipeline_mode = #tpu.pipeline_mode<synchronous>, transform_indices = @transform_7, window_bounds = array<i64: 128, 128>}, {pipeline_mode = #tpu.pipeline_mode<synchronous>, transform_indices = @transform_8, window_bounds = array<i64: 1, 128>}, {pipeline_mode = #tpu.pipeline_mode<synchronous>, transform_indices = @transform_9, window_bounds = array<i64: 16, 128>}, {transform_indices = @transform_10, window_bounds = array<i64: 1, 256, 128>}]} {
    %c0_i32 = arith.constant 0 : i32
    %0 = arith.cmpi eq, %arg0, %c0_i32 : i32
    %1 = arith.extui %0 : i1 to i32
    %c0_i32_0 = arith.constant 0 : i32
    %2 = arith.cmpi ne, %1, %c0_i32_0 : i32
    scf.if %2 {
      %cst_78 = arith.constant 0.000000e+00 : bf16
      %124 = vector.broadcast %cst_78 : bf16 to vector<1x18x25x128xbf16>
      %c0_79 = arith.constant 0 : index
      %c0_80 = arith.constant 0 : index
      %c0_81 = arith.constant 0 : index
      %c0_82 = arith.constant 0 : index
      %125 = vector.load %arg12[%c0_79, %c0_80, %c0_81, %c0_82] : memref<1x18x25x128xbf16, #tpu.memory_space<vmem>>, vector<1x18x25x128xbf16>
      tpu.vector_store %arg12[%c0_79, %c0_80, %c0_81, %c0_82], %124 {strides = array<i32>} : memref<1x18x25x128xbf16, #tpu.memory_space<vmem>>, vector<1x18x25x128xbf16>,
    } else {
    }
    %c0 = arith.constant 0 : index
    %c0_1 = arith.constant 0 : index
    %c0_2 = arith.constant 0 : index
    %3 = vector.load %arg1[%c0, %c0_1, %c0_2] : memref<1x256x16xbf16, #tpu.memory_space<vmem>>, vector<1x256x16xbf16>
    %4 = vector.shape_cast %3 : vector<1x256x16xbf16> to vector<256x16xbf16>
    %c0_3 = arith.constant 0 : index
    %c0_4 = arith.constant 0 : index
    %5 = vector.load %arg2[%c0_3, %c0_4] : memref<16x128xbf16, #tpu.memory_space<vmem>>, vector<16x128xbf16>
    %cst = arith.constant dense<0.000000e+00> : vector<256x128xf32>
    %6 = tpu.matmul %4, %5, %cst {dimension_numbers = #tpu.dot_dimension_numbers<[1], [0], [0], [1], [0, 0, 1, 1], [], []>} : vector<256x16xbf16>, vector<16x128xbf16>, vector<256x128xf32> -> vector<256x128xf32>
    %c0_5 = arith.constant 0 : index
    %c0_6 = arith.constant 0 : index
    %7 = vector.load %arg3[%c0_5, %c0_6] : memref<1x128xf32, #tpu.memory_space<vmem>>, vector<1x128xf32>
    %8 = vector.broadcast %7 : vector<1x128xf32> to vector<256x128xf32>
    %9 = arith.addf %6, %8 : vector<256x128xf32>
    %cst_7 = arith.constant 0.000000e+00 : f32
    %cst_8 = arith.constant 6.000000e+00 : f32
    %10 = vector.broadcast %cst_7 : f32 to vector<256x128xf32>
    %11 = arith.maximumf %10, %9 : vector<256x128xf32>
    %12 = vector.broadcast %cst_8 : f32 to vector<256x128xf32>
    %13 = arith.minimumf %12, %11 : vector<256x128xf32>
    %14 = vector.shape_cast %13 : vector<256x128xf32> to vector<1x16x16x128xf32>
    %15 = arith.truncf %14 : vector<1x16x16x128xf32> to vector<1x16x16x128xbf16>
    %c0_9 = arith.constant 0 : index
    %c1 = arith.constant 1 : index
    %c8 = arith.constant 8 : index
    %c0_10 = arith.constant 0 : index
    %16 = vector.load %arg12[%c0_9, %c1, %c8, %c0_10] : memref<1x18x25x128xbf16, #tpu.memory_space<vmem>>, vector<1x16x16x128xbf16>
    tpu.vector_store %arg12[%c0_9, %c1, %c8, %c0_10], %15 {strides = array<i32>} : memref<1x18x25x128xbf16, #tpu.memory_space<vmem>>, vector<1x16x16x128xbf16>,
    %c0_11 = arith.constant 0 : index
    %c0_12 = arith.constant 0 : index
    %c7 = arith.constant 7 : index
    %c0_13 = arith.constant 0 : index
    %17 = vector.load %arg12[%c0_11, %c0_12, %c7, %c0_13] : memref<1x18x25x128xbf16, #tpu.memory_space<vmem>>, vector<1x16x16x128xbf16>
    %18 = vector.shape_cast %17 : vector<1x16x16x128xbf16> to vector<16x16x128xbf16>
    %19 = arith.extf %18 : vector<16x16x128xbf16> to vector<16x16x128xf32>
    %c0_14 = arith.constant 0 : index
    %c0_15 = arith.constant 0 : index
    %20 = vector.load %arg4[%c0_14, %c0_15] : memref<9x128xf32, #tpu.memory_space<vmem>>, vector<1x128xf32>
    %21 = vector.shape_cast %20 : vector<1x128xf32> to vector<128xf32>
    %22 = vector.shape_cast %21 : vector<128xf32> to vector<1x1x128xf32>
    %23 = vector.broadcast %22 : vector<1x1x128xf32> to vector<16x16x128xf32>
    %24 = arith.mulf %19, %23 : vector<16x16x128xf32>
    %c0_16 = arith.constant 0 : index
    %c0_17 = arith.constant 0 : index
    %c8_18 = arith.constant 8 : index
    %c0_19 = arith.constant 0 : index
    %25 = vector.load %arg12[%c0_16, %c0_17, %c8_18, %c0_19] : memref<1x18x25x128xbf16, #tpu.memory_space<vmem>>, vector<1x16x16x128xbf16>
    %26 = vector.shape_cast %25 : vector<1x16x16x128xbf16> to vector<16x16x128xbf16>
    %27 = arith.extf %26 : vector<16x16x128xbf16> to vector<16x16x128xf32>
    %c1_20 = arith.constant 1 : index
    %c0_21 = arith.constant 0 : index
    %28 = vector.load %arg4[%c1_20, %c0_21] : memref<9x128xf32, #tpu.memory_space<vmem>>, vector<1x128xf32>
    %29 = vector.shape_cast %28 : vector<1x128xf32> to vector<128xf32>
    %30 = vector.shape_cast %29 : vector<128xf32> to vector<1x1x128xf32>
    %31 = vector.broadcast %30 : vector<1x1x128xf32> to vector<16x16x128xf32>
    %32 = arith.mulf %27, %31 : vector<16x16x128xf32>
    %33 = arith.addf %24, %32 : vector<16x16x128xf32>
    %c0_22 = arith.constant 0 : index
    %c0_23 = arith.constant 0 : index
    %c9 = arith.constant 9 : index
    %c0_24 = arith.constant 0 : index
    %34 = vector.load %arg12[%c0_22, %c0_23, %c9, %c0_24] : memref<1x18x25x128xbf16, #tpu.memory_space<vmem>>, vector<1x16x16x128xbf16>
    %35 = vector.shape_cast %34 : vector<1x16x16x128xbf16> to vector<16x16x128xbf16>
    %36 = arith.extf %35 : vector<16x16x128xbf16> to vector<16x16x128xf32>
    %c2 = arith.constant 2 : index
    %c0_25 = arith.constant 0 : index
    %37 = vector.load %arg4[%c2, %c0_25] : memref<9x128xf32, #tpu.memory_space<vmem>>, vector<1x128xf32>
    %38 = vector.shape_cast %37 : vector<1x128xf32> to vector<128xf32>
    %39 = vector.shape_cast %38 : vector<128xf32> to vector<1x1x128xf32>
    %40 = vector.broadcast %39 : vector<1x1x128xf32> to vector<16x16x128xf32>
    %41 = arith.mulf %36, %40 : vector<16x16x128xf32>
    %42 = arith.addf %33, %41 : vector<16x16x128xf32>
    %c0_26 = arith.constant 0 : index
    %c1_27 = arith.constant 1 : index
    %c7_28 = arith.constant 7 : index
    %c0_29 = arith.constant 0 : index
    %43 = vector.load %arg12[%c0_26, %c1_27, %c7_28, %c0_29] : memref<1x18x25x128xbf16, #tpu.memory_space<vmem>>, vector<1x16x16x128xbf16>
    %44 = vector.shape_cast %43 : vector<1x16x16x128xbf16> to vector<16x16x128xbf16>
    %45 = arith.extf %44 : vector<16x16x128xbf16> to vector<16x16x128xf32>
    %c3 = arith.constant 3 : index
    %c0_30 = arith.constant 0 : index
    %46 = vector.load %arg4[%c3, %c0_30] : memref<9x128xf32, #tpu.memory_space<vmem>>, vector<1x128xf32>
    %47 = vector.shape_cast %46 : vector<1x128xf32> to vector<128xf32>
    %48 = vector.shape_cast %47 : vector<128xf32> to vector<1x1x128xf32>
    %49 = vector.broadcast %48 : vector<1x1x128xf32> to vector<16x16x128xf32>
    %50 = arith.mulf %45, %49 : vector<16x16x128xf32>
    %51 = arith.addf %42, %50 : vector<16x16x128xf32>
    %c0_31 = arith.constant 0 : index
    %c1_32 = arith.constant 1 : index
    %c8_33 = arith.constant 8 : index
    %c0_34 = arith.constant 0 : index
    %52 = vector.load %arg12[%c0_31, %c1_32, %c8_33, %c0_34] : memref<1x18x25x128xbf16, #tpu.memory_space<vmem>>, vector<1x16x16x128xbf16>
    %53 = vector.shape_cast %52 : vector<1x16x16x128xbf16> to vector<16x16x128xbf16>
    %54 = arith.extf %53 : vector<16x16x128xbf16> to vector<16x16x128xf32>
    %c4 = arith.constant 4 : index
    %c0_35 = arith.constant 0 : index
    %55 = vector.load %arg4[%c4, %c0_35] : memref<9x128xf32, #tpu.memory_space<vmem>>, vector<1x128xf32>
    %56 = vector.shape_cast %55 : vector<1x128xf32> to vector<128xf32>
    %57 = vector.shape_cast %56 : vector<128xf32> to vector<1x1x128xf32>
    %58 = vector.broadcast %57 : vector<1x1x128xf32> to vector<16x16x128xf32>
    %59 = arith.mulf %54, %58 : vector<16x16x128xf32>
    %60 = arith.addf %51, %59 : vector<16x16x128xf32>
    %c0_36 = arith.constant 0 : index
    %c1_37 = arith.constant 1 : index
    %c9_38 = arith.constant 9 : index
    %c0_39 = arith.constant 0 : index
    %61 = vector.load %arg12[%c0_36, %c1_37, %c9_38, %c0_39] : memref<1x18x25x128xbf16, #tpu.memory_space<vmem>>, vector<1x16x16x128xbf16>
    %62 = vector.shape_cast %61 : vector<1x16x16x128xbf16> to vector<16x16x128xbf16>
    %63 = arith.extf %62 : vector<16x16x128xbf16> to vector<16x16x128xf32>
    %c5 = arith.constant 5 : index
    %c0_40 = arith.constant 0 : index
    %64 = vector.load %arg4[%c5, %c0_40] : memref<9x128xf32, #tpu.memory_space<vmem>>, vector<1x128xf32>
    %65 = vector.shape_cast %64 : vector<1x128xf32> to vector<128xf32>
    %66 = vector.shape_cast %65 : vector<128xf32> to vector<1x1x128xf32>
    %67 = vector.broadcast %66 : vector<1x1x128xf32> to vector<16x16x128xf32>
    %68 = arith.mulf %63, %67 : vector<16x16x128xf32>
    %69 = arith.addf %60, %68 : vector<16x16x128xf32>
    %c0_41 = arith.constant 0 : index
    %c2_42 = arith.constant 2 : index
    %c7_43 = arith.constant 7 : index
    %c0_44 = arith.constant 0 : index
    %70 = vector.load %arg12[%c0_41, %c2_42, %c7_43, %c0_44] : memref<1x18x25x128xbf16, #tpu.memory_space<vmem>>, vector<1x16x16x128xbf16>
    %71 = vector.shape_cast %70 : vector<1x16x16x128xbf16> to vector<16x16x128xbf16>
    %72 = arith.extf %71 : vector<16x16x128xbf16> to vector<16x16x128xf32>
    %c6 = arith.constant 6 : index
    %c0_45 = arith.constant 0 : index
    %73 = vector.load %arg4[%c6, %c0_45] : memref<9x128xf32, #tpu.memory_space<vmem>>, vector<1x128xf32>
    %74 = vector.shape_cast %73 : vector<1x128xf32> to vector<128xf32>
    %75 = vector.shape_cast %74 : vector<128xf32> to vector<1x1x128xf32>
    %76 = vector.broadcast %75 : vector<1x1x128xf32> to vector<16x16x128xf32>
    %77 = arith.mulf %72, %76 : vector<16x16x128xf32>
    %78 = arith.addf %69, %77 : vector<16x16x128xf32>
    %c0_46 = arith.constant 0 : index
    %c2_47 = arith.constant 2 : index
    %c8_48 = arith.constant 8 : index
    %c0_49 = arith.constant 0 : index
    %79 = vector.load %arg12[%c0_46, %c2_47, %c8_48, %c0_49] : memref<1x18x25x128xbf16, #tpu.memory_space<vmem>>, vector<1x16x16x128xbf16>
    %80 = vector.shape_cast %79 : vector<1x16x16x128xbf16> to vector<16x16x128xbf16>
    %81 = arith.extf %80 : vector<16x16x128xbf16> to vector<16x16x128xf32>
    %c7_50 = arith.constant 7 : index
    %c0_51 = arith.constant 0 : index
    %82 = vector.load %arg4[%c7_50, %c0_51] : memref<9x128xf32, #tpu.memory_space<vmem>>, vector<1x128xf32>
    %83 = vector.shape_cast %82 : vector<1x128xf32> to vector<128xf32>
    %84 = vector.shape_cast %83 : vector<128xf32> to vector<1x1x128xf32>
    %85 = vector.broadcast %84 : vector<1x1x128xf32> to vector<16x16x128xf32>
    %86 = arith.mulf %81, %85 : vector<16x16x128xf32>
    %87 = arith.addf %78, %86 : vector<16x16x128xf32>
    %c0_52 = arith.constant 0 : index
    %c2_53 = arith.constant 2 : index
    %c9_54 = arith.constant 9 : index
    %c0_55 = arith.constant 0 : index
    %88 = vector.load %arg12[%c0_52, %c2_53, %c9_54, %c0_55] : memref<1x18x25x128xbf16, #tpu.memory_space<vmem>>, vector<1x16x16x128xbf16>
    %89 = vector.shape_cast %88 : vector<1x16x16x128xbf16> to vector<16x16x128xbf16>
    %90 = arith.extf %89 : vector<16x16x128xbf16> to vector<16x16x128xf32>
    %c8_56 = arith.constant 8 : index
    %c0_57 = arith.constant 0 : index
    %91 = vector.load %arg4[%c8_56, %c0_57] : memref<9x128xf32, #tpu.memory_space<vmem>>, vector<1x128xf32>
    %92 = vector.shape_cast %91 : vector<1x128xf32> to vector<128xf32>
    %93 = vector.shape_cast %92 : vector<128xf32> to vector<1x1x128xf32>
    %94 = vector.broadcast %93 : vector<1x1x128xf32> to vector<16x16x128xf32>
    %95 = arith.mulf %90, %94 : vector<16x16x128xf32>
    %96 = arith.addf %87, %95 : vector<16x16x128xf32>
    %c0_58 = arith.constant 0 : index
    %c0_59 = arith.constant 0 : index
    %97 = vector.load %arg5[%c0_58, %c0_59] : memref<1x128xf32, #tpu.memory_space<vmem>>, vector<1x128xf32>
    %98 = vector.shape_cast %97 : vector<1x128xf32> to vector<1x1x128xf32>
    %99 = vector.broadcast %98 : vector<1x1x128xf32> to vector<16x16x128xf32>
    %100 = arith.addf %96, %99 : vector<16x16x128xf32>
    %101 = vector.shape_cast %100 : vector<16x16x128xf32> to vector<256x128xf32>
    %102 = arith.truncf %101 : vector<256x128xf32> to vector<256x128xbf16>
    %c0_60 = arith.constant 0 : index
    %c0_61 = arith.constant 0 : index
    %103 = vector.load %arg6[%c0_60, %c0_61] : memref<128x128xbf16, #tpu.memory_space<vmem>>, vector<128x128xbf16>
    %cst_62 = arith.constant dense<0.000000e+00> : vector<256x128xf32>
    %104 = tpu.matmul %102, %103, %cst_62 {dimension_numbers = #tpu.dot_dimension_numbers<[1], [0], [0], [1], [0, 0, 1, 1], [], []>} : vector<256x128xbf16>, vector<128x128xbf16>, vector<256x128xf32> -> vector<256x128xf32>
    %c0_63 = arith.constant 0 : index
    %c0_64 = arith.constant 0 : index
    %105 = vector.load %arg7[%c0_63, %c0_64] : memref<1x128xf32, #tpu.memory_space<vmem>>, vector<1x128xf32>
    %106 = vector.broadcast %105 : vector<1x128xf32> to vector<256x128xf32>
    %107 = arith.addf %104, %106 : vector<256x128xf32>
    %cst_65 = arith.constant 0.000000e+00 : f32
    %cst_66 = arith.constant 6.000000e+00 : f32
    %108 = vector.broadcast %cst_65 : f32 to vector<256x128xf32>
    %109 = arith.maximumf %108, %107 : vector<256x128xf32>
    %110 = vector.broadcast %cst_66 : f32 to vector<256x128xf32>
    %111 = arith.minimumf %110, %109 : vector<256x128xf32>
    %112 = arith.truncf %111 : vector<256x128xf32> to vector<256x128xbf16>
    %c0_67 = arith.constant 0 : index
    %c0_68 = arith.constant 0 : index
    %113 = vector.load %arg8[%c0_67, %c0_68] : memref<128x128xbf16, #tpu.memory_space<vmem>>, vector<128x128xbf16>
    %cst_69 = arith.constant dense<0.000000e+00> : vector<256x128xf32>
    %114 = tpu.matmul %112, %113, %cst_69 {dimension_numbers = #tpu.dot_dimension_numbers<[1], [0], [0], [1], [0, 0, 1, 1], [], []>} : vector<256x128xbf16>, vector<128x128xbf16>, vector<256x128xf32> -> vector<256x128xf32>
    %c0_70 = arith.constant 0 : index
    %c0_71 = arith.constant 0 : index
    %115 = vector.load %arg9[%c0_70, %c0_71] : memref<1x128xf32, #tpu.memory_space<vmem>>, vector<1x128xf32>
    %116 = vector.broadcast %115 : vector<1x128xf32> to vector<256x128xf32>
    %117 = arith.addf %114, %116 : vector<256x128xf32>
    %c0_72 = arith.constant 0 : index
    %c0_73 = arith.constant 0 : index
    %118 = vector.load %arg10[%c0_72, %c0_73] : memref<16x128xbf16, #tpu.memory_space<vmem>>, vector<16x128xbf16>
    %cst_74 = arith.constant dense<0.000000e+00> : vector<256x128xf32>
    %119 = tpu.matmul %4, %118, %cst_74 {dimension_numbers = #tpu.dot_dimension_numbers<[1], [0], [0], [1], [0, 0, 1, 1], [], []>} : vector<256x16xbf16>, vector<16x128xbf16>, vector<256x128xf32> -> vector<256x128xf32>
    %120 = arith.addf %117, %119 : vector<256x128xf32>
    %c0_75 = arith.constant 0 : index
    %c0_76 = arith.constant 0 : index
    %c0_77 = arith.constant 0 : index
    %121 = vector.load %arg11[%c0_75, %c0_76, %c0_77] : memref<1x256x128xf32, #tpu.memory_space<vmem>>, vector<1x256x128xf32>
    %122 = vector.shape_cast %121 : vector<1x256x128xf32> to vector<256x128xf32>
    %123 = vector.shape_cast %120 : vector<256x128xf32> to vector<1x256x128xf32>
    tpu.vector_store %arg11[%c0_75, %c0_76, %c0_77], %123 {strides = array<i32>} : memref<1x256x128xf32, #tpu.memory_space<vmem>>, vector<1x256x128xf32>,
    return
  }
  func.func @transform_0(%arg0: i32) -> (i32, i32, i32) {
    %c0_i32 = arith.constant 0 : i32
    %c0_i32_0 = arith.constant 0 : i32
    %c0_i32_1 = arith.constant 0 : i32
    return %arg0, %c0_i32, %c0_i32_0 : i32, i32, i32
  }
  func.func @transform_1(%arg0: i32) -> (i32, i32) {
    %c0_i32 = arith.constant 0 : i32
    %c0_i32_0 = arith.constant 0 : i32
    %c0_i32_1 = arith.constant 0 : i32
    return %c0_i32, %c0_i32_0 : i32, i32
  }
  func.func @transform_2(%arg0: i32) -> (i32, i32) {
    %c0_i32 = arith.constant 0 : i32
    %c0_i32_0 = arith.constant 0 : i32
    %c0_i32_1 = arith.constant 0 : i32
    return %c0_i32, %c0_i32_0 : i32, i32
  }
  func.func @transform_3(%arg0: i32) -> (i32, i32) {
    %c0_i32 = arith.constant 0 : i32
    %c0_i32_0 = arith.constant 0 : i32
    %c0_i32_1 = arith.constant 0 : i32
    return %c0_i32, %c0_i32_0 : i32, i32
  }
  func.func @transform_4(%arg0: i32) -> (i32, i32) {
    %c0_i32 = arith.constant 0 : i32
    %c0_i32_0 = arith.constant 0 : i32
    %c0_i32_1 = arith.constant 0 : i32
    return %c0_i32, %c0_i32_0 : i32, i32
  }
  func.func @transform_5(%arg0: i32) -> (i32, i32) {
    %c0_i32 = arith.constant 0 : i32
    %c0_i32_0 = arith.constant 0 : i32
    %c0_i32_1 = arith.constant 0 : i32
    return %c0_i32, %c0_i32_0 : i32, i32
  }
  func.func @transform_6(%arg0: i32) -> (i32, i32) {
    %c0_i32 = arith.constant 0 : i32
    %c0_i32_0 = arith.constant 0 : i32
    %c0_i32_1 = arith.constant 0 : i32
    return %c0_i32, %c0_i32_0 : i32, i32
  }
  func.func @transform_7(%arg0: i32) -> (i32, i32) {
    %c0_i32 = arith.constant 0 : i32
    %c0_i32_0 = arith.constant 0 : i32
    %c0_i32_1 = arith.constant 0 : i32
    return %c0_i32, %c0_i32_0 : i32, i32
  }
  func.func @transform_8(%arg0: i32) -> (i32, i32) {
    %c0_i32 = arith.constant 0 : i32
    %c0_i32_0 = arith.constant 0 : i32
    %c0_i32_1 = arith.constant 0 : i32
    return %c0_i32, %c0_i32_0 : i32, i32
  }
  func.func @transform_9(%arg0: i32) -> (i32, i32) {
    %c0_i32 = arith.constant 0 : i32
    %c0_i32_0 = arith.constant 0 : i32
    %c0_i32_1 = arith.constant 0 : i32
    return %c0_i32, %c0_i32_0 : i32, i32
  }
  func.func @transform_10(%arg0: i32) -> (i32, i32, i32) {
    %c0_i32 = arith.constant 0 : i32
    %c0_i32_0 = arith.constant 0 : i32
    %c0_i32_1 = arith.constant 0 : i32
    return %arg0, %c0_i32, %c0_i32_0 : i32, i32, i32
  }
}

</mosaic_0001>

<llo_original>
// kernel: bottleneck_forward.1
$region0: #{bottleneck_forward.1}
  #allocation0 [shape = 'u32[]', space=smem, size = 0x4, offset = 0x4, fixed_abs, tag = 'smem constant byte address 0x4 - core index']
  #allocation1 [shape = 'u32[144,128]{1,0:T(1,128)}', space=vmem, size = 0x12000, scoped, tag = 'internal scratch']
  #allocation2 [shape = 'bf16[1,18,25,128]{3,2,1,0:T(8,128)(2,1)}', space=vmem, size = 0x24000, scoped, tag = 'scratch operand']
  %s0 = inlined_call_operand.vmem [shape: bf16[2,256,16], index: 0, kind: input, shape index: {}]
  %s1 = inlined_call_operand.vmem [shape: bf16[16,128], index: 1, kind: input, shape index: {}]
  %s2 = inlined_call_operand.vmem [shape: f32[1,128], index: 2, kind: input, shape index: {}]
  %s3 = inlined_call_operand.vmem [shape: f32[9,128], index: 3, kind: input, shape index: {}]
  %s4 = inlined_call_operand.vmem [shape: f32[1,128], index: 4, kind: input, shape index: {}]
  %s5 = inlined_call_operand.vmem [shape: bf16[128,128], index: 5, kind: input, shape index: {}]
  %s6 = inlined_call_operand.vmem [shape: f32[1,128], index: 6, kind: input, shape index: {}]
  %s7 = inlined_call_operand.vmem [shape: bf16[128,128], index: 7, kind: input, shape index: {}]
  %s8 = inlined_call_operand.vmem [shape: f32[1,128], index: 8, kind: input, shape index: {}]
  %s9 = inlined_call_operand.vmem [shape: bf16[16,128], index: 9, kind: input, shape index: {}]
  %s10 = inlined_call_operand.vmem [shape: f32[2,256,128], index: 10, kind: output, shape index: {}]
  %s11 = sld [smem:[#allocation0]]
  $region77: #{bottleneck_forward.1} parent=0
    _
  %s13 = ssub.s32 1, %s11
  %s14 = scalar_select 0, %s13, %s11
  loop: start=0, step=1, limit=4
  $region2: #{bottleneck_forward.1} parent=0 // loop_pre_header
    _
  $region3: #{bottleneck_forward.1} parent=0 // loop_header
    %s16 = sphi 0, %s20
    %p17 = scmp.ge.s32.totalorder %s16, 4
    %s26 = sphi 0, %s28
    %s29 = sphi 0, %s26
    %s30 = sphi 0, %s29
    %s46 = sphi 0, %s30
    %s50 = sphi 0, %s50
    %s52 = sphi 0, %s50
    %s53 = sphi 0, %s52
    %s67 = sphi 0, %s53
    %s71 = sphi 0, %s71
    %s73 = sphi 0, %s71
    %s74 = sphi 0, %s73
    %s88 = sphi 0, %s74
    %s92 = sphi 0, %s92
    %s94 = sphi 0, %s92
    %s95 = sphi 0, %s94
    %s109 = sphi 0, %s95
    %s113 = sphi 0, %s113
    %s115 = sphi 0, %s113
    %s116 = sphi 0, %s115
    %s130 = sphi 0, %s116
    %s134 = sphi 0, %s134
    %s136 = sphi 0, %s134
    %s137 = sphi 0, %s136
    %s151 = sphi 0, %s137
    %s155 = sphi 0, %s155
    %s157 = sphi 0, %s155
    %s158 = sphi 0, %s157
    %s172 = sphi 0, %s158
    %s176 = sphi 0, %s176
    %s178 = sphi 0, %s176
    %s179 = sphi 0, %s178
    %s193 = sphi 0, %s179
    %s197 = sphi 0, %s197
    %s199 = sphi 0, %s197
    %s200 = sphi 0, %s199
    %s214 = sphi 0, %s200
    %s218 = sphi 0, %s218
    %s220 = sphi 0, %s218
    %s221 = sphi 0, %s220
    %s235 = sphi 0, %s221
    %s241 = sphi 0, %s243
    %s244 = sphi 0, %s241
    %s245 = sphi 0, %s244
    %s261 = sphi 0, %s245
  $region4: #{bottleneck_forward.1} parent=0 // loop_header_branch
    %19 = sbr.rel (%p17) target = $region8
  $region5: #{bottleneck_forward.1} parent=0 // loop_body
    %s21 = ssub.s32 %s16, 1
    %s22 = ssub.s32 %s16, 2
    %s23 = sadd.s32 %s16, 1
    %s24 = ssub.s32 %s16, %s23
    %p25 = scmp.eq.s32.totalorder %s24, 0
    %s27 = sadd.s32 %s26, 1
    %s28 = scalar_select %p25, %s26, %s27
    %p31 = pneg %p25
    %p32 = scmp.eq.s32.totalorder %s16, 1
    %p33 = por %p31, %p32
    %p34 = scmp.ne.s32.totalorder %s26, %s29
    %p35 = scmp.eq.s32.totalorder %s16, 0
    %p36 = por %p34, %p35
    %p37 = scmp.ne.s32.totalorder %s26, %s29
    %p38 = scmp.eq.s32.totalorder %s21, 1
    %p39 = por %p37, %p38
    %p40 = scmp.ne.s32.totalorder %s29, %s30
    %p41 = scmp.eq.s32.totalorder %s21, 0
    %p42 = por %p40, %p41
    %p43 = scmp.ne.s32.totalorder %s29, %s30
    %p44 = scmp.eq.s32.totalorder %s22, 1
    %p45 = por %p43, %p44
    %p47 = scmp.ne.s32.totalorder %s30, %s46
    %p48 = scmp.eq.s32.totalorder %s22, 0
    %p49 = por %p47, %p48
    %s51 = sadd.s32 %s50, 1
    %p54 = scmp.eq.s32.totalorder %s16, 1
    %p55 = scmp.ne.s32.totalorder %s50, %s52
    %p56 = scmp.eq.s32.totalorder %s16, 0
    %p57 = por %p55, %p56
    %p58 = scmp.ne.s32.totalorder %s50, %s52
    %p59 = scmp.eq.s32.totalorder %s21, 1
    %p60 = por %p58, %p59
    %p61 = scmp.ne.s32.totalorder %s52, %s53
    %p62 = scmp.eq.s32.totalorder %s21, 0
    %p63 = por %p61, %p62
    %p64 = scmp.ne.s32.totalorder %s52, %s53
    %p65 = scmp.eq.s32.totalorder %s22, 1
    %p66 = por %p64, %p65
    %p68 = scmp.ne.s32.totalorder %s53, %s67
    %p69 = scmp.eq.s32.totalorder %s22, 0
    %p70 = por %p68, %p69
    %s72 = sadd.s32 %s71, 1
    %p75 = scmp.eq.s32.totalorder %s16, 1
    %p76 = scmp.ne.s32.totalorder %s71, %s73
    %p77 = scmp.eq.s32.totalorder %s16, 0
    %p78 = por %p76, %p77
    %p79 = scmp.ne.s32.totalorder %s71, %s73
    %p80 = scmp.eq.s32.totalorder %s21, 1
    %p81 = por %p79, %p80
    %p82 = scmp.ne.s32.totalorder %s73, %s74
    %p83 = scmp.eq.s32.totalorder %s21, 0
    %p84 = por %p82, %p83
    %p85 = scmp.ne.s32.totalorder %s73, %s74
    %p86 = scmp.eq.s32.totalorder %s22, 1
    %p87 = por %p85, %p86
    %p89 = scmp.ne.s32.totalorder %s74, %s88
    %p90 = scmp.eq.s32.totalorder %s22, 0
    %p91 = por %p89, %p90
    %s93 = sadd.s32 %s92, 1
    %p96 = scmp.eq.s32.totalorder %s16, 1
    %p97 = scmp.ne.s32.totalorder %s92, %s94
    %p98 = scmp.eq.s32.totalorder %s16, 0
    %p99 = por %p97, %p98
    %p100 = scmp.ne.s32.totalorder %s92, %s94
    %p101 = scmp.eq.s32.totalorder %s21, 1
    %p102 = por %p100, %p101
    %p103 = scmp.ne.s32.totalorder %s94, %s95
    %p104 = scmp.eq.s32.totalorder %s21, 0
    %p105 = por %p103, %p104
    %p106 = scmp.ne.s32.totalorder %s94, %s95
    %p107 = scmp.eq.s32.totalorder %s22, 1
    %p108 = por %p106, %p107
    %p110 = scmp.ne.s32.totalorder %s95, %s109
    %p111 = scmp.eq.s32.totalorder %s22, 0
    %p112 = por %p110, %p111
    %s114 = sadd.s32 %s113, 1
    %p117 = scmp.eq.s32.totalorder %s16, 1
    %p118 = scmp.ne.s32.totalorder %s113, %s115
    %p119 = scmp.eq.s32.totalorder %s16, 0
    %p120 = por %p118, %p119
    %p121 = scmp.ne.s32.totalorder %s113, %s115
    %p122 = scmp.eq.s32.totalorder %s21, 1
    %p123 = por %p121, %p122
    %p124 = scmp.ne.s32.totalorder %s115, %s116
    %p125 = scmp.eq.s32.totalorder %s21, 0
    %p126 = por %p124, %p125
    %p127 = scmp.ne.s32.totalorder %s115, %s116
    %p128 = scmp.eq.s32.totalorder %s22, 1
    %p129 = por %p127, %p128
    %p131 = scmp.ne.s32.totalorder %s116, %s130
    %p132 = scmp.eq.s32.totalorder %s22, 0
    %p133 = por %p131, %p132
    %s135 = sadd.s32 %s134, 1
    %p138 = scmp.eq.s32.totalorder %s16, 1
    %p139 = scmp.ne.s32.totalorder %s134, %s136
    %p140 = scmp.eq.s32.totalorder %s16, 0
    %p141 = por %p139, %p140
    %p142 = scmp.ne.s32.totalorder %s134, %s136
    %p143 = scmp.eq.s32.totalorder %s21, 1
    %p144 = por %p142, %p143
    %p145 = scmp.ne.s32.totalorder %s136, %s137
    %p146 = scmp.eq.s32.totalorder %s21, 0
    %p147 = por %p145, %p146
    %p148 = scmp.ne.s32.totalorder %s136, %s137
    %p149 = scmp.eq.s32.totalorder %s22, 1
    %p150 = por %p148, %p149
    %p152 = scmp.ne.s32.totalorder %s137, %s151
    %p153 = scmp.eq.s32.totalorder %s22, 0
    %p154 = por %p152, %p153
    %s156 = sadd.s32 %s155, 1
    %p159 = scmp.eq.s32.totalorder %s16, 1
    %p160 = scmp.ne.s32.totalorder %s155, %s157
    %p161 = scmp.eq.s32.totalorder %s16, 0
    %p162 = por %p160, %p161
    %p163 = scmp.ne.s32.totalorder %s155, %s157
    %p164 = scmp.eq.s32.totalorder %s21, 1
    %p165 = por %p163, %p164
    %p166 = scmp.ne.s32.totalorder %s157, %s158
    %p167 = scmp.eq.s32.totalorder %s21, 0
    %p168 = por %p166, %p167
    %p169 = scmp.ne.s32.totalorder %s157, %s158
    %p170 = scmp.eq.s32.totalorder %s22, 1
    %p171 = por %p169, %p170
    %p173 = scmp.ne.s32.totalorder %s158, %s172
    %p174 = scmp.eq.s32.totalorder %s22, 0
    %p175 = por %p173, %p174
    %s177 = sadd.s32 %s176, 1
    %p180 = scmp.eq.s32.totalorder %s16, 1
    %p181 = scmp.ne.s32.totalorder %s176, %s178
    %p182 = scmp.eq.s32.totalorder %s16, 0
    %p183 = por %p181, %p182
    %p184 = scmp.ne.s32.totalorder %s176, %s178
    %p185 = scmp.eq.s32.totalorder %s21, 1
    %p186 = por %p184, %p185
    %p187 = scmp.ne.s32.totalorder %s178, %s179
    %p188 = scmp.eq.s32.totalorder %s21, 0
    %p189 = por %p187, %p188
    %p190 = scmp.ne.s32.totalorder %s178, %s179
    %p191 = scmp.eq.s32.totalorder %s22, 1
    %p192 = por %p190, %p191
    %p194 = scmp.ne.s32.totalorder %s179, %s193
    %p195 = scmp.eq.s32.totalorder %s22, 0
    %p196 = por %p194, %p195
    %s198 = sadd.s32 %s197, 1
    %p201 = scmp.eq.s32.totalorder %s16, 1
    %p202 = scmp.ne.s32.totalorder %s197, %s199
    %p203 = scmp.eq.s32.totalorder %s16, 0
    %p204 = por %p202, %p203
    %p205 = scmp.ne.s32.totalorder %s197, %s199
    %p206 = scmp.eq.s32.totalorder %s21, 1
    %p207 = por %p205, %p206
    %p208 = scmp.ne.s32.totalorder %s199, %s200
    %p209 = scmp.eq.s32.totalorder %s21, 0
    %p210 = por %p208, %p209
    %p211 = scmp.ne.s32.totalorder %s199, %s200
    %p212 = scmp.eq.s32.totalorder %s22, 1
    %p213 = por %p211, %p212
    %p215 = scmp.ne.s32.totalorder %s200, %s214
    %p216 = scmp.eq.s32.totalorder %s22, 0
    %p217 = por %p215, %p216
    %s219 = sadd.s32 %s218, 1
    %p222 = scmp.eq.s32.totalorder %s16, 1
    %p223 = scmp.ne.s32.totalorder %s218, %s220
    %p224 = scmp.eq.s32.totalorder %s16, 0
    %p225 = por %p223, %p224
    %p226 = scmp.ne.s32.totalorder %s218, %s220
    %p227 = scmp.eq.s32.totalorder %s21, 1
    %p228 = por %p226, %p227
    %p229 = scmp.ne.s32.totalorder %s220, %s221
    %p230 = scmp.eq.s32.totalorder %s21, 0
    %p231 = por %p229, %p230
    %p232 = scmp.ne.s32.totalorder %s220, %s221
    %p233 = scmp.eq.s32.totalorder %s22, 1
    %p234 = por %p232, %p233
    %p236 = scmp.ne.s32.totalorder %s221, %s235
    %p237 = scmp.eq.s32.totalorder %s22, 0
    %p238 = por %p236, %p237
    %s239 = ssub.s32 %s16, %s23
    %p240 = scmp.eq.s32.totalorder %s239, 0
    %s242 = sadd.s32 %s241, 1
    %s243 = scalar_select %p240, %s241, %s242
    %p246 = pneg %p240
    %p247 = scmp.eq.s32.totalorder %s16, 1
    %p248 = por %p246, %p247
    %p249 = scmp.ne.s32.totalorder %s241, %s244
    %p250 = scmp.eq.s32.totalorder %s16, 0
    %p251 = por %p249, %p250
    %p252 = scmp.ne.s32.totalorder %s241, %s244
    %p253 = scmp.eq.s32.totalorder %s21, 1
    %p254 = por %p252, %p253
    %p255 = scmp.ne.s32.totalorder %s244, %s245
    %p256 = scmp.eq.s32.totalorder %s21, 0
    %p257 = por %p255, %p256
    %p258 = scmp.ne.s32.totalorder %s244, %s245
    %p259 = scmp.eq.s32.totalorder %s22, 1
    %p260 = por %p258, %p259
    %p262 = scmp.ne.s32.totalorder %s245, %s261
    %p263 = scmp.eq.s32.totalorder %s22, 0
    %p264 = por %p262, %p263
    %p265 = scmp.le.s32.totalorder 1, %s16
    %p266 = scmp.lt.s32.totalorder %s16, 3
    %p267 = pnand %p265, %p266
    %p268 = pneg %p267
    // Predicated region
    $region9: #{bottleneck_forward.1} parent=5 // pred_check
      _
    $region10: #{bottleneck_forward.1} parent=5 // pred_check_branch
      %270 = sbr.rel (%p267) target = $region12
    $region11: #{bottleneck_forward.1} parent=5 // pred_region
      %s271 = ssub.s32 %s16, 1
      // Predicated region
      $region13: #{bottleneck_forward.1} parent=11 // pred_check
        %p272 = pneg %p63
      $region14: #{bottleneck_forward.1} parent=11 // pred_check_branch
        %274 = sbr.rel (%p272) target = $region16
      $region15: #{bottleneck_forward.1} parent=11 // pred_region
        _
      $region16: #{bottleneck_forward.1} parent=11 // pred_fallthru
        _
      // Predicated region
      $region17: #{bottleneck_forward.1} parent=11 // pred_check
        %p275 = pneg %p84
      $region18: #{bottleneck_forward.1} parent=11 // pred_check_branch
        %277 = sbr.rel (%p275) target = $region20
      $region19: #{bottleneck_forward.1} parent=11 // pred_region
        _
      $region20: #{bottleneck_forward.1} parent=11 // pred_fallthru
        _
      // Predicated region
      $region21: #{bottleneck_forward.1} parent=11 // pred_check
        %p278 = pneg %p105
      $region22: #{bottleneck_forward.1} parent=11 // pred_check_branch
        %280 = sbr.rel (%p278) target = $region24
      $region23: #{bottleneck_forward.1} parent=11 // pred_region
        _
      $region24: #{bottleneck_forward.1} parent=11 // pred_fallthru
        _
      // Predicated region
      $region25: #{bottleneck_forward.1} parent=11 // pred_check
        %p281 = pneg %p126
      $region26: #{bottleneck_forward.1} parent=11 // pred_check_branch
        %283 = sbr.rel (%p281) target = $region28
      $region27: #{bottleneck_forward.1} parent=11 // pred_region
        _
      $region28: #{bottleneck_forward.1} parent=11 // pred_fallthru
        _
      // Predicated region
      $region29: #{bottleneck_forward.1} parent=11 // pred_check
        %p284 = pneg %p147
      $region30: #{bottleneck_forward.1} parent=11 // pred_check_branch
        %286 = sbr.rel (%p284) target = $region32
      $region31: #{bottleneck_forward.1} parent=11 // pred_region
        _
      $region32: #{bottleneck_forward.1} parent=11 // pred_fallthru
        _
      // Predicated region
      $region33: #{bottleneck_forward.1} parent=11 // pred_check
        %p287 = pneg %p168
      $region34: #{bottleneck_forward.1} parent=11 // pred_check_branch
        %289 = sbr.rel (%p287) target = $region36
      $region35: #{bottleneck_forward.1} parent=11 // pred_region
        _
      $region36: #{bottleneck_forward.1} parent=11 // pred_fallthru
        _
      // Predicated region
      $region37: #{bottleneck_forward.1} parent=11 // pred_check
        %p290 = pneg %p189
      $region38: #{bottleneck_forward.1} parent=11 // pred_check_branch
        %292 = sbr.rel (%p290) target = $region40
      $region39: #{bottleneck_forward.1} parent=11 // pred_region
        _
      $region40: #{bottleneck_forward.1} parent=11 // pred_fallthru
        _
      // Predicated region
      $region41: #{bottleneck_forward.1} parent=11 // pred_check
        %p293 = pneg %p210
      $region42: #{bottleneck_forward.1} parent=11 // pred_check_branch
        %295 = sbr.rel (%p293) target = $region44
      $region43: #{bottleneck_forward.1} parent=11 // pred_region
        _
      $region44: #{bottleneck_forward.1} parent=11 // pred_fallthru
        _
      // Predicated region
      $region45: #{bottleneck_forward.1} parent=11 // pred_check
        %p296 = pneg %p231
      $region46: #{bottleneck_forward.1} parent=11 // pred_check_branch
        %298 = sbr.rel (%p296) target = $region48
      $region47: #{bottleneck_forward.1} parent=11 // pred_region
        _
      $region48: #{bottleneck_forward.1} parent=11 // pred_fallthru
        _
    $region12: #{bottleneck_forward.1} parent=5 // pred_fallthru
      _
    %p299 = scmp.lt.s32.totalorder %s16, 2
    // Predicated region
    $region49: #{bottleneck_forward.1} parent=5 // pred_check
      %p300 = pneg %p299
    $region50: #{bottleneck_forward.1} parent=5 // pred_check_branch
      %302 = sbr.rel (%p300) target = $region52
    $region51: #{bottleneck_forward.1} parent=5 // pred_region
      // Predicated region
      $region53: #{bottleneck_forward.1} parent=51 // pred_check
        %p303 = pneg %p36
      $region54: #{bottleneck_forward.1} parent=51 // pred_check_branch
        %305 = sbr.rel (%p303) target = $region56
      $region55: #{bottleneck_forward.1} parent=51 // pred_region
        %p306 = scmp.lt.s32.totalorder %s16, 1
        %s307 = scalar_select %p306, %s16, 1
        %s308 = smul.addr %s307, 32
        %s309 = smul.addr %s308, 4
        %s310 = scalar_lea.vmem %s0, %s309
      $region56: #{bottleneck_forward.1} parent=51 // pred_fallthru
        _
    $region52: #{bottleneck_forward.1} parent=5 // pred_fallthru
      _
    %p311 = scmp.le.s32.totalorder 1, %s16
    %p312 = scmp.lt.s32.totalorder %s16, 3
    %p313 = pnand %p311, %p312
    %p314 = pneg %p313
    // Predicated region
    $region57: #{bottleneck_forward.1} parent=5 // pred_check
      _
    $region58: #{bottleneck_forward.1} parent=5 // pred_check_branch
      %316 = sbr.rel (%p313) target = $region60
    $region59: #{bottleneck_forward.1} parent=5 // pred_region
      %s317 = ssub.s32 %s16, 1
      %p318 = scmp.lt.s32.totalorder %s21, 1
      %s319 = scalar_select %p318, %s21, 1
      %s320 = smul.addr %s319, 32
      %s321 = smul.addr %s320, 4
      %s322 = scalar_lea.vmem %s0, %s321
      %p323 = pneg %p42
      %p324 = pneg %p39
      %p325 = pneg %p63
      %p326 = pneg %p60
      %p327 = pneg %p84
      %p328 = pneg %p81
      %p329 = pneg %p105
      %p330 = pneg %p102
      %p331 = pneg %p126
      %p332 = pneg %p123
      %p333 = pneg %p147
      %p334 = pneg %p144
      %p335 = pneg %p168
      %p336 = pneg %p165
      %p337 = pneg %p189
      %p338 = pneg %p186
      %p339 = pneg %p210
      %p340 = pneg %p207
      %p341 = pneg %p231
      %p342 = pneg %p228
      %p343 = pneg %p257
      %p344 = pneg %p254
      %p345 = scmp.lt.s32.totalorder %s21, 1
      %s346 = scalar_select %p345, %s21, 1
      %s347 = smul.addr %s346, 32
      %s348 = smul.addr %s347, 8
      %s349 = scalar_lea.vmem %s10, %s348
      %p350 = scmp.lt.s32.totalorder %s21, 1
      %s351 = scalar_select %p350, %s21, 1
      %s352 = smul.addr %s351, 32
      %s353 = smul.addr %s352, 4
      %s354 = scalar_lea.vmem %s0, %s353
      %p355 = scmp.lt.s32.totalorder %s21, 1
      %s356 = scalar_select %p355, %s21, 1
      %s357 = smul.addr %s356, 32
      %s358 = smul.addr %s357, 8
      %s359 = scalar_lea.vmem %s10, %s358
      %p361 = scmp.eq.s32.totalorder %s21, 0
      // Predicated region
      $region61: #{bottleneck_forward.1} parent=59 // pred_check
        %p362 = pneg %p361
      $region62: #{bottleneck_forward.1} parent=59 // pred_check_branch
        %364 = sbr.rel (%p362) target = $region64
      $region63: #{bottleneck_forward.1} parent=59 // pred_region
        %365 = vst [vmem:[#allocation2] sm:$0xf] 0
        %366 = vst [vmem:[#allocation2 + $0x4] sm:$0xf] 0
        %367 = vst [vmem:[#allocation2 + $0x8] sm:$0xf] 0
        %vm368 = vcmask 1040384
        %vm369 = vsmask.f32 256
        %vm370 = vmand %vm368, %vm369
        %v371 = vld [vmem:[#allocation2 + $0xc] sm:$0x1]
        %v372 = vsel %vm370, 0, %v371
        %373 = vst [vmem:[#allocation2 + $0xc] sm:$0x1] %v372
        %374 = vst [vmem:[#allocation2 + $0x10] sm:$0xf] 0
        %375 = vst [vmem:[#allocation2 + $0x14] sm:$0xf] 0
        %376 = vst [vmem:[#allocation2 + $0x18] sm:$0xf] 0
        %v377 = vld [vmem:[#allocation2 + $0x1c] sm:$0x1]
        %v378 = vsel %vm370, 0, %v377
        %379 = vst [vmem:[#allocation2 + $0x1c] sm:$0x1] %v378
        %380 = vst [vmem:[#allocation2 + $0x20] sm:$0xf] 0
        %381 = vst [vmem:[#allocation2 + $0x24] sm:$0xf] 0
        %382 = vst [vmem:[#allocation2 + $0x28] sm:$0xf] 0
        %v383 = vld [vmem:[#allocation2 + $0x2c] sm:$0x1]
        %v384 = vsel %vm370, 0, %v383
        %385 = vst [vmem:[#allocation2 + $0x2c] sm:$0x1] %v384
        %386 = vst [vmem:[#allocation2 + $0x30] sm:$0xf] 0
        %387 = vst [vmem:[#allocation2 + $0x34] sm:$0xf] 0
        %388 = vst [vmem:[#allocation2 + $0x38] sm:$0xf] 0
        %v389 = vld [vmem:[#allocation2 + $0x3c] sm:$0x1]
        %v390 = vsel %vm370, 0, %v389
        %391 = vst [vmem:[#allocation2 + $0x3c] sm:$0x1] %v390
        %392 = vst [vmem:[#allocation2 + $0x40] sm:$0xf] 0
        %393 = vst [vmem:[#allocation2 + $0x44] sm:$0xf] 0
        %394 = vst [vmem:[#allocation2 + $0x48] sm:$0xf] 0
        %v395 = vld [vmem:[#allocation2 + $0x4c] sm:$0x1]
        %v396 = vsel %vm370, 0, %v395
        %397 = vst [vmem:[#allocation2 + $0x4c] sm:$0x1] %v396
        %398 = vst [vmem:[#allocation2 + $0x50] sm:$0xf] 0
        %399 = vst [vmem:[#allocation2 + $0x54] sm:$0xf] 0
        %400 = vst [vmem:[#allocation2 + $0x58] sm:$0xf] 0
        %v401 = vld [vmem:[#allocation2 + $0x5c] sm:$0x1]
        %v402 = vsel %vm370, 0, %v401
        %403 = vst [vmem:[#allocation2 + $0x5c] sm:$0x1] %v402
        %404 = vst [vmem:[#allocation2 + $0x60] sm:$0xf] 0
        %405 = vst [vmem:[#allocation2 + $0x64] sm:$0xf] 0
        %406 = vst [vmem:[#allocation2 + $0x68] sm:$0xf] 0
        %v407 = vld [vmem:[#allocation2 + $0x6c] sm:$0x1]
        %v408 = vsel %vm370, 0, %v407
        %409 = vst [vmem:[#allocation2 + $0x6c] sm:$0x1] %v408
        %410 = vst [vmem:[#allocation2 + $0x70] sm:$0xf] 0
        %411 = vst [vmem:[#allocation2 + $0x74] sm:$0xf] 0
        %412 = vst [vmem:[#allocation2 + $0x78] sm:$0xf] 0
        %v413 = vld [vmem:[#allocation2 + $0x7c] sm:$0x1]
        %v414 = vsel %vm370, 0, %v413
        %415 = vst [vmem:[#allocation2 + $0x7c] sm:$0x1] %v414
        %416 = vst [vmem:[#allocation2 + $0x80] sm:$0xf] 0
        %417 = vst [vmem:[#allocation2 + $0x84] sm:$0xf] 0
        %418 = vst [vmem:[#allocation2 + $0x88] sm:$0xf] 0
        %v419 = vld [vmem:[#allocation2 + $0x8c] sm:$0x1]
        %v420 = vsel %vm370, 0, %v419
        %421 = vst [vmem:[#allocation2 + $0x8c] sm:$0x1] %v420
        %422 = vst [vmem:[#allocation2 + $0x90] sm:$0xf] 0
        %423 = vst [vmem:[#allocation2 + $0x94] sm:$0xf] 0
        %424 = vst [vmem:[#allocation2 + $0x98] sm:$0xf] 0
        %v425 = vld [vmem:[#allocation2 + $0x9c] sm:$0x1]
        %v426 = vsel %vm370, 0, %v425
        %427 = vst [vmem:[#allocation2 + $0x9c] sm:$0x1] %v426
        %428 = vst [vmem:[#allocation2 + $0xa0] sm:$0xf] 0
        %429 = vst [vmem:[#allocation2 + $0xa4] sm:$0xf] 0
        %430 = vst [vmem:[#allocation2 + $0xa8] sm:$0xf] 0
        %v431 = vld [vmem:[#allocation2 + $0xac] sm:$0x1]
        %v432 = vsel %vm370, 0, %v431
        %433 = vst [vmem:[#allocation2 + $0xac] sm:$0x1] %v432
        %434 = vst [vmem:[#allocation2 + $0xb0] sm:$0xf] 0
        %435 = vst [vmem:[#allocation2 + $0xb4] sm:$0xf] 0
        %436 = vst [vmem:[#allocation2 + $0xb8] sm:$0xf] 0
        %v437 = vld [vmem:[#allocation2 + $0xbc] sm:$0x1]
        %v438 = vsel %vm370, 0, %v437
        %439 = vst [vmem:[#allocation2 + $0xbc] sm:$0x1] %v438
        %440 = vst [vmem:[#allocation2 + $0xc0] sm:$0xf] 0
        %441 = vst [vmem:[#allocation2 + $0xc4] sm:$0xf] 0
        %442 = vst [vmem:[#allocation2 + $0xc8] sm:$0xf] 0
        %v443 = vld [vmem:[#allocation2 + $0xcc] sm:$0x1]
        %v444 = vsel %vm370, 0, %v443
        %445 = vst [vmem:[#allocation2 + $0xcc] sm:$0x1] %v444
        %446 = vst [vmem:[#allocation2 + $0xd0] sm:$0xf] 0
        %447 = vst [vmem:[#allocation2 + $0xd4] sm:$0xf] 0
        %448 = vst [vmem:[#allocation2 + $0xd8] sm:$0xf] 0
        %v449 = vld [vmem:[#allocation2 + $0xdc] sm:$0x1]
        %v450 = vsel %vm370, 0, %v449
        %451 = vst [vmem:[#allocation2 + $0xdc] sm:$0x1] %v450
        %452 = vst [vmem:[#allocation2 + $0xe0] sm:$0xf] 0
        %453 = vst [vmem:[#allocation2 + $0xe4] sm:$0xf] 0
        %454 = vst [vmem:[#allocation2 + $0xe8] sm:$0xf] 0
        %v455 = vld [vmem:[#allocation2 + $0xec] sm:$0x1]
        %v456 = vsel %vm370, 0, %v455
        %457 = vst [vmem:[#allocation2 + $0xec] sm:$0x1] %v456
        %458 = vst [vmem:[#allocation2 + $0xf0] sm:$0xf] 0
        %459 = vst [vmem:[#allocation2 + $0xf4] sm:$0xf] 0
        %460 = vst [vmem:[#allocation2 + $0xf8] sm:$0xf] 0
        %v461 = vld [vmem:[#allocation2 + $0xfc] sm:$0x1]
        %v462 = vsel %vm370, 0, %v461
        %463 = vst [vmem:[#allocation2 + $0xfc] sm:$0x1] %v462
        %464 = vst [vmem:[#allocation2 + $0x100] sm:$0xf] 0
        %465 = vst [vmem:[#allocation2 + $0x104] sm:$0xf] 0
        %466 = vst [vmem:[#allocation2 + $0x108] sm:$0xf] 0
        %v467 = vld [vmem:[#allocation2 + $0x10c] sm:$0x1]
        %v468 = vsel %vm370, 0, %v467
        %469 = vst [vmem:[#allocation2 + $0x10c] sm:$0x1] %v468
        %470 = vst [vmem:[#allocation2 + $0x110] sm:$0xf] 0
        %471 = vst [vmem:[#allocation2 + $0x114] sm:$0xf] 0
        %472 = vst [vmem:[#allocation2 + $0x118] sm:$0xf] 0
        %v473 = vld [vmem:[#allocation2 + $0x11c] sm:$0x1]
        %v474 = vsel %vm370, 0, %v473
        %475 = vst [vmem:[#allocation2 + $0x11c] sm:$0x1] %v474
      $region64: #{bottleneck_forward.1} parent=59 // pred_fallthru
        _
      %v476 = vld [vmem:[%s354] sm:$0xf]
      %v477 = vld [vmem:[%s354 + $0x4] sm:$0xf]
      %v478 = vld [vmem:[%s354 + $0x8] sm:$0xf]
      %v479 = vld [vmem:[%s354 + $0xc] sm:$0xf]
      %v480 = vld [vmem:[%s354 + $0x10] sm:$0xf]
      %v481 = vld [vmem:[%s354 + $0x14] sm:$0xf]
      %v482 = vld [vmem:[%s354 + $0x18] sm:$0xf]
      %v483 = vld [vmem:[%s354 + $0x1c] sm:$0xf]
      %v484 = vld [vmem:[%s354 + $0x20] sm:$0xf]
      %v485 = vld [vmem:[%s354 + $0x24] sm:$0xf]
      %v486 = vld [vmem:[%s354 + $0x28] sm:$0xf]
      %v487 = vld [vmem:[%s354 + $0x2c] sm:$0xf]
      %v488 = vld [vmem:[%s354 + $0x30] sm:$0xf]
      %v489 = vld [vmem:[%s354 + $0x34] sm:$0xf]
      %v490 = vld [vmem:[%s354 + $0x38] sm:$0xf]
      %v491 = vld [vmem:[%s354 + $0x3c] sm:$0xf]
      %v492 = vld [vmem:[%s354 + $0x40] sm:$0xf]
      %v493 = vld [vmem:[%s354 + $0x44] sm:$0xf]
      %v494 = vld [vmem:[%s354 + $0x48] sm:$0xf]
      %v495 = vld [vmem:[%s354 + $0x4c] sm:$0xf]
      %v496 = vld [vmem:[%s354 + $0x50] sm:$0xf]
      %v497 = vld [vmem:[%s354 + $0x54] sm:$0xf]
      %v498 = vld [vmem:[%s354 + $0x58] sm:$0xf]
      %v499 = vld [vmem:[%s354 + $0x5c] sm:$0xf]
      %v500 = vld [vmem:[%s354 + $0x60] sm:$0xf]
      %v501 = vld [vmem:[%s354 + $0x64] sm:$0xf]
      %v502 = vld [vmem:[%s354 + $0x68] sm:$0xf]
      %v503 = vld [vmem:[%s354 + $0x6c] sm:$0xf]
      %v504 = vld [vmem:[%s354 + $0x70] sm:$0xf]
      %v505 = vld [vmem:[%s354 + $0x74] sm:$0xf]
      %v506 = vld [vmem:[%s354 + $0x78] sm:$0xf]
      %v507 = vld [vmem:[%s354 + $0x7c] sm:$0xf]
      %v508 = vld [vmem:[%s1] sm:$0xf]
      %v509 = vld [vmem:[%s1 + $0x4] sm:$0xf]
      %v510 = vld [vmem:[%s2] sm:$0x1]
      %v512 = vlaneseq
      %v513 = vshrl.u32 %v512, 7
      %v514 = vsub.s32 0, %v513
      %v515 = vrot.slane %v510, %v514
      %v549 = vunpack.c.l.b16 %v476
      %v550 = vunpack.c.l.b16 %v477
      %v551 = vunpack.c.l.b16 %v478
      %v552 = vunpack.c.l.b16 %v479
      %v553 = vunpack.c.l.b16 %v480
      %v554 = vunpack.c.l.b16 %v481
      %v555 = vunpack.c.l.b16 %v482
      %v556 = vunpack.c.l.b16 %v483
      %v557 = vunpack.c.l.b16 %v484
      %v558 = vunpack.c.l.b16 %v485
      %v559 = vunpack.c.l.b16 %v486
      %v560 = vunpack.c.l.b16 %v487
      %v561 = vunpack.c.l.b16 %v488
      %v562 = vunpack.c.l.b16 %v489
      %v563 = vunpack.c.l.b16 %v490
      %v564 = vunpack.c.l.b16 %v491
      %v565 = vunpack.c.l.b16 %v492
      %v566 = vunpack.c.l.b16 %v493
      %v567 = vunpack.c.l.b16 %v494
      %v568 = vunpack.c.l.b16 %v495
      %v569 = vunpack.c.l.b16 %v496
      %v570 = vunpack.c.l.b16 %v497
      %v571 = vunpack.c.l.b16 %v498
      %v572 = vunpack.c.l.b16 %v499
      %v573 = vunpack.c.l.b16 %v500
      %v574 = vunpack.c.l.b16 %v501
      %v575 = vunpack.c.l.b16 %v502
      %v576 = vunpack.c.l.b16 %v503
      %v577 = vunpack.c.l.b16 %v504
      %v578 = vunpack.c.l.b16 %v505
      %v579 = vunpack.c.l.b16 %v506
      %v580 = vunpack.c.l.b16 %v507
      %v581 = vpack.c.b16 %v550, %v549
      %v582 = vpack.c.b16 %v552, %v551
      %v583 = vpack.c.b16 %v554, %v553
      %v584 = vpack.c.b16 %v556, %v555
      %v585 = vpack.c.b16 %v558, %v557
      %v586 = vpack.c.b16 %v560, %v559
      %v587 = vpack.c.b16 %v562, %v561
      %v588 = vpack.c.b16 %v564, %v563
      %v589 = vpack.c.b16 %v566, %v565
      %v590 = vpack.c.b16 %v568, %v567
      %v591 = vpack.c.b16 %v570, %v569
      %v592 = vpack.c.b16 %v572, %v571
      %v593 = vpack.c.b16 %v574, %v573
      %v594 = vpack.c.b16 %v576, %v575
      %v595 = vpack.c.b16 %v578, %v577
      %v596 = vpack.c.b16 %v580, %v579
      %v599 = vunpack.c.l.b16 %v508
      %v600 = vunpack.c.l.b16 %v509
      %v601 = vpack.c.b16 %v600, %v599
      %vm603 = vcmask 130048
      %v605 = vsel %vm603, %v581, 0
      %v608 = vsel %vm603, %v582, 0
      %v611 = vsel %vm603, %v583, 0
      %v614 = vsel %vm603, %v584, 0
      %v617 = vsel %vm603, %v585, 0
      %v620 = vsel %vm603, %v586, 0
      %v623 = vsel %vm603, %v587, 0
      %v626 = vsel %vm603, %v588, 0
      %v629 = vsel %vm603, %v589, 0
      %v632 = vsel %vm603, %v590, 0
      %v635 = vsel %vm603, %v591, 0
      %v638 = vsel %vm603, %v592, 0
      %v641 = vsel %vm603, %v593, 0
      %v644 = vsel %vm603, %v594, 0
      %v647 = vsel %vm603, %v595, 0
      %v650 = vsel %vm603, %v596, 0
      %652 = vmatprep.subr.bf16.mxu0 0
      %653 = vmatpush1.bf16.msra.mxu0 %v601
      %654 = vmatprep.subr.bf16.mxu0 0
      %655 = vmatpush1.bf16.msra.mxu0 0
      %656 = vmatprep.subr.bf16.mxu0 0
      %657 = vmatpush1.bf16.msra.mxu0 0
      %658 = vmatprep.subr.bf16.mxu0 0
      %659 = vmatpush1.bf16.msra.mxu0 0
      %660 = vmatprep.subr.bf16.mxu0 0
      %661 = vmatpush1.bf16.msra.mxu0 0
      %662 = vmatprep.subr.bf16.mxu0 0
      %663 = vmatpush1.bf16.msra.mxu0 0
      %664 = vmatprep.subr.bf16.mxu0 0
      %665 = vmatpush1.bf16.msra.mxu0 0
      %666 = vmatprep.subr.bf16.mxu0 0
      %667 = vmatpush1.bf16.msra.mxu0 0
      %668 = vmatprep.subr.bf16.mxu0 0
      %669 = vmatpush1.bf16.msra.mxu0 0
      %670 = vmatprep.subr.bf16.mxu0 0
      %671 = vmatpush1.bf16.msra.mxu0 0
      %672 = vmatprep.subr.bf16.mxu0 0
      %673 = vmatpush1.bf16.msra.mxu0 0
      %674 = vmatprep.subr.bf16.mxu0 0
      %675 = vmatpush1.bf16.msra.mxu0 0
      %676 = vmatprep.subr.bf16.mxu0 0
      %677 = vmatpush1.bf16.msra.mxu0 0
      %678 = vmatprep.subr.bf16.mxu0 0
      %679 = vmatpush1.bf16.msra.mxu0 0
      %680 = vmatprep.subr.bf16.mxu0 0
      %681 = vmatpush1.bf16.msra.mxu0 0
      %682 = vmatprep.subr.bf16.mxu0 0
      %683 = vmatpush1.bf16.msra.mxu0 0
      %684 = vmatprep.mubr.bf16.mxu0 0
      %685 = vmatmul.mubr.bf16.gmra.mrb[0].mxu0 %v605
      %v686 = vpop.f32.mrb[0].mxu0
      %v687 = vadd.f32 %v515, %v686
      %v688 = vpop.f32.mrb[0].mxu0
      %v689 = vpop.f32.mrb[0].mxu0
      %v690 = vadd.f32 %v515, %v689
      %v691 = vpop.f32.mrb[0].mxu0
      %692 = vmatprep.mubr.bf16.mxu0 0
      %693 = vmatmul.mubr.bf16.gmra.mrb[0].mxu0 %v608
      %v694 = vpop.f32.mrb[0].mxu0
      %v695 = vadd.f32 %v515, %v694
      %v696 = vpop.f32.mrb[0].mxu0
      %v697 = vpop.f32.mrb[0].mxu0
      %v698 = vadd.f32 %v515, %v697
      %v699 = vpop.f32.mrb[0].mxu0
      %700 = vmatprep.mubr.bf16.mxu0 0
      %701 = vmatmul.mubr.bf16.gmra.mrb[0].mxu0 %v611
      %v702 = vpop.f32.mrb[0].mxu0
      %v703 = vadd.f32 %v515, %v702
      %v704 = vpop.f32.mrb[0].mxu0
      %v705 = vpop.f32.mrb[0].mxu0
      %v706 = vadd.f32 %v515, %v705
      %v707 = vpop.f32.mrb[0].mxu0
      %708 = vmatprep.mubr.bf16.mxu0 0
      %709 = vmatmul.mubr.bf16.gmra.mrb[0].mxu0 %v614
      %v710 = vpop.f32.mrb[0].mxu0
      %v711 = vadd.f32 %v515, %v710
      %v712 = vpop.f32.mrb[0].mxu0
      %v713 = vpop.f32.mrb[0].mxu0
      %v714 = vadd.f32 %v515, %v713
      %v715 = vpop.f32.mrb[0].mxu0
      %716 = vmatprep.mubr.bf16.mxu0 0
      %717 = vmatmul.mubr.bf16.gmra.mrb[0].mxu0 %v617
      %v718 = vpop.f32.mrb[0].mxu0
      %v719 = vadd.f32 %v515, %v718
      %v720 = vpop.f32.mrb[0].mxu0
      %v721 = vpop.f32.mrb[0].mxu0
      %v722 = vadd.f32 %v515, %v721
      %v723 = vpop.f32.mrb[0].mxu0
      %724 = vmatprep.mubr.bf16.mxu0 0
      %725 = vmatmul.mubr.bf16.gmra.mrb[0].mxu0 %v620
      %v726 = vpop.f32.mrb[0].mxu0
      %v727 = vadd.f32 %v515, %v726
      %v728 = vpop.f32.mrb[0].mxu0
      %v729 = vpop.f32.mrb[0].mxu0
      %v730 = vadd.f32 %v515, %v729
      %v731 = vpop.f32.mrb[0].mxu0
      %732 = vmatprep.mubr.bf16.mxu0 0
      %733 = vmatmul.mubr.bf16.gmra.mrb[0].mxu0 %v623
      %v734 = vpop.f32.mrb[0].mxu0
      %v735 = vadd.f32 %v515, %v734
      %v736 = vpop.f32.mrb[0].mxu0
      %v737 = vpop.f32.mrb[0].mxu0
      %v738 = vadd.f32 %v515, %v737
      %v739 = vpop.f32.mrb[0].mxu0
      %740 = vmatprep.mubr.bf16.mxu0 0
      %741 = vmatmul.mubr.bf16.gmra.mrb[0].mxu0 %v626
      %v742 = vpop.f32.mrb[0].mxu0
      %v743 = vadd.f32 %v515, %v742
      %v744 = vpop.f32.mrb[0].mxu0
      %v745 = vpop.f32.mrb[0].mxu0
      %v746 = vadd.f32 %v515, %v745
      %v747 = vpop.f32.mrb[0].mxu0
      %748 = vmatprep.mubr.bf16.mxu0 0
      %749 = vmatmul.mubr.bf16.gmra.mrb[0].mxu0 %v629
      %v750 = vpop.f32.mrb[0].mxu0
      %v751 = vadd.f32 %v515, %v750
      %v752 = vpop.f32.mrb[0].mxu0
      %v753 = vpop.f32.mrb[0].mxu0
      %v754 = vadd.f32 %v515, %v753
      %v755 = vpop.f32.mrb[0].mxu0
      %756 = vmatprep.mubr.bf16.mxu0 0
      %757 = vmatmul.mubr.bf16.gmra.mrb[0].mxu0 %v632
      %v758 = vpop.f32.mrb[0].mxu0
      %v759 = vadd.f32 %v515, %v758
      %v760 = vpop.f32.mrb[0].mxu0
      %v761 = vpop.f32.mrb[0].mxu0
      %v762 = vadd.f32 %v515, %v761
      %v763 = vpop.f32.mrb[0].mxu0
      %764 = vmatprep.mubr.bf16.mxu0 0
      %765 = vmatmul.mubr.bf16.gmra.mrb[0].mxu0 %v635
      %v766 = vpop.f32.mrb[0].mxu0
      %v767 = vadd.f32 %v515, %v766
      %v768 = vpop.f32.mrb[0].mxu0
      %v769 = vpop.f32.mrb[0].mxu0
      %v770 = vadd.f32 %v515, %v769
      %v771 = vpop.f32.mrb[0].mxu0
      %772 = vmatprep.mubr.bf16.mxu0 0
      %773 = vmatmul.mubr.bf16.gmra.mrb[0].mxu0 %v638
      %v774 = vpop.f32.mrb[0].mxu0
      %v775 = vadd.f32 %v515, %v774
      %v776 = vpop.f32.mrb[0].mxu0
      %v777 = vpop.f32.mrb[0].mxu0
      %v778 = vadd.f32 %v515, %v777
      %v779 = vpop.f32.mrb[0].mxu0
      %780 = vmatprep.mubr.bf16.mxu0 0
      %781 = vmatmul.mubr.bf16.gmra.mrb[0].mxu0 %v641
      %v782 = vpop.f32.mrb[0].mxu0
      %v783 = vadd.f32 %v515, %v782
      %v784 = vpop.f32.mrb[0].mxu0
      %v785 = vpop.f32.mrb[0].mxu0
      %v786 = vadd.f32 %v515, %v785
      %v787 = vpop.f32.mrb[0].mxu0
      %788 = vmatprep.mubr.bf16.mxu0 0
      %789 = vmatmul.mubr.bf16.gmra.mrb[0].mxu0 %v644
      %v790 = vpop.f32.mrb[0].mxu0
      %v791 = vadd.f32 %v515, %v790
      %v792 = vpop.f32.mrb[0].mxu0
      %v793 = vpop.f32.mrb[0].mxu0
      %v794 = vadd.f32 %v515, %v793
      %v795 = vpop.f32.mrb[0].mxu0
      %796 = vmatprep.mubr.bf16.mxu0 0
      %797 = vmatmul.mubr.bf16.gmra.mrb[0].mxu0 %v647
      %v798 = vpop.f32.mrb[0].mxu0
      %v799 = vadd.f32 %v515, %v798
      %v800 = vpop.f32.mrb[0].mxu0
      %v801 = vpop.f32.mrb[0].mxu0
      %v802 = vadd.f32 %v515, %v801
      %v803 = vpop.f32.mrb[0].mxu0
      %804 = vmatprep.mubr.bf16.mxu0 0
      %805 = vmatmul.mubr.bf16.gmra.mrb[0].mxu0 %v650
      %v806 = vpop.f32.mrb[0].mxu0
      %v807 = vadd.f32 %v515, %v806
      %v808 = vpop.f32.mrb[0].mxu0
      %v809 = vpop.f32.mrb[0].mxu0
      %v810 = vadd.f32 %v515, %v809
      %v811 = vpop.f32.mrb[0].mxu0
      %812 = vdwg.mxu0
      %v813 = vmax.f32 %v687, 0.0
      %v814 = vmax.f32 %v690, 0.0
      %v815 = vmax.f32 %v695, 0.0
      %v816 = vmax.f32 %v698, 0.0
      %v817 = vmax.f32 %v703, 0.0
      %v818 = vmax.f32 %v706, 0.0
      %v819 = vmax.f32 %v711, 0.0
      %v820 = vmax.f32 %v714, 0.0
      %v821 = vmax.f32 %v719, 0.0
      %v822 = vmax.f32 %v722, 0.0
      %v823 = vmax.f32 %v727, 0.0
      %v824 = vmax.f32 %v730, 0.0
      %v825 = vmax.f32 %v735, 0.0
      %v826 = vmax.f32 %v738, 0.0
      %v827 = vmax.f32 %v743, 0.0
      %v828 = vmax.f32 %v746, 0.0
      %v829 = vmax.f32 %v751, 0.0
      %v830 = vmax.f32 %v754, 0.0
      %v831 = vmax.f32 %v759, 0.0
      %v832 = vmax.f32 %v762, 0.0
      %v833 = vmax.f32 %v767, 0.0
      %v834 = vmax.f32 %v770, 0.0
      %v835 = vmax.f32 %v775, 0.0
      %v836 = vmax.f32 %v778, 0.0
      %v837 = vmax.f32 %v783, 0.0
      %v838 = vmax.f32 %v786, 0.0
      %v839 = vmax.f32 %v791, 0.0
      %v840 = vmax.f32 %v794, 0.0
      %v841 = vmax.f32 %v799, 0.0
      %v842 = vmax.f32 %v802, 0.0
      %v843 = vmax.f32 %v807, 0.0
      %v844 = vmax.f32 %v810, 0.0
      %v845 = vmin.f32 %v813, 6.0
      %v846 = vmin.f32 %v814, 6.0
      %v847 = vmin.f32 %v815, 6.0
      %v848 = vmin.f32 %v816, 6.0
      %v849 = vmin.f32 %v817, 6.0
      %v850 = vmin.f32 %v818, 6.0
      %v851 = vmin.f32 %v819, 6.0
      %v852 = vmin.f32 %v820, 6.0
      %v853 = vmin.f32 %v821, 6.0
      %v854 = vmin.f32 %v822, 6.0
      %v855 = vmin.f32 %v823, 6.0
      %v856 = vmin.f32 %v824, 6.0
      %v857 = vmin.f32 %v825, 6.0
      %v858 = vmin.f32 %v826, 6.0
      %v859 = vmin.f32 %v827, 6.0
      %v860 = vmin.f32 %v828, 6.0
      %v861 = vmin.f32 %v829, 6.0
      %v862 = vmin.f32 %v830, 6.0
      %v863 = vmin.f32 %v831, 6.0
      %v864 = vmin.f32 %v832, 6.0
      %v865 = vmin.f32 %v833, 6.0
      %v866 = vmin.f32 %v834, 6.0
      %v867 = vmin.f32 %v835, 6.0
      %v868 = vmin.f32 %v836, 6.0
      %v869 = vmin.f32 %v837, 6.0
      %v870 = vmin.f32 %v838, 6.0
      %v871 = vmin.f32 %v839, 6.0
      %v872 = vmin.f32 %v840, 6.0
      %v873 = vmin.f32 %v841, 6.0
      %v874 = vmin.f32 %v842, 6.0
      %v875 = vmin.f32 %v843, 6.0
      %v876 = vmin.f32 %v844, 6.0
      %v877 = vpack.c.bf16 %v846, %v845
      %v878 = vpack.c.bf16 %v848, %v847
      %v879 = vpack.c.bf16 %v850, %v849
      %v880 = vpack.c.bf16 %v852, %v851
      %v881 = vpack.c.bf16 %v854, %v853
      %v882 = vpack.c.bf16 %v856, %v855
      %v883 = vpack.c.bf16 %v858, %v857
      %v884 = vpack.c.bf16 %v860, %v859
      %v885 = vpack.c.bf16 %v862, %v861
      %v886 = vpack.c.bf16 %v864, %v863
      %v887 = vpack.c.bf16 %v866, %v865
      %v888 = vpack.c.bf16 %v868, %v867
      %v889 = vpack.c.bf16 %v870, %v869
      %v890 = vpack.c.bf16 %v872, %v871
      %v891 = vpack.c.bf16 %v874, %v873
      %v892 = vpack.c.bf16 %v876, %v875
      %v909 = vunpack.c.l.b16 %v877
      %v910 = vunpack.c.h.b16 %v877
      %v911 = vunpack.c.l.b16 %v878
      %v912 = vunpack.c.h.b16 %v878
      %v913 = vunpack.c.l.b16 %v879
      %v914 = vunpack.c.h.b16 %v879
      %v915 = vunpack.c.l.b16 %v880
      %v916 = vunpack.c.h.b16 %v880
      %v917 = vunpack.c.l.b16 %v881
      %v918 = vunpack.c.h.b16 %v881
      %v919 = vunpack.c.l.b16 %v882
      %v920 = vunpack.c.h.b16 %v882
      %v921 = vunpack.c.l.b16 %v883
      %v922 = vunpack.c.h.b16 %v883
      %v923 = vunpack.c.l.b16 %v884
      %v924 = vunpack.c.h.b16 %v884
      %v925 = vunpack.c.l.b16 %v885
      %v926 = vunpack.c.h.b16 %v885
      %v927 = vunpack.c.l.b16 %v886
      %v928 = vunpack.c.h.b16 %v886
      %v929 = vunpack.c.l.b16 %v887
      %v930 = vunpack.c.h.b16 %v887
      %v931 = vunpack.c.l.b16 %v888
      %v932 = vunpack.c.h.b16 %v888
      %v933 = vunpack.c.l.b16 %v889
      %v934 = vunpack.c.h.b16 %v889
      %v935 = vunpack.c.l.b16 %v890
      %v936 = vunpack.c.h.b16 %v890
      %v937 = vunpack.c.l.b16 %v891
      %v938 = vunpack.c.h.b16 %v891
      %v939 = vunpack.c.l.b16 %v892
      %v940 = vunpack.c.h.b16 %v892
      %v941 = vpack.c.b16 %v909, %v909
      %v942 = vpack.c.b16 %v910, %v910
      %v943 = vpack.c.b16 %v911, %v911
      %v944 = vpack.c.b16 %v912, %v912
      %v945 = vpack.c.b16 %v913, %v913
      %v946 = vpack.c.b16 %v914, %v914
      %v947 = vpack.c.b16 %v915, %v915
      %v948 = vpack.c.b16 %v916, %v916
      %v949 = vpack.c.b16 %v917, %v917
      %v950 = vpack.c.b16 %v918, %v918
      %v951 = vpack.c.b16 %v919, %v919
      %v952 = vpack.c.b16 %v920, %v920
      %v953 = vpack.c.b16 %v921, %v921
      %v954 = vpack.c.b16 %v922, %v922
      %v955 = vpack.c.b16 %v923, %v923
      %v956 = vpack.c.b16 %v924, %v924
      %v957 = vpack.c.b16 %v925, %v925
      %v958 = vpack.c.b16 %v926, %v926
      %v959 = vpack.c.b16 %v927, %v927
      %v960 = vpack.c.b16 %v928, %v928
      %v961 = vpack.c.b16 %v929, %v929
      %v962 = vpack.c.b16 %v930, %v930
      %v963 = vpack.c.b16 %v931, %v931
      %v964 = vpack.c.b16 %v932, %v932
      %v965 = vpack.c.b16 %v933, %v933
      %v966 = vpack.c.b16 %v934, %v934
      %v967 = vpack.c.b16 %v935, %v935
      %v968 = vpack.c.b16 %v936, %v936
      %v969 = vpack.c.b16 %v937, %v937
      %v970 = vpack.c.b16 %v938, %v938
      %v971 = vpack.c.b16 %v939, %v939
      %v972 = vpack.c.b16 %v940, %v940
      %s1005 = scalar_lea.vmem [#allocation2], 16
      %1006 = vst [vmem:[%s1005 + $0x4] sm:$0xf] %v941
      %1007 = vst [vmem:[%s1005 + $0x8] sm:$0xf] %v942
      %1008 = vst [vmem:[%s1005 + $0x14] sm:$0xf] %v943
      %1009 = vst [vmem:[%s1005 + $0x18] sm:$0xf] %v944
      %1010 = vst [vmem:[%s1005 + $0x24] sm:$0xf] %v945
      %1011 = vst [vmem:[%s1005 + $0x28] sm:$0xf] %v946
      %1012 = vst [vmem:[%s1005 + $0x34] sm:$0xf] %v947
      %1013 = vst [vmem:[%s1005 + $0x38] sm:$0xf] %v948
      %1014 = vst [vmem:[%s1005 + $0x44] sm:$0xf] %v949
      %1015 = vst [vmem:[%s1005 + $0x48] sm:$0xf] %v950
      %1016 = vst [vmem:[%s1005 + $0x54] sm:$0xf] %v951
      %1017 = vst [vmem:[%s1005 + $0x58] sm:$0xf] %v952
      %1018 = vst [vmem:[%s1005 + $0x64] sm:$0xf] %v953
      %1019 = vst [vmem:[%s1005 + $0x68] sm:$0xf] %v954
      %1020 = vst [vmem:[%s1005 + $0x74] sm:$0xf] %v955
      %1021 = vst [vmem:[%s1005 + $0x78] sm:$0xf] %v956
      %1022 = vst [vmem:[%s1005 + $0x84] sm:$0xf] %v957
      %1023 = vst [vmem:[%s1005 + $0x88] sm:$0xf] %v958
      %1024 = vst [vmem:[%s1005 + $0x94] sm:$0xf] %v959
      %1025 = vst [vmem:[%s1005 + $0x98] sm:$0xf] %v960
      %1026 = vst [vmem:[%s1005 + $0xa4] sm:$0xf] %v961
      %1027 = vst [vmem:[%s1005 + $0xa8] sm:$0xf] %v962
      %1028 = vst [vmem:[%s1005 + $0xb4] sm:$0xf] %v963
      %1029 = vst [vmem:[%s1005 + $0xb8] sm:$0xf] %v964
      %1030 = vst [vmem:[%s1005 + $0xc4] sm:$0xf] %v965
      %1031 = vst [vmem:[%s1005 + $0xc8] sm:$0xf] %v966
      %1032 = vst [vmem:[%s1005 + $0xd4] sm:$0xf] %v967
      %1033 = vst [vmem:[%s1005 + $0xd8] sm:$0xf] %v968
      %1034 = vst [vmem:[%s1005 + $0xe4] sm:$0xf] %v969
      %1035 = vst [vmem:[%s1005 + $0xe8] sm:$0xf] %v970
      %1036 = vst [vmem:[%s1005 + $0xf4] sm:$0xf] %v971
      %1037 = vst [vmem:[%s1005 + $0xf8] sm:$0xf] %v972
      %v1038 = vld [vmem:[#allocation2] sm:$0x8]
      %v1039 = vld [vmem:[#allocation2 + $0x4] sm:$0xf]
      %v1040 = vld [vmem:[#allocation2 + $0x8] sm:$0xf]
      %v1041 = vld [vmem:[#allocation2 + $0x10] sm:$0x8]
      %v1042 = vld [vmem:[#allocation2 + $0x14] sm:$0xf]
      %v1043 = vld [vmem:[#allocation2 + $0x18] sm:$0xf]
      %v1044 = vld [vmem:[#allocation2 + $0x20] sm:$0x8]
      %v1045 = vld [vmem:[#allocation2 + $0x24] sm:$0xf]
      %v1046 = vld [vmem:[#allocation2 + $0x28] sm:$0xf]
      %v1047 = vld [vmem:[#allocation2 + $0x30] sm:$0x8]
      %v1048 = vld [vmem:[#allocation2 + $0x34] sm:$0xf]
      %v1049 = vld [vmem:[#allocation2 + $0x38] sm:$0xf]
      %v1050 = vld [vmem:[#allocation2 + $0x40] sm:$0x8]
      %v1051 = vld [vmem:[#allocation2 + $0x44] sm:$0xf]
      %v1052 = vld [vmem:[#allocation2 + $0x48] sm:$0xf]
      %v1053 = vld [vmem:[#allocation2 + $0x50] sm:$0x8]
      %v1054 = vld [vmem:[#allocation2 + $0x54] sm:$0xf]
      %v1055 = vld [vmem:[#allocation2 + $0x58] sm:$0xf]
      %v1056 = vld [vmem:[#allocation2 + $0x60] sm:$0x8]
      %v1057 = vld [vmem:[#allocation2 + $0x64] sm:$0xf]
      %v1058 = vld [vmem:[#allocation2 + $0x68] sm:$0xf]
      %v1059 = vld [vmem:[#allocation2 + $0x70] sm:$0x8]
      %v1060 = vld [vmem:[#allocation2 + $0x74] sm:$0xf]
      %v1061 = vld [vmem:[#allocation2 + $0x78] sm:$0xf]
      %v1062 = vld [vmem:[#allocation2 + $0x80] sm:$0x8]
      %v1063 = vld [vmem:[#allocation2 + $0x84] sm:$0xf]
      %v1064 = vld [vmem:[#allocation2 + $0x88] sm:$0xf]
      %v1065 = vld [vmem:[#allocation2 + $0x90] sm:$0x8]
      %v1066 = vld [vmem:[#allocation2 + $0x94] sm:$0xf]
      %v1067 = vld [vmem:[#allocation2 + $0x98] sm:$0xf]
      %v1068 = vld [vmem:[#allocation2 + $0xa0] sm:$0x8]
      %v1069 = vld [vmem:[#allocation2 + $0xa4] sm:$0xf]
      %v1070 = vld [vmem:[#allocation2 + $0xa8] sm:$0xf]
      %v1071 = vld [vmem:[#allocation2 + $0xb0] sm:$0x8]
      %v1072 = vld [vmem:[#allocation2 + $0xb4] sm:$0xf]
      %v1073 = vld [vmem:[#allocation2 + $0xb8] sm:$0xf]
      %v1074 = vld [vmem:[#allocation2 + $0xc0] sm:$0x8]
      %v1075 = vld [vmem:[#allocation2 + $0xc4] sm:$0xf]
      %v1076 = vld [vmem:[#allocation2 + $0xc8] sm:$0xf]
      %v1077 = vld [vmem:[#allocation2 + $0xd0] sm:$0x8]
      %v1078 = vld [vmem:[#allocation2 + $0xd4] sm:$0xf]
      %v1079 = vld [vmem:[#allocation2 + $0xd8] sm:$0xf]
      %v1080 = vld [vmem:[#allocation2 + $0xe0] sm:$0x8]
      %v1081 = vld [vmem:[#allocation2 + $0xe4] sm:$0xf]
      %v1082 = vld [vmem:[#allocation2 + $0xe8] sm:$0xf]
      %v1083 = vld [vmem:[#allocation2 + $0xf0] sm:$0x8]
      %v1084 = vld [vmem:[#allocation2 + $0xf4] sm:$0xf]
      %v1085 = vld [vmem:[#allocation2 + $0xf8] sm:$0xf]
      %v1086 = vunpack.c.l.bf16 %v1038
      %v1087 = vunpack.c.l.bf16 %v1039
      %v1088 = vunpack.c.l.bf16 %v1040
      %v1089 = vunpack.c.l.bf16 %v1041
      %v1090 = vunpack.c.l.bf16 %v1042
      %v1091 = vunpack.c.l.bf16 %v1043
      %v1092 = vunpack.c.l.bf16 %v1044
      %v1093 = vunpack.c.l.bf16 %v1045
      %v1094 = vunpack.c.l.bf16 %v1046
      %v1095 = vunpack.c.l.bf16 %v1047
      %v1096 = vunpack.c.l.bf16 %v1048
      %v1097 = vunpack.c.l.bf16 %v1049
      %v1098 = vunpack.c.l.bf16 %v1050
      %v1099 = vunpack.c.l.bf16 %v1051
      %v1100 = vunpack.c.l.bf16 %v1052
      %v1101 = vunpack.c.l.bf16 %v1053
      %v1102 = vunpack.c.l.bf16 %v1054
      %v1103 = vunpack.c.l.bf16 %v1055
      %v1104 = vunpack.c.l.bf16 %v1056
      %v1105 = vunpack.c.l.bf16 %v1057
      %v1106 = vunpack.c.l.bf16 %v1058
      %v1107 = vunpack.c.l.bf16 %v1059
      %v1108 = vunpack.c.l.bf16 %v1060
      %v1109 = vunpack.c.l.bf16 %v1061
      %v1110 = vunpack.c.l.bf16 %v1062
      %v1111 = vunpack.c.l.bf16 %v1063
      %v1112 = vunpack.c.l.bf16 %v1064
      %v1113 = vunpack.c.l.bf16 %v1065
      %v1114 = vunpack.c.l.bf16 %v1066
      %v1115 = vunpack.c.l.bf16 %v1067
      %v1116 = vunpack.c.l.bf16 %v1068
      %v1117 = vunpack.c.l.bf16 %v1069
      %v1118 = vunpack.c.l.bf16 %v1070
      %v1119 = vunpack.c.l.bf16 %v1071
      %v1120 = vunpack.c.l.bf16 %v1072
      %v1121 = vunpack.c.l.bf16 %v1073
      %v1122 = vunpack.c.l.bf16 %v1074
      %v1123 = vunpack.c.l.bf16 %v1075
      %v1124 = vunpack.c.l.bf16 %v1076
      %v1125 = vunpack.c.l.bf16 %v1077
      %v1126 = vunpack.c.l.bf16 %v1078
      %v1127 = vunpack.c.l.bf16 %v1079
      %v1128 = vunpack.c.l.bf16 %v1080
      %v1129 = vunpack.c.l.bf16 %v1081
      %v1130 = vunpack.c.l.bf16 %v1082
      %v1131 = vunpack.c.l.bf16 %v1083
      %v1132 = vunpack.c.l.bf16 %v1084
      %v1133 = vunpack.c.l.bf16 %v1085
      %v1134 = vld [vmem:[%s3] sm:$0x1]
      %v1135 = vlaneseq
      %v1136 = vshrl.u32 %v1135, 7
      %v1137 = vsub.s32 0, %v1136
      %v1138 = vrot.slane %v1134, %v1137
      %v1139 = vmul.f32 %v1086, %v1138
      %v1140 = vmul.f32 %v1087, %v1138
      %v1141 = vmul.f32 %v1088, %v1138
      %v1142 = vmul.f32 %v1089, %v1138
      %v1143 = vmul.f32 %v1090, %v1138
      %v1144 = vmul.f32 %v1091, %v1138
      %v1145 = vmul.f32 %v1092, %v1138
      %v1146 = vmul.f32 %v1093, %v1138
      %v1147 = vmul.f32 %v1094, %v1138
      %v1148 = vmul.f32 %v1095, %v1138
      %v1149 = vmul.f32 %v1096, %v1138
      %v1150 = vmul.f32 %v1097, %v1138
      %v1151 = vmul.f32 %v1098, %v1138
      %v1152 = vmul.f32 %v1099, %v1138
      %v1153 = vmul.f32 %v1100, %v1138
      %v1154 = vmul.f32 %v1101, %v1138
      %v1155 = vmul.f32 %v1102, %v1138
      %v1156 = vmul.f32 %v1103, %v1138
      %v1157 = vmul.f32 %v1104, %v1138
      %v1158 = vmul.f32 %v1105, %v1138
      %v1159 = vmul.f32 %v1106, %v1138
      %v1160 = vmul.f32 %v1107, %v1138
      %v1161 = vmul.f32 %v1108, %v1138
      %v1162 = vmul.f32 %v1109, %v1138
      %v1163 = vmul.f32 %v1110, %v1138
      %v1164 = vmul.f32 %v1111, %v1138
      %v1165 = vmul.f32 %v1112, %v1138
      %v1166 = vmul.f32 %v1113, %v1138
      %v1167 = vmul.f32 %v1114, %v1138
      %v1168 = vmul.f32 %v1115, %v1138
      %v1169 = vmul.f32 %v1116, %v1138
      %v1170 = vmul.f32 %v1117, %v1138
      %v1171 = vmul.f32 %v1118, %v1138
      %v1172 = vmul.f32 %v1119, %v1138
      %v1173 = vmul.f32 %v1120, %v1138
      %v1174 = vmul.f32 %v1121, %v1138
      %v1175 = vmul.f32 %v1122, %v1138
      %v1176 = vmul.f32 %v1123, %v1138
      %v1177 = vmul.f32 %v1124, %v1138
      %v1178 = vmul.f32 %v1125, %v1138
      %v1179 = vmul.f32 %v1126, %v1138
      %v1180 = vmul.f32 %v1127, %v1138
      %v1181 = vmul.f32 %v1128, %v1138
      %v1182 = vmul.f32 %v1129, %v1138
      %v1183 = vmul.f32 %v1130, %v1138
      %v1184 = vmul.f32 %v1131, %v1138
      %v1185 = vmul.f32 %v1132, %v1138
      %v1186 = vmul.f32 %v1133, %v1138
      %v1187 = vld [vmem:[%s3 + $0x1] sm:$0x1]
      %v1188 = vlaneseq
      %v1189 = vshrl.u32 %v1188, 7
      %v1190 = vsub.s32 0, %v1189
      %v1191 = vrot.slane %v1187, %v1190
      %v1192 = vmul.f32 %v1087, %v1191
      %v1193 = vmul.f32 %v1088, %v1191
      %v1194 = vmul.f32 %v1090, %v1191
      %v1195 = vmul.f32 %v1091, %v1191
      %v1196 = vmul.f32 %v1093, %v1191
      %v1197 = vmul.f32 %v1094, %v1191
      %v1198 = vmul.f32 %v1096, %v1191
      %v1199 = vmul.f32 %v1097, %v1191
      %v1200 = vmul.f32 %v1099, %v1191
      %v1201 = vmul.f32 %v1100, %v1191
      %v1202 = vmul.f32 %v1102, %v1191
      %v1203 = vmul.f32 %v1103, %v1191
      %v1204 = vmul.f32 %v1105, %v1191
      %v1205 = vmul.f32 %v1106, %v1191
      %v1206 = vmul.f32 %v1108, %v1191
      %v1207 = vmul.f32 %v1109, %v1191
      %v1208 = vmul.f32 %v1111, %v1191
      %v1209 = vmul.f32 %v1112, %v1191
      %v1210 = vmul.f32 %v1114, %v1191
      %v1211 = vmul.f32 %v1115, %v1191
      %v1212 = vmul.f32 %v1117, %v1191
      %v1213 = vmul.f32 %v1118, %v1191
      %v1214 = vmul.f32 %v1120, %v1191
      %v1215 = vmul.f32 %v1121, %v1191
      %v1216 = vmul.f32 %v1123, %v1191
      %v1217 = vmul.f32 %v1124, %v1191
      %v1218 = vmul.f32 %v1126, %v1191
      %v1219 = vmul.f32 %v1127, %v1191
      %v1220 = vmul.f32 %v1129, %v1191
      %v1221 = vmul.f32 %v1130, %v1191
      %v1222 = vmul.f32 %v1132, %v1191
      %v1223 = vmul.f32 %v1133, %v1191
      %vm1256 = vcmask 1046528
      %v1257 = vrot.slane %v1192, 1
      %v1258 = vrot.slane %v1193, 1
      %v1259 = vsel %vm1256, %v1257, %v1258
      %v1260 = vrot.slane %v1194, 1
      %v1261 = vrot.slane %v1195, 1
      %v1262 = vsel %vm1256, %v1260, %v1261
      %v1263 = vrot.slane %v1196, 1
      %v1264 = vrot.slane %v1197, 1
      %v1265 = vsel %vm1256, %v1263, %v1264
      %v1266 = vrot.slane %v1198, 1
      %v1267 = vrot.slane %v1199, 1
      %v1268 = vsel %vm1256, %v1266, %v1267
      %v1269 = vrot.slane %v1200, 1
      %v1270 = vrot.slane %v1201, 1
      %v1271 = vsel %vm1256, %v1269, %v1270
      %v1272 = vrot.slane %v1202, 1
      %v1273 = vrot.slane %v1203, 1
      %v1274 = vsel %vm1256, %v1272, %v1273
      %v1275 = vrot.slane %v1204, 1
      %v1276 = vrot.slane %v1205, 1
      %v1277 = vsel %vm1256, %v1275, %v1276
      %v1278 = vrot.slane %v1206, 1
      %v1279 = vrot.slane %v1207, 1
      %v1280 = vsel %vm1256, %v1278, %v1279
      %v1281 = vrot.slane %v1208, 1
      %v1282 = vrot.slane %v1209, 1
      %v1283 = vsel %vm1256, %v1281, %v1282
      %v1284 = vrot.slane %v1210, 1
      %v1285 = vrot.slane %v1211, 1
      %v1286 = vsel %vm1256, %v1284, %v1285
      %v1287 = vrot.slane %v1212, 1
      %v1288 = vrot.slane %v1213, 1
      %v1289 = vsel %vm1256, %v1287, %v1288
      %v1290 = vrot.slane %v1214, 1
      %v1291 = vrot.slane %v1215, 1
      %v1292 = vsel %vm1256, %v1290, %v1291
      %v1293 = vrot.slane %v1216, 1
      %v1294 = vrot.slane %v1217, 1
      %v1295 = vsel %vm1256, %v1293, %v1294
      %v1296 = vrot.slane %v1218, 1
      %v1297 = vrot.slane %v1219, 1
      %v1298 = vsel %vm1256, %v1296, %v1297
      %v1299 = vrot.slane %v1220, 1
      %v1300 = vrot.slane %v1221, 1
      %v1301 = vsel %vm1256, %v1299, %v1300
      %v1302 = vrot.slane %v1222, 1
      %v1303 = vrot.slane %v1223, 1
      %v1304 = vsel %vm1256, %v1302, %v1303
      %v1353 = vadd.f32 %v1139, %v1257
      %v1354 = vadd.f32 %v1140, %v1259
      %v1355 = vadd.f32 %v1141, %v1258
      %v1356 = vadd.f32 %v1142, %v1260
      %v1357 = vadd.f32 %v1143, %v1262
      %v1358 = vadd.f32 %v1144, %v1261
      %v1359 = vadd.f32 %v1145, %v1263
      %v1360 = vadd.f32 %v1146, %v1265
      %v1361 = vadd.f32 %v1147, %v1264
      %v1362 = vadd.f32 %v1148, %v1266
      %v1363 = vadd.f32 %v1149, %v1268
      %v1364 = vadd.f32 %v1150, %v1267
      %v1365 = vadd.f32 %v1151, %v1269
      %v1366 = vadd.f32 %v1152, %v1271
      %v1367 = vadd.f32 %v1153, %v1270
      %v1368 = vadd.f32 %v1154, %v1272
      %v1369 = vadd.f32 %v1155, %v1274
      %v1370 = vadd.f32 %v1156, %v1273
      %v1371 = vadd.f32 %v1157, %v1275
      %v1372 = vadd.f32 %v1158, %v1277
      %v1373 = vadd.f32 %v1159, %v1276
      %v1374 = vadd.f32 %v1160, %v1278
      %v1375 = vadd.f32 %v1161, %v1280
      %v1376 = vadd.f32 %v1162, %v1279
      %v1377 = vadd.f32 %v1163, %v1281
      %v1378 = vadd.f32 %v1164, %v1283
      %v1379 = vadd.f32 %v1165, %v1282
      %v1380 = vadd.f32 %v1166, %v1284
      %v1381 = vadd.f32 %v1167, %v1286
      %v1382 = vadd.f32 %v1168, %v1285
      %v1383 = vadd.f32 %v1169, %v1287
      %v1384 = vadd.f32 %v1170, %v1289
      %v1385 = vadd.f32 %v1171, %v1288
      %v1386 = vadd.f32 %v1172, %v1290
      %v1387 = vadd.f32 %v1173, %v1292
      %v1388 = vadd.f32 %v1174, %v1291
      %v1389 = vadd.f32 %v1175, %v1293
      %v1390 = vadd.f32 %v1176, %v1295
      %v1391 = vadd.f32 %v1177, %v1294
      %v1392 = vadd.f32 %v1178, %v1296
      %v1393 = vadd.f32 %v1179, %v1298
      %v1394 = vadd.f32 %v1180, %v1297
      %v1395 = vadd.f32 %v1181, %v1299
      %v1396 = vadd.f32 %v1182, %v1301
      %v1397 = vadd.f32 %v1183, %v1300
      %v1398 = vadd.f32 %v1184, %v1302
      %v1399 = vadd.f32 %v1185, %v1304
      %v1400 = vadd.f32 %v1186, %v1303
      %v1401 = vld [vmem:[#allocation2 + $0xc] sm:$0x1]
      %v1402 = vld [vmem:[#allocation2 + $0x1c] sm:$0x1]
      %v1403 = vld [vmem:[#allocation2 + $0x2c] sm:$0x1]
      %v1404 = vld [vmem:[#allocation2 + $0x3c] sm:$0x1]
      %v1405 = vld [vmem:[#allocation2 + $0x4c] sm:$0x1]
      %v1406 = vld [vmem:[#allocation2 + $0x5c] sm:$0x1]
      %v1407 = vld [vmem:[#allocation2 + $0x6c] sm:$0x1]
      %v1408 = vld [vmem:[#allocation2 + $0x7c] sm:$0x1]
      %v1409 = vld [vmem:[#allocation2 + $0x8c] sm:$0x1]
      %v1410 = vld [vmem:[#allocation2 + $0x9c] sm:$0x1]
      %v1411 = vld [vmem:[#allocation2 + $0xac] sm:$0x1]
      %v1412 = vld [vmem:[#allocation2 + $0xbc] sm:$0x1]
      %v1413 = vld [vmem:[#allocation2 + $0xcc] sm:$0x1]
      %v1414 = vld [vmem:[#allocation2 + $0xdc] sm:$0x1]
      %v1415 = vld [vmem:[#allocation2 + $0xec] sm:$0x1]
      %v1416 = vld [vmem:[#allocation2 + $0xfc] sm:$0x1]
      %v1417 = vunpack.c.l.bf16 %v1401
      %v1418 = vunpack.c.l.bf16 %v1402
      %v1419 = vunpack.c.l.bf16 %v1403
      %v1420 = vunpack.c.l.bf16 %v1404
      %v1421 = vunpack.c.l.bf16 %v1405
      %v1422 = vunpack.c.l.bf16 %v1406
      %v1423 = vunpack.c.l.bf16 %v1407
      %v1424 = vunpack.c.l.bf16 %v1408
      %v1425 = vunpack.c.l.bf16 %v1409
      %v1426 = vunpack.c.l.bf16 %v1410
      %v1427 = vunpack.c.l.bf16 %v1411
      %v1428 = vunpack.c.l.bf16 %v1412
      %v1429 = vunpack.c.l.bf16 %v1413
      %v1430 = vunpack.c.l.bf16 %v1414
      %v1431 = vunpack.c.l.bf16 %v1415
      %v1432 = vunpack.c.l.bf16 %v1416
      %v1433 = vld [vmem:[%s3 + $0x2] sm:$0x1]
      %v1434 = vlaneseq
      %v1435 = vshrl.u32 %v1434, 7
      %v1436 = vsub.s32 0, %v1435
      %v1437 = vrot.slane %v1433, %v1436
      %v1438 = vmul.f32 %v1087, %v1437
      %v1439 = vmul.f32 %v1088, %v1437
      %v1440 = vmul.f32 %v1417, %v1437
      %v1441 = vmul.f32 %v1090, %v1437
      %v1442 = vmul.f32 %v1091, %v1437
      %v1443 = vmul.f32 %v1418, %v1437
      %v1444 = vmul.f32 %v1093, %v1437
      %v1445 = vmul.f32 %v1094, %v1437
      %v1446 = vmul.f32 %v1419, %v1437
      %v1447 = vmul.f32 %v1096, %v1437
      %v1448 = vmul.f32 %v1097, %v1437
      %v1449 = vmul.f32 %v1420, %v1437
      %v1450 = vmul.f32 %v1099, %v1437
      %v1451 = vmul.f32 %v1100, %v1437
      %v1452 = vmul.f32 %v1421, %v1437
      %v1453 = vmul.f32 %v1102, %v1437
      %v1454 = vmul.f32 %v1103, %v1437
      %v1455 = vmul.f32 %v1422, %v1437
      %v1456 = vmul.f32 %v1105, %v1437
      %v1457 = vmul.f32 %v1106, %v1437
      %v1458 = vmul.f32 %v1423, %v1437
      %v1459 = vmul.f32 %v1108, %v1437
      %v1460 = vmul.f32 %v1109, %v1437
      %v1461 = vmul.f32 %v1424, %v1437
      %v1462 = vmul.f32 %v1111, %v1437
      %v1463 = vmul.f32 %v1112, %v1437
      %v1464 = vmul.f32 %v1425, %v1437
      %v1465 = vmul.f32 %v1114, %v1437
      %v1466 = vmul.f32 %v1115, %v1437
      %v1467 = vmul.f32 %v1426, %v1437
      %v1468 = vmul.f32 %v1117, %v1437
      %v1469 = vmul.f32 %v1118, %v1437
      %v1470 = vmul.f32 %v1427, %v1437
      %v1471 = vmul.f32 %v1120, %v1437
      %v1472 = vmul.f32 %v1121, %v1437
      %v1473 = vmul.f32 %v1428, %v1437
      %v1474 = vmul.f32 %v1123, %v1437
      %v1475 = vmul.f32 %v1124, %v1437
      %v1476 = vmul.f32 %v1429, %v1437
      %v1477 = vmul.f32 %v1126, %v1437
      %v1478 = vmul.f32 %v1127, %v1437
      %v1479 = vmul.f32 %v1430, %v1437
      %v1480 = vmul.f32 %v1129, %v1437
      %v1481 = vmul.f32 %v1130, %v1437
      %v1482 = vmul.f32 %v1431, %v1437
      %v1483 = vmul.f32 %v1132, %v1437
      %v1484 = vmul.f32 %v1133, %v1437
      %v1485 = vmul.f32 %v1432, %v1437
      %vm1534 = vcmask 1045504
      %v1535 = vrot.slane %v1438, 2
      %v1536 = vrot.slane %v1439, 2
      %v1537 = vsel %vm1534, %v1535, %v1536
      %v1538 = vrot.slane %v1440, 2
      %v1539 = vsel %vm1534, %v1536, %v1538
      %v1540 = vrot.slane %v1441, 2
      %v1541 = vrot.slane %v1442, 2
      %v1542 = vsel %vm1534, %v1540, %v1541
      %v1543 = vrot.slane %v1443, 2
      %v1544 = vsel %vm1534, %v1541, %v1543
      %v1545 = vrot.slane %v1444, 2
      %v1546 = vrot.slane %v1445, 2
      %v1547 = vsel %vm1534, %v1545, %v1546
      %v1548 = vrot.slane %v1446, 2
      %v1549 = vsel %vm1534, %v1546, %v1548
      %v1550 = vrot.slane %v1447, 2
      %v1551 = vrot.slane %v1448, 2
      %v1552 = vsel %vm1534, %v1550, %v1551
      %v1553 = vrot.slane %v1449, 2
      %v1554 = vsel %vm1534, %v1551, %v1553
      %v1555 = vrot.slane %v1450, 2
      %v1556 = vrot.slane %v1451, 2
      %v1557 = vsel %vm1534, %v1555, %v1556
      %v1558 = vrot.slane %v1452, 2
      %v1559 = vsel %vm1534, %v1556, %v1558
      %v1560 = vrot.slane %v1453, 2
      %v1561 = vrot.slane %v1454, 2
      %v1562 = vsel %vm1534, %v1560, %v1561
      %v1563 = vrot.slane %v1455, 2
      %v1564 = vsel %vm1534, %v1561, %v1563
      %v1565 = vrot.slane %v1456, 2
      %v1566 = vrot.slane %v1457, 2
      %v1567 = vsel %vm1534, %v1565, %v1566
      %v1568 = vrot.slane %v1458, 2
      %v1569 = vsel %vm1534, %v1566, %v1568
      %v1570 = vrot.slane %v1459, 2
      %v1571 = vrot.slane %v1460, 2
      %v1572 = vsel %vm1534, %v1570, %v1571
      %v1573 = vrot.slane %v1461, 2
      %v1574 = vsel %vm1534, %v1571, %v1573
      %v1575 = vrot.slane %v1462, 2
      %v1576 = vrot.slane %v1463, 2
      %v1577 = vsel %vm1534, %v1575, %v1576
      %v1578 = vrot.slane %v1464, 2
      %v1579 = vsel %vm1534, %v1576, %v1578
      %v1580 = vrot.slane %v1465, 2
      %v1581 = vrot.slane %v1466, 2
      %v1582 = vsel %vm1534, %v1580, %v1581
      %v1583 = vrot.slane %v1467, 2
      %v1584 = vsel %vm1534, %v1581, %v1583
      %v1585 = vrot.slane %v1468, 2
      %v1586 = vrot.slane %v1469, 2
      %v1587 = vsel %vm1534, %v1585, %v1586
      %v1588 = vrot.slane %v1470, 2
      %v1589 = vsel %vm1534, %v1586, %v1588
      %v1590 = vrot.slane %v1471, 2
      %v1591 = vrot.slane %v1472, 2
      %v1592 = vsel %vm1534, %v1590, %v1591
      %v1593 = vrot.slane %v1473, 2
      %v1594 = vsel %vm1534, %v1591, %v1593
      %v1595 = vrot.slane %v1474, 2
      %v1596 = vrot.slane %v1475, 2
      %v1597 = vsel %vm1534, %v1595, %v1596
      %v1598 = vrot.slane %v1476, 2
      %v1599 = vsel %vm1534, %v1596, %v1598
      %v1600 = vrot.slane %v1477, 2
      %v1601 = vrot.slane %v1478, 2
      %v1602 = vsel %vm1534, %v1600, %v1601
      %v1603 = vrot.slane %v1479, 2
      %v1604 = vsel %vm1534, %v1601, %v1603
      %v1605 = vrot.slane %v1480, 2
      %v1606 = vrot.slane %v1481, 2
      %v1607 = vsel %vm1534, %v1605, %v1606
      %v1608 = vrot.slane %v1482, 2
      %v1609 = vsel %vm1534, %v1606, %v1608
      %v1610 = vrot.slane %v1483, 2
      %v1611 = vrot.slane %v1484, 2
      %v1612 = vsel %vm1534, %v1610, %v1611
      %v1613 = vrot.slane %v1485, 2
      %v1614 = vsel %vm1534, %v1611, %v1613
      %v1663 = vadd.f32 %v1353, %v1535
      %v1664 = vadd.f32 %v1354, %v1537
      %v1665 = vadd.f32 %v1355, %v1539
      %v1666 = vadd.f32 %v1356, %v1540
      %v1667 = vadd.f32 %v1357, %v1542
      %v1668 = vadd.f32 %v1358, %v1544
      %v1669 = vadd.f32 %v1359, %v1545
      %v1670 = vadd.f32 %v1360, %v1547
      %v1671 = vadd.f32 %v1361, %v1549
      %v1672 = vadd.f32 %v1362, %v1550
      %v1673 = vadd.f32 %v1363, %v1552
      %v1674 = vadd.f32 %v1364, %v1554
      %v1675 = vadd.f32 %v1365, %v1555
      %v1676 = vadd.f32 %v1366, %v1557
      %v1677 = vadd.f32 %v1367, %v1559
      %v1678 = vadd.f32 %v1368, %v1560
      %v1679 = vadd.f32 %v1369, %v1562
      %v1680 = vadd.f32 %v1370, %v1564
      %v1681 = vadd.f32 %v1371, %v1565
      %v1682 = vadd.f32 %v1372, %v1567
      %v1683 = vadd.f32 %v1373, %v1569
      %v1684 = vadd.f32 %v1374, %v1570
      %v1685 = vadd.f32 %v1375, %v1572
      %v1686 = vadd.f32 %v1376, %v1574
      %v1687 = vadd.f32 %v1377, %v1575
      %v1688 = vadd.f32 %v1378, %v1577
      %v1689 = vadd.f32 %v1379, %v1579
      %v1690 = vadd.f32 %v1380, %v1580
      %v1691 = vadd.f32 %v1381, %v1582
      %v1692 = vadd.f32 %v1382, %v1584
      %v1693 = vadd.f32 %v1383, %v1585
      %v1694 = vadd.f32 %v1384, %v1587
      %v1695 = vadd.f32 %v1385, %v1589
      %v1696 = vadd.f32 %v1386, %v1590
      %v1697 = vadd.f32 %v1387, %v1592
      %v1698 = vadd.f32 %v1388, %v1594
      %v1699 = vadd.f32 %v1389, %v1595
      %v1700 = vadd.f32 %v1390, %v1597
      %v1701 = vadd.f32 %v1391, %v1599
      %v1702 = vadd.f32 %v1392, %v1600
      %v1703 = vadd.f32 %v1393, %v1602
      %v1704 = vadd.f32 %v1394, %v1604
      %v1705 = vadd.f32 %v1395, %v1605
      %v1706 = vadd.f32 %v1396, %v1607
      %v1707 = vadd.f32 %v1397, %v1609
      %v1708 = vadd.f32 %v1398, %v1610
      %v1709 = vadd.f32 %v1399, %v1612
      %v1710 = vadd.f32 %v1400, %v1614
      %v1711 = vld [vmem:[%s1005] sm:$0x8]
      %v1712 = vld [vmem:[%s1005 + $0x4] sm:$0xf]
      %v1713 = vld [vmem:[%s1005 + $0x8] sm:$0xf]
      %v1714 = vld [vmem:[%s1005 + $0x10] sm:$0x8]
      %v1715 = vld [vmem:[%s1005 + $0x14] sm:$0xf]
      %v1716 = vld [vmem:[%s1005 + $0x18] sm:$0xf]
      %v1717 = vld [vmem:[%s1005 + $0x20] sm:$0x8]
      %v1718 = vld [vmem:[%s1005 + $0x24] sm:$0xf]
      %v1719 = vld [vmem:[%s1005 + $0x28] sm:$0xf]
      %v1720 = vld [vmem:[%s1005 + $0x30] sm:$0x8]
      %v1721 = vld [vmem:[%s1005 + $0x34] sm:$0xf]
      %v1722 = vld [vmem:[%s1005 + $0x38] sm:$0xf]
      %v1723 = vld [vmem:[%s1005 + $0x40] sm:$0x8]
      %v1724 = vld [vmem:[%s1005 + $0x44] sm:$0xf]
      %v1725 = vld [vmem:[%s1005 + $0x48] sm:$0xf]
      %v1726 = vld [vmem:[%s1005 + $0x50] sm:$0x8]
      %v1727 = vld [vmem:[%s1005 + $0x54] sm:$0xf]
      %v1728 = vld [vmem:[%s1005 + $0x58] sm:$0xf]
      %v1729 = vld [vmem:[%s1005 + $0x60] sm:$0x8]
      %v1730 = vld [vmem:[%s1005 + $0x64] sm:$0xf]
      %v1731 = vld [vmem:[%s1005 + $0x68] sm:$0xf]
      %v1732 = vld [vmem:[%s1005 + $0x70] sm:$0x8]
      %v1733 = vld [vmem:[%s1005 + $0x74] sm:$0xf]
      %v1734 = vld [vmem:[%s1005 + $0x78] sm:$0xf]
      %v1735 = vld [vmem:[%s1005 + $0x80] sm:$0x8]
      %v1736 = vld [vmem:[%s1005 + $0x84] sm:$0xf]
      %v1737 = vld [vmem:[%s1005 + $0x88] sm:$0xf]
      %v1738 = vld [vmem:[%s1005 + $0x90] sm:$0x8]
      %v1739 = vld [vmem:[%s1005 + $0x94] sm:$0xf]
      %v1740 = vld [vmem:[%s1005 + $0x98] sm:$0xf]
      %v1741 = vld [vmem:[%s1005 + $0xa0] sm:$0x8]
      %v1742 = vld [vmem:[%s1005 + $0xa4] sm:$0xf]
      %v1743 = vld [vmem:[%s1005 + $0xa8] sm:$0xf]
      %v1744 = vld [vmem:[%s1005 + $0xb0] sm:$0x8]
      %v1745 = vld [vmem:[%s1005 + $0xb4] sm:$0xf]
      %v1746 = vld [vmem:[%s1005 + $0xb8] sm:$0xf]
      %v1747 = vld [vmem:[%s1005 + $0xc0] sm:$0x8]
      %v1748 = vld [vmem:[%s1005 + $0xc4] sm:$0xf]
      %v1749 = vld [vmem:[%s1005 + $0xc8] sm:$0xf]
      %v1750 = vld [vmem:[%s1005 + $0xd0] sm:$0x8]
      %v1751 = vld [vmem:[%s1005 + $0xd4] sm:$0xf]
      %v1752 = vld [vmem:[%s1005 + $0xd8] sm:$0xf]
      %v1753 = vld [vmem:[%s1005 + $0xe0] sm:$0x8]
      %v1754 = vld [vmem:[%s1005 + $0xe4] sm:$0xf]
      %v1755 = vld [vmem:[%s1005 + $0xe8] sm:$0xf]
      %v1756 = vld [vmem:[%s1005 + $0xf0] sm:$0x8]
      %v1757 = vld [vmem:[%s1005 + $0xf4] sm:$0xf]
      %v1758 = vld [vmem:[%s1005 + $0xf8] sm:$0xf]
      %v1759 = vunpack.c.l.bf16 %v1711
      %v1760 = vunpack.c.l.bf16 %v1712
      %v1761 = vunpack.c.l.bf16 %v1713
      %v1762 = vunpack.c.l.bf16 %v1714
      %v1763 = vunpack.c.l.bf16 %v1715
      %v1764 = vunpack.c.l.bf16 %v1716
      %v1765 = vunpack.c.l.bf16 %v1717
      %v1766 = vunpack.c.l.bf16 %v1718
      %v1767 = vunpack.c.l.bf16 %v1719
      %v1768 = vunpack.c.l.bf16 %v1720
      %v1769 = vunpack.c.l.bf16 %v1721
      %v1770 = vunpack.c.l.bf16 %v1722
      %v1771 = vunpack.c.l.bf16 %v1723
      %v1772 = vunpack.c.l.bf16 %v1724
      %v1773 = vunpack.c.l.bf16 %v1725
      %v1774 = vunpack.c.l.bf16 %v1726
      %v1775 = vunpack.c.l.bf16 %v1727
      %v1776 = vunpack.c.l.bf16 %v1728
      %v1777 = vunpack.c.l.bf16 %v1729
      %v1778 = vunpack.c.l.bf16 %v1730
      %v1779 = vunpack.c.l.bf16 %v1731
      %v1780 = vunpack.c.l.bf16 %v1732
      %v1781 = vunpack.c.l.bf16 %v1733
      %v1782 = vunpack.c.l.bf16 %v1734
      %v1783 = vunpack.c.l.bf16 %v1735
      %v1784 = vunpack.c.l.bf16 %v1736
      %v1785 = vunpack.c.l.bf16 %v1737
      %v1786 = vunpack.c.l.bf16 %v1738
      %v1787 = vunpack.c.l.bf16 %v1739
      %v1788 = vunpack.c.l.bf16 %v1740
      %v1789 = vunpack.c.l.bf16 %v1741
      %v1790 = vunpack.c.l.bf16 %v1742
      %v1791 = vunpack.c.l.bf16 %v1743
      %v1792 = vunpack.c.l.bf16 %v1744
      %v1793 = vunpack.c.l.bf16 %v1745
      %v1794 = vunpack.c.l.bf16 %v1746
      %v1795 = vunpack.c.l.bf16 %v1747
      %v1796 = vunpack.c.l.bf16 %v1748
      %v1797 = vunpack.c.l.bf16 %v1749
      %v1798 = vunpack.c.l.bf16 %v1750
      %v1799 = vunpack.c.l.bf16 %v1751
      %v1800 = vunpack.c.l.bf16 %v1752
      %v1801 = vunpack.c.l.bf16 %v1753
      %v1802 = vunpack.c.l.bf16 %v1754
      %v1803 = vunpack.c.l.bf16 %v1755
      %v1804 = vunpack.c.l.bf16 %v1756
      %v1805 = vunpack.c.l.bf16 %v1757
      %v1806 = vunpack.c.l.bf16 %v1758
      %v1807 = vld [vmem:[%s3 + $0x3] sm:$0x1]
      %v1808 = vlaneseq
      %v1809 = vshrl.u32 %v1808, 7
      %v1810 = vsub.s32 0, %v1809
      %v1811 = vrot.slane %v1807, %v1810
      %v1812 = vmul.f32 %v1759, %v1811
      %v1813 = vmul.f32 %v1760, %v1811
      %v1814 = vmul.f32 %v1761, %v1811
      %v1815 = vmul.f32 %v1762, %v1811
      %v1816 = vmul.f32 %v1763, %v1811
      %v1817 = vmul.f32 %v1764, %v1811
      %v1818 = vmul.f32 %v1765, %v1811
      %v1819 = vmul.f32 %v1766, %v1811
      %v1820 = vmul.f32 %v1767, %v1811
      %v1821 = vmul.f32 %v1768, %v1811
      %v1822 = vmul.f32 %v1769, %v1811
      %v1823 = vmul.f32 %v1770, %v1811
      %v1824 = vmul.f32 %v1771, %v1811
      %v1825 = vmul.f32 %v1772, %v1811
      %v1826 = vmul.f32 %v1773, %v1811
      %v1827 = vmul.f32 %v1774, %v1811
      %v1828 = vmul.f32 %v1775, %v1811
      %v1829 = vmul.f32 %v1776, %v1811
      %v1830 = vmul.f32 %v1777, %v1811
      %v1831 = vmul.f32 %v1778, %v1811
      %v1832 = vmul.f32 %v1779, %v1811
      %v1833 = vmul.f32 %v1780, %v1811
      %v1834 = vmul.f32 %v1781, %v1811
      %v1835 = vmul.f32 %v1782, %v1811
      %v1836 = vmul.f32 %v1783, %v1811
      %v1837 = vmul.f32 %v1784, %v1811
      %v1838 = vmul.f32 %v1785, %v1811
      %v1839 = vmul.f32 %v1786, %v1811
      %v1840 = vmul.f32 %v1787, %v1811
      %v1841 = vmul.f32 %v1788, %v1811
      %v1842 = vmul.f32 %v1789, %v1811
      %v1843 = vmul.f32 %v1790, %v1811
      %v1844 = vmul.f32 %v1791, %v1811
      %v1845 = vmul.f32 %v1792, %v1811
      %v1846 = vmul.f32 %v1793, %v1811
      %v1847 = vmul.f32 %v1794, %v1811
      %v1848 = vmul.f32 %v1795, %v1811
      %v1849 = vmul.f32 %v1796, %v1811
      %v1850 = vmul.f32 %v1797, %v1811
      %v1851 = vmul.f32 %v1798, %v1811
      %v1852 = vmul.f32 %v1799, %v1811
      %v1853 = vmul.f32 %v1800, %v1811
      %v1854 = vmul.f32 %v1801, %v1811
      %v1855 = vmul.f32 %v1802, %v1811
      %v1856 = vmul.f32 %v1803, %v1811
      %v1857 = vmul.f32 %v1804, %v1811
      %v1858 = vmul.f32 %v1805, %v1811
      %v1859 = vmul.f32 %v1806, %v1811
      %v1860 = vadd.f32 %v1663, %v1812
      %v1861 = vadd.f32 %v1664, %v1813
      %v1862 = vadd.f32 %v1665, %v1814
      %v1863 = vadd.f32 %v1666, %v1815
      %v1864 = vadd.f32 %v1667, %v1816
      %v1865 = vadd.f32 %v1668, %v1817
      %v1866 = vadd.f32 %v1669, %v1818
      %v1867 = vadd.f32 %v1670, %v1819
      %v1868 = vadd.f32 %v1671, %v1820
      %v1869 = vadd.f32 %v1672, %v1821
      %v1870 = vadd.f32 %v1673, %v1822
      %v1871 = vadd.f32 %v1674, %v1823
      %v1872 = vadd.f32 %v1675, %v1824
      %v1873 = vadd.f32 %v1676, %v1825
      %v1874 = vadd.f32 %v1677, %v1826
      %v1875 = vadd.f32 %v1678, %v1827
      %v1876 = vadd.f32 %v1679, %v1828
      %v1877 = vadd.f32 %v1680, %v1829
      %v1878 = vadd.f32 %v1681, %v1830
      %v1879 = vadd.f32 %v1682, %v1831
      %v1880 = vadd.f32 %v1683, %v1832
      %v1881 = vadd.f32 %v1684, %v1833
      %v1882 = vadd.f32 %v1685, %v1834
      %v1883 = vadd.f32 %v1686, %v1835
      %v1884 = vadd.f32 %v1687, %v1836
      %v1885 = vadd.f32 %v1688, %v1837
      %v1886 = vadd.f32 %v1689, %v1838
      %v1887 = vadd.f32 %v1690, %v1839
      %v1888 = vadd.f32 %v1691, %v1840
      %v1889 = vadd.f32 %v1692, %v1841
      %v1890 = vadd.f32 %v1693, %v1842
      %v1891 = vadd.f32 %v1694, %v1843
      %v1892 = vadd.f32 %v1695, %v1844
      %v1893 = vadd.f32 %v1696, %v1845
      %v1894 = vadd.f32 %v1697, %v1846
      %v1895 = vadd.f32 %v1698, %v1847
      %v1896 = vadd.f32 %v1699, %v1848
      %v1897 = vadd.f32 %v1700, %v1849
      %v1898 = vadd.f32 %v1701, %v1850
      %v1899 = vadd.f32 %v1702, %v1851
      %v1900 = vadd.f32 %v1703, %v1852
      %v1901 = vadd.f32 %v1704, %v1853
      %v1902 = vadd.f32 %v1705, %v1854
      %v1903 = vadd.f32 %v1706, %v1855
      %v1904 = vadd.f32 %v1707, %v1856
      %v1905 = vadd.f32 %v1708, %v1857
      %v1906 = vadd.f32 %v1709, %v1858
      %v1907 = vadd.f32 %v1710, %v1859
      %v1908 = vld [vmem:[%s3 + $0x4] sm:$0x1]
      %v1909 = vlaneseq
      %v1910 = vshrl.u32 %v1909, 7
      %v1911 = vsub.s32 0, %v1910
      %v1912 = vrot.slane %v1908, %v1911
      %v1913 = vmul.f32 %v1760, %v1912
      %v1914 = vmul.f32 %v1761, %v1912
      %v1915 = vmul.f32 %v1763, %v1912
      %v1916 = vmul.f32 %v1764, %v1912
      %v1917 = vmul.f32 %v1766, %v1912
      %v1918 = vmul.f32 %v1767, %v1912
      %v1919 = vmul.f32 %v1769, %v1912
      %v1920 = vmul.f32 %v1770, %v1912
      %v1921 = vmul.f32 %v1772, %v1912
      %v1922 = vmul.f32 %v1773, %v1912
      %v1923 = vmul.f32 %v1775, %v1912
      %v1924 = vmul.f32 %v1776, %v1912
      %v1925 = vmul.f32 %v1778, %v1912
      %v1926 = vmul.f32 %v1779, %v1912
      %v1927 = vmul.f32 %v1781, %v1912
      %v1928 = vmul.f32 %v1782, %v1912
      %v1929 = vmul.f32 %v1784, %v1912
      %v1930 = vmul.f32 %v1785, %v1912
      %v1931 = vmul.f32 %v1787, %v1912
      %v1932 = vmul.f32 %v1788, %v1912
      %v1933 = vmul.f32 %v1790, %v1912
      %v1934 = vmul.f32 %v1791, %v1912
      %v1935 = vmul.f32 %v1793, %v1912
      %v1936 = vmul.f32 %v1794, %v1912
      %v1937 = vmul.f32 %v1796, %v1912
      %v1938 = vmul.f32 %v1797, %v1912
      %v1939 = vmul.f32 %v1799, %v1912
      %v1940 = vmul.f32 %v1800, %v1912
      %v1941 = vmul.f32 %v1802, %v1912
      %v1942 = vmul.f32 %v1803, %v1912
      %v1943 = vmul.f32 %v1805, %v1912
      %v1944 = vmul.f32 %v1806, %v1912
      %v1977 = vrot.slane %v1913, 1
      %v1978 = vrot.slane %v1914, 1
      %v1979 = vsel %vm1256, %v1977, %v1978
      %v1980 = vrot.slane %v1915, 1
      %v1981 = vrot.slane %v1916, 1
      %v1982 = vsel %vm1256, %v1980, %v1981
      %v1983 = vrot.slane %v1917, 1
      %v1984 = vrot.slane %v1918, 1
      %v1985 = vsel %vm1256, %v1983, %v1984
      %v1986 = vrot.slane %v1919, 1
      %v1987 = vrot.slane %v1920, 1
      %v1988 = vsel %vm1256, %v1986, %v1987
      %v1989 = vrot.slane %v1921, 1
      %v1990 = vrot.slane %v1922, 1
      %v1991 = vsel %vm1256, %v1989, %v1990
      %v1992 = vrot.slane %v1923, 1
      %v1993 = vrot.slane %v1924, 1
      %v1994 = vsel %vm1256, %v1992, %v1993
      %v1995 = vrot.slane %v1925, 1
      %v1996 = vrot.slane %v1926, 1
      %v1997 = vsel %vm1256, %v1995, %v1996
      %v1998 = vrot.slane %v1927, 1
      %v1999 = vrot.slane %v1928, 1
      %v2000 = vsel %vm1256, %v1998, %v1999
      %v2001 = vrot.slane %v1929, 1
      %v2002 = vrot.slane %v1930, 1
      %v2003 = vsel %vm1256, %v2001, %v2002
      %v2004 = vrot.slane %v1931, 1
      %v2005 = vrot.slane %v1932, 1
      %v2006 = vsel %vm1256, %v2004, %v2005
      %v2007 = vrot.slane %v1933, 1
      %v2008 = vrot.slane %v1934, 1
      %v2009 = vsel %vm1256, %v2007, %v2008
      %v2010 = vrot.slane %v1935, 1
      %v2011 = vrot.slane %v1936, 1
      %v2012 = vsel %vm1256, %v2010, %v2011
      %v2013 = vrot.slane %v1937, 1
      %v2014 = vrot.slane %v1938, 1
      %v2015 = vsel %vm1256, %v2013, %v2014
      %v2016 = vrot.slane %v1939, 1
      %v2017 = vrot.slane %v1940, 1
      %v2018 = vsel %vm1256, %v2016, %v2017
      %v2019 = vrot.slane %v1941, 1
      %v2020 = vrot.slane %v1942, 1
      %v2021 = vsel %vm1256, %v2019, %v2020
      %v2022 = vrot.slane %v1943, 1
      %v2023 = vrot.slane %v1944, 1
      %v2024 = vsel %vm1256, %v2022, %v2023
      %v2073 = vadd.f32 %v1860, %v1977
      %v2074 = vadd.f32 %v1861, %v1979
      %v2075 = vadd.f32 %v1862, %v1978
      %v2076 = vadd.f32 %v1863, %v1980
      %v2077 = vadd.f32 %v1864, %v1982
      %v2078 = vadd.f32 %v1865, %v1981
      %v2079 = vadd.f32 %v1866, %v1983
      %v2080 = vadd.f32 %v1867, %v1985
      %v2081 = vadd.f32 %v1868, %v1984
      %v2082 = vadd.f32 %v1869, %v1986
      %v2083 = vadd.f32 %v1870, %v1988
      %v2084 = vadd.f32 %v1871, %v1987
      %v2085 = vadd.f32 %v1872, %v1989
      %v2086 = vadd.f32 %v1873, %v1991
      %v2087 = vadd.f32 %v1874, %v1990
      %v2088 = vadd.f32 %v1875, %v1992
      %v2089 = vadd.f32 %v1876, %v1994
      %v2090 = vadd.f32 %v1877, %v1993
      %v2091 = vadd.f32 %v1878, %v1995
      %v2092 = vadd.f32 %v1879, %v1997
      %v2093 = vadd.f32 %v1880, %v1996
      %v2094 = vadd.f32 %v1881, %v1998
      %v2095 = vadd.f32 %v1882, %v2000
      %v2096 = vadd.f32 %v1883, %v1999
      %v2097 = vadd.f32 %v1884, %v2001
      %v2098 = vadd.f32 %v1885, %v2003
      %v2099 = vadd.f32 %v1886, %v2002
      %v2100 = vadd.f32 %v1887, %v2004
      %v2101 = vadd.f32 %v1888, %v2006
      %v2102 = vadd.f32 %v1889, %v2005
      %v2103 = vadd.f32 %v1890, %v2007
      %v2104 = vadd.f32 %v1891, %v2009
      %v2105 = vadd.f32 %v1892, %v2008
      %v2106 = vadd.f32 %v1893, %v2010
      %v2107 = vadd.f32 %v1894, %v2012
      %v2108 = vadd.f32 %v1895, %v2011
      %v2109 = vadd.f32 %v1896, %v2013
      %v2110 = vadd.f32 %v1897, %v2015
      %v2111 = vadd.f32 %v1898, %v2014
      %v2112 = vadd.f32 %v1899, %v2016
      %v2113 = vadd.f32 %v1900, %v2018
      %v2114 = vadd.f32 %v1901, %v2017
      %v2115 = vadd.f32 %v1902, %v2019
      %v2116 = vadd.f32 %v1903, %v2021
      %v2117 = vadd.f32 %v1904, %v2020
      %v2118 = vadd.f32 %v1905, %v2022
      %v2119 = vadd.f32 %v1906, %v2024
      %v2120 = vadd.f32 %v1907, %v2023
      %v2121 = vld [vmem:[%s1005 + $0xc] sm:$0x1]
      %v2122 = vld [vmem:[%s1005 + $0x1c] sm:$0x1]
      %v2123 = vld [vmem:[%s1005 + $0x2c] sm:$0x1]
      %v2124 = vld [vmem:[%s1005 + $0x3c] sm:$0x1]
      %v2125 = vld [vmem:[%s1005 + $0x4c] sm:$0x1]
      %v2126 = vld [vmem:[%s1005 + $0x5c] sm:$0x1]
      %v2127 = vld [vmem:[%s1005 + $0x6c] sm:$0x1]
      %v2128 = vld [vmem:[%s1005 + $0x7c] sm:$0x1]
      %v2129 = vld [vmem:[%s1005 + $0x8c] sm:$0x1]
      %v2130 = vld [vmem:[%s1005 + $0x9c] sm:$0x1]
      %v2131 = vld [vmem:[%s1005 + $0xac] sm:$0x1]
      %v2132 = vld [vmem:[%s1005 + $0xbc] sm:$0x1]
      %v2133 = vld [vmem:[%s1005 + $0xcc] sm:$0x1]
      %v2134 = vld [vmem:[%s1005 + $0xdc] sm:$0x1]
      %v2135 = vld [vmem:[%s1005 + $0xec] sm:$0x1]
      %v2136 = vld [vmem:[%s1005 + $0xfc] sm:$0x1]
      %v2137 = vunpack.c.l.bf16 %v2121
      %v2138 = vunpack.c.l.bf16 %v2122
      %v2139 = vunpack.c.l.bf16 %v2123
      %v2140 = vunpack.c.l.bf16 %v2124
      %v2141 = vunpack.c.l.bf16 %v2125
      %v2142 = vunpack.c.l.bf16 %v2126
      %v2143 = vunpack.c.l.bf16 %v2127
      %v2144 = vunpack.c.l.bf16 %v2128
      %v2145 = vunpack.c.l.bf16 %v2129
      %v2146 = vunpack.c.l.bf16 %v2130
      %v2147 = vunpack.c.l.bf16 %v2131
      %v2148 = vunpack.c.l.bf16 %v2132
      %v2149 = vunpack.c.l.bf16 %v2133
      %v2150 = vunpack.c.l.bf16 %v2134
      %v2151 = vunpack.c.l.bf16 %v2135
      %v2152 = vunpack.c.l.bf16 %v2136
      %v2153 = vld [vmem:[%s3 + $0x5] sm:$0x1]
      %v2154 = vlaneseq
      %v2155 = vshrl.u32 %v2154, 7
      %v2156 = vsub.s32 0, %v2155
      %v2157 = vrot.slane %v2153, %v2156
      %v2158 = vmul.f32 %v1760, %v2157
      %v2159 = vmul.f32 %v1761, %v2157
      %v2160 = vmul.f32 %v2137, %v2157
      %v2161 = vmul.f32 %v1763, %v2157
      %v2162 = vmul.f32 %v1764, %v2157
      %v2163 = vmul.f32 %v2138, %v2157
      %v2164 = vmul.f32 %v1766, %v2157
      %v2165 = vmul.f32 %v1767, %v2157
      %v2166 = vmul.f32 %v2139, %v2157
      %v2167 = vmul.f32 %v1769, %v2157
      %v2168 = vmul.f32 %v1770, %v2157
      %v2169 = vmul.f32 %v2140, %v2157
      %v2170 = vmul.f32 %v1772, %v2157
      %v2171 = vmul.f32 %v1773, %v2157
      %v2172 = vmul.f32 %v2141, %v2157
      %v2173 = vmul.f32 %v1775, %v2157
      %v2174 = vmul.f32 %v1776, %v2157
      %v2175 = vmul.f32 %v2142, %v2157
      %v2176 = vmul.f32 %v1778, %v2157
      %v2177 = vmul.f32 %v1779, %v2157
      %v2178 = vmul.f32 %v2143, %v2157
      %v2179 = vmul.f32 %v1781, %v2157
      %v2180 = vmul.f32 %v1782, %v2157
      %v2181 = vmul.f32 %v2144, %v2157
      %v2182 = vmul.f32 %v1784, %v2157
      %v2183 = vmul.f32 %v1785, %v2157
      %v2184 = vmul.f32 %v2145, %v2157
      %v2185 = vmul.f32 %v1787, %v2157
      %v2186 = vmul.f32 %v1788, %v2157
      %v2187 = vmul.f32 %v2146, %v2157
      %v2188 = vmul.f32 %v1790, %v2157
      %v2189 = vmul.f32 %v1791, %v2157
      %v2190 = vmul.f32 %v2147, %v2157
      %v2191 = vmul.f32 %v1793, %v2157
      %v2192 = vmul.f32 %v1794, %v2157
      %v2193 = vmul.f32 %v2148, %v2157
      %v2194 = vmul.f32 %v1796, %v2157
      %v2195 = vmul.f32 %v1797, %v2157
      %v2196 = vmul.f32 %v2149, %v2157
      %v2197 = vmul.f32 %v1799, %v2157
      %v2198 = vmul.f32 %v1800, %v2157
      %v2199 = vmul.f32 %v2150, %v2157
      %v2200 = vmul.f32 %v1802, %v2157
      %v2201 = vmul.f32 %v1803, %v2157
      %v2202 = vmul.f32 %v2151, %v2157
      %v2203 = vmul.f32 %v1805, %v2157
      %v2204 = vmul.f32 %v1806, %v2157
      %v2205 = vmul.f32 %v2152, %v2157
      %v2254 = vrot.slane %v2158, 2
      %v2255 = vrot.slane %v2159, 2
      %v2256 = vsel %vm1534, %v2254, %v2255
      %v2257 = vrot.slane %v2160, 2
      %v2258 = vsel %vm1534, %v2255, %v2257
      %v2259 = vrot.slane %v2161, 2
      %v2260 = vrot.slane %v2162, 2
      %v2261 = vsel %vm1534, %v2259, %v2260
      %v2262 = vrot.slane %v2163, 2
      %v2263 = vsel %vm1534, %v2260, %v2262
      %v2264 = vrot.slane %v2164, 2
      %v2265 = vrot.slane %v2165, 2
      %v2266 = vsel %vm1534, %v2264, %v2265
      %v2267 = vrot.slane %v2166, 2
      %v2268 = vsel %vm1534, %v2265, %v2267
      %v2269 = vrot.slane %v2167, 2
      %v2270 = vrot.slane %v2168, 2
      %v2271 = vsel %vm1534, %v2269, %v2270
      %v2272 = vrot.slane %v2169, 2
      %v2273 = vsel %vm1534, %v2270, %v2272
      %v2274 = vrot.slane %v2170, 2
      %v2275 = vrot.slane %v2171, 2
      %v2276 = vsel %vm1534, %v2274, %v2275
      %v2277 = vrot.slane %v2172, 2
      %v2278 = vsel %vm1534, %v2275, %v2277
      %v2279 = vrot.slane %v2173, 2
      %v2280 = vrot.slane %v2174, 2
      %v2281 = vsel %vm1534, %v2279, %v2280
      %v2282 = vrot.slane %v2175, 2
      %v2283 = vsel %vm1534, %v2280, %v2282
      %v2284 = vrot.slane %v2176, 2
      %v2285 = vrot.slane %v2177, 2
      %v2286 = vsel %vm1534, %v2284, %v2285
      %v2287 = vrot.slane %v2178, 2
      %v2288 = vsel %vm1534, %v2285, %v2287
      %v2289 = vrot.slane %v2179, 2
      %v2290 = vrot.slane %v2180, 2
      %v2291 = vsel %vm1534, %v2289, %v2290
      %v2292 = vrot.slane %v2181, 2
      %v2293 = vsel %vm1534, %v2290, %v2292
      %v2294 = vrot.slane %v2182, 2
      %v2295 = vrot.slane %v2183, 2
      %v2296 = vsel %vm1534, %v2294, %v2295
      %v2297 = vrot.slane %v2184, 2
      %v2298 = vsel %vm1534, %v2295, %v2297
      %v2299 = vrot.slane %v2185, 2
      %v2300 = vrot.slane %v2186, 2
      %v2301 = vsel %vm1534, %v2299, %v2300
      %v2302 = vrot.slane %v2187, 2
      %v2303 = vsel %vm1534, %v2300, %v2302
      %v2304 = vrot.slane %v2188, 2
      %v2305 = vrot.slane %v2189, 2
      %v2306 = vsel %vm1534, %v2304, %v2305
      %v2307 = vrot.slane %v2190, 2
      %v2308 = vsel %vm1534, %v2305, %v2307
      %v2309 = vrot.slane %v2191, 2
      %v2310 = vrot.slane %v2192, 2
      %v2311 = vsel %vm1534, %v2309, %v2310
      %v2312 = vrot.slane %v2193, 2
      %v2313 = vsel %vm1534, %v2310, %v2312
      %v2314 = vrot.slane %v2194, 2
      %v2315 = vrot.slane %v2195, 2
      %v2316 = vsel %vm1534, %v2314, %v2315
      %v2317 = vrot.slane %v2196, 2
      %v2318 = vsel %vm1534, %v2315, %v2317
      %v2319 = vrot.slane %v2197, 2
      %v2320 = vrot.slane %v2198, 2
      %v2321 = vsel %vm1534, %v2319, %v2320
      %v2322 = vrot.slane %v2199, 2
      %v2323 = vsel %vm1534, %v2320, %v2322
      %v2324 = vrot.slane %v2200, 2
      %v2325 = vrot.slane %v2201, 2
      %v2326 = vsel %vm1534, %v2324, %v2325
      %v2327 = vrot.slane %v2202, 2
      %v2328 = vsel %vm1534, %v2325, %v2327
      %v2329 = vrot.slane %v2203, 2
      %v2330 = vrot.slane %v2204, 2
      %v2331 = vsel %vm1534, %v2329, %v2330
      %v2332 = vrot.slane %v2205, 2
      %v2333 = vsel %vm1534, %v2330, %v2332
      %v2382 = vadd.f32 %v2073, %v2254
      %v2383 = vadd.f32 %v2074, %v2256
      %v2384 = vadd.f32 %v2075, %v2258
      %v2385 = vadd.f32 %v2076, %v2259
      %v2386 = vadd.f32 %v2077, %v2261
      %v2387 = vadd.f32 %v2078, %v2263
      %v2388 = vadd.f32 %v2079, %v2264
      %v2389 = vadd.f32 %v2080, %v2266
      %v2390 = vadd.f32 %v2081, %v2268
      %v2391 = vadd.f32 %v2082, %v2269
      %v2392 = vadd.f32 %v2083, %v2271
      %v2393 = vadd.f32 %v2084, %v2273
      %v2394 = vadd.f32 %v2085, %v2274
      %v2395 = vadd.f32 %v2086, %v2276
      %v2396 = vadd.f32 %v2087, %v2278
      %v2397 = vadd.f32 %v2088, %v2279
      %v2398 = vadd.f32 %v2089, %v2281
      %v2399 = vadd.f32 %v2090, %v2283
      %v2400 = vadd.f32 %v2091, %v2284
      %v2401 = vadd.f32 %v2092, %v2286
      %v2402 = vadd.f32 %v2093, %v2288
      %v2403 = vadd.f32 %v2094, %v2289
      %v2404 = vadd.f32 %v2095, %v2291
      %v2405 = vadd.f32 %v2096, %v2293
      %v2406 = vadd.f32 %v2097, %v2294
      %v2407 = vadd.f32 %v2098, %v2296
      %v2408 = vadd.f32 %v2099, %v2298
      %v2409 = vadd.f32 %v2100, %v2299
      %v2410 = vadd.f32 %v2101, %v2301
      %v2411 = vadd.f32 %v2102, %v2303
      %v2412 = vadd.f32 %v2103, %v2304
      %v2413 = vadd.f32 %v2104, %v2306
      %v2414 = vadd.f32 %v2105, %v2308
      %v2415 = vadd.f32 %v2106, %v2309
      %v2416 = vadd.f32 %v2107, %v2311
      %v2417 = vadd.f32 %v2108, %v2313
      %v2418 = vadd.f32 %v2109, %v2314
      %v2419 = vadd.f32 %v2110, %v2316
      %v2420 = vadd.f32 %v2111, %v2318
      %v2421 = vadd.f32 %v2112, %v2319
      %v2422 = vadd.f32 %v2113, %v2321
      %v2423 = vadd.f32 %v2114, %v2323
      %v2424 = vadd.f32 %v2115, %v2324
      %v2425 = vadd.f32 %v2116, %v2326
      %v2426 = vadd.f32 %v2117, %v2328
      %v2427 = vadd.f32 %v2118, %v2329
      %v2428 = vadd.f32 %v2119, %v2331
      %v2429 = vadd.f32 %v2120, %v2333
      %s2430 = scalar_lea.vmem [#allocation2], 32
      %v2431 = vld [vmem:[%s2430] sm:$0x8]
      %v2432 = vld [vmem:[%s2430 + $0x4] sm:$0xf]
      %v2433 = vld [vmem:[%s2430 + $0x8] sm:$0xf]
      %v2434 = vld [vmem:[%s2430 + $0x10] sm:$0x8]
      %v2435 = vld [vmem:[%s2430 + $0x14] sm:$0xf]
      %v2436 = vld [vmem:[%s2430 + $0x18] sm:$0xf]
      %v2437 = vld [vmem:[%s2430 + $0x20] sm:$0x8]
      %v2438 = vld [vmem:[%s2430 + $0x24] sm:$0xf]
      %v2439 = vld [vmem:[%s2430 + $0x28] sm:$0xf]
      %v2440 = vld [vmem:[%s2430 + $0x30] sm:$0x8]
      %v2441 = vld [vmem:[%s2430 + $0x34] sm:$0xf]
      %v2442 = vld [vmem:[%s2430 + $0x38] sm:$0xf]
      %v2443 = vld [vmem:[%s2430 + $0x40] sm:$0x8]
      %v2444 = vld [vmem:[%s2430 + $0x44] sm:$0xf]
      %v2445 = vld [vmem:[%s2430 + $0x48] sm:$0xf]
      %v2446 = vld [vmem:[%s2430 + $0x50] sm:$0x8]
      %v2447 = vld [vmem:[%s2430 + $0x54] sm:$0xf]
      %v2448 = vld [vmem:[%s2430 + $0x58] sm:$0xf]
      %v2449 = vld [vmem:[%s2430 + $0x60] sm:$0x8]
      %v2450 = vld [vmem:[%s2430 + $0x64] sm:$0xf]
      %v2451 = vld [vmem:[%s2430 + $0x68] sm:$0xf]
      %v2452 = vld [vmem:[%s2430 + $0x70] sm:$0x8]
      %v2453 = vld [vmem:[%s2430 + $0x74] sm:$0xf]
      %v2454 = vld [vmem:[%s2430 + $0x78] sm:$0xf]
      %v2455 = vld [vmem:[%s2430 + $0x80] sm:$0x8]
      %v2456 = vld [vmem:[%s2430 + $0x84] sm:$0xf]
      %v2457 = vld [vmem:[%s2430 + $0x88] sm:$0xf]
      %v2458 = vld [vmem:[%s2430 + $0x90] sm:$0x8]
      %v2459 = vld [vmem:[%s2430 + $0x94] sm:$0xf]
      %v2460 = vld [vmem:[%s2430 + $0x98] sm:$0xf]
      %v2461 = vld [vmem:[%s2430 + $0xa0] sm:$0x8]
      %v2462 = vld [vmem:[%s2430 + $0xa4] sm:$0xf]
      %v2463 = vld [vmem:[%s2430 + $0xa8] sm:$0xf]
      %v2464 = vld [vmem:[%s2430 + $0xb0] sm:$0x8]
      %v2465 = vld [vmem:[%s2430 + $0xb4] sm:$0xf]
      %v2466 = vld [vmem:[%s2430 + $0xb8] sm:$0xf]
      %v2467 = vld [vmem:[%s2430 + $0xc0] sm:$0x8]
      %v2468 = vld [vmem:[%s2430 + $0xc4] sm:$0xf]
      %v2469 = vld [vmem:[%s2430 + $0xc8] sm:$0xf]
      %v2470 = vld [vmem:[%s2430 + $0xd0] sm:$0x8]
      %v2471 = vld [vmem:[%s2430 + $0xd4] sm:$0xf]
      %v2472 = vld [vmem:[%s2430 + $0xd8] sm:$0xf]
      %v2473 = vld [vmem:[%s2430 + $0xe0] sm:$0x8]
      %v2474 = vld [vmem:[%s2430 + $0xe4] sm:$0xf]
      %v2475 = vld [vmem:[%s2430 + $0xe8] sm:$0xf]
      %v2476 = vld [vmem:[%s2430 + $0xf0] sm:$0x8]
      %v2477 = vld [vmem:[%s2430 + $0xf4] sm:$0xf]
      %v2478 = vld [vmem:[%s2430 + $0xf8] sm:$0xf]
      %v2479 = vunpack.c.l.bf16 %v2431
      %v2480 = vunpack.c.l.bf16 %v2432
      %v2481 = vunpack.c.l.bf16 %v2433
      %v2482 = vunpack.c.l.bf16 %v2434
      %v2483 = vunpack.c.l.bf16 %v2435
      %v2484 = vunpack.c.l.bf16 %v2436
      %v2485 = vunpack.c.l.bf16 %v2437
      %v2486 = vunpack.c.l.bf16 %v2438
      %v2487 = vunpack.c.l.bf16 %v2439
      %v2488 = vunpack.c.l.bf16 %v2440
      %v2489 = vunpack.c.l.bf16 %v2441
      %v2490 = vunpack.c.l.bf16 %v2442
      %v2491 = vunpack.c.l.bf16 %v2443
      %v2492 = vunpack.c.l.bf16 %v2444
      %v2493 = vunpack.c.l.bf16 %v2445
      %v2494 = vunpack.c.l.bf16 %v2446
      %v2495 = vunpack.c.l.bf16 %v2447
      %v2496 = vunpack.c.l.bf16 %v2448
      %v2497 = vunpack.c.l.bf16 %v2449
      %v2498 = vunpack.c.l.bf16 %v2450
      %v2499 = vunpack.c.l.bf16 %v2451
      %v2500 = vunpack.c.l.bf16 %v2452
      %v2501 = vunpack.c.l.bf16 %v2453
      %v2502 = vunpack.c.l.bf16 %v2454
      %v2503 = vunpack.c.l.bf16 %v2455
      %v2504 = vunpack.c.l.bf16 %v2456
      %v2505 = vunpack.c.l.bf16 %v2457
      %v2506 = vunpack.c.l.bf16 %v2458
      %v2507 = vunpack.c.l.bf16 %v2459
      %v2508 = vunpack.c.l.bf16 %v2460
      %v2509 = vunpack.c.l.bf16 %v2461
      %v2510 = vunpack.c.l.bf16 %v2462
      %v2511 = vunpack.c.l.bf16 %v2463
      %v2512 = vunpack.c.l.bf16 %v2464
      %v2513 = vunpack.c.l.bf16 %v2465
      %v2514 = vunpack.c.l.bf16 %v2466
      %v2515 = vunpack.c.l.bf16 %v2467
      %v2516 = vunpack.c.l.bf16 %v2468
      %v2517 = vunpack.c.l.bf16 %v2469
      %v2518 = vunpack.c.l.bf16 %v2470
      %v2519 = vunpack.c.l.bf16 %v2471
      %v2520 = vunpack.c.l.bf16 %v2472
      %v2521 = vunpack.c.l.bf16 %v2473
      %v2522 = vunpack.c.l.bf16 %v2474
      %v2523 = vunpack.c.l.bf16 %v2475
      %v2524 = vunpack.c.l.bf16 %v2476
      %v2525 = vunpack.c.l.bf16 %v2477
      %v2526 = vunpack.c.l.bf16 %v2478
      %v2527 = vld [vmem:[%s3 + $0x6] sm:$0x1]
      %v2528 = vlaneseq
      %v2529 = vshrl.u32 %v2528, 7
      %v2530 = vsub.s32 0, %v2529
      %v2531 = vrot.slane %v2527, %v2530
      %v2532 = vmul.f32 %v2479, %v2531
      %v2533 = vmul.f32 %v2480, %v2531
      %v2534 = vmul.f32 %v2481, %v2531
      %v2535 = vmul.f32 %v2482, %v2531
      %v2536 = vmul.f32 %v2483, %v2531
      %v2537 = vmul.f32 %v2484, %v2531
      %v2538 = vmul.f32 %v2485, %v2531
      %v2539 = vmul.f32 %v2486, %v2531
      %v2540 = vmul.f32 %v2487, %v2531
      %v2541 = vmul.f32 %v2488, %v2531
      %v2542 = vmul.f32 %v2489, %v2531
      %v2543 = vmul.f32 %v2490, %v2531
      %v2544 = vmul.f32 %v2491, %v2531
      %v2545 = vmul.f32 %v2492, %v2531
      %v2546 = vmul.f32 %v2493, %v2531
      %v2547 = vmul.f32 %v2494, %v2531
      %v2548 = vmul.f32 %v2495, %v2531
      %v2549 = vmul.f32 %v2496, %v2531
      %v2550 = vmul.f32 %v2497, %v2531
      %v2551 = vmul.f32 %v2498, %v2531
      %v2552 = vmul.f32 %v2499, %v2531
      %v2553 = vmul.f32 %v2500, %v2531
      %v2554 = vmul.f32 %v2501, %v2531
      %v2555 = vmul.f32 %v2502, %v2531
      %v2556 = vmul.f32 %v2503, %v2531
      %v2557 = vmul.f32 %v2504, %v2531
      %v2558 = vmul.f32 %v2505, %v2531
      %v2559 = vmul.f32 %v2506, %v2531
      %v2560 = vmul.f32 %v2507, %v2531
      %v2561 = vmul.f32 %v2508, %v2531
      %v2562 = vmul.f32 %v2509, %v2531
      %v2563 = vmul.f32 %v2510, %v2531
      %v2564 = vmul.f32 %v2511, %v2531
      %v2565 = vmul.f32 %v2512, %v2531
      %v2566 = vmul.f32 %v2513, %v2531
      %v2567 = vmul.f32 %v2514, %v2531
      %v2568 = vmul.f32 %v2515, %v2531
      %v2569 = vmul.f32 %v2516, %v2531
      %v2570 = vmul.f32 %v2517, %v2531
      %v2571 = vmul.f32 %v2518, %v2531
      %v2572 = vmul.f32 %v2519, %v2531
      %v2573 = vmul.f32 %v2520, %v2531
      %v2574 = vmul.f32 %v2521, %v2531
      %v2575 = vmul.f32 %v2522, %v2531
      %v2576 = vmul.f32 %v2523, %v2531
      %v2577 = vmul.f32 %v2524, %v2531
      %v2578 = vmul.f32 %v2525, %v2531
      %v2579 = vmul.f32 %v2526, %v2531
      %v2580 = vadd.f32 %v2382, %v2532
      %v2581 = vadd.f32 %v2383, %v2533
      %v2582 = vadd.f32 %v2384, %v2534
      %v2583 = vadd.f32 %v2385, %v2535
      %v2584 = vadd.f32 %v2386, %v2536
      %v2585 = vadd.f32 %v2387, %v2537
      %v2586 = vadd.f32 %v2388, %v2538
      %v2587 = vadd.f32 %v2389, %v2539
      %v2588 = vadd.f32 %v2390, %v2540
      %v2589 = vadd.f32 %v2391, %v2541
      %v2590 = vadd.f32 %v2392, %v2542
      %v2591 = vadd.f32 %v2393, %v2543
      %v2592 = vadd.f32 %v2394, %v2544
      %v2593 = vadd.f32 %v2395, %v2545
      %v2594 = vadd.f32 %v2396, %v2546
      %v2595 = vadd.f32 %v2397, %v2547
      %v2596 = vadd.f32 %v2398, %v2548
      %v2597 = vadd.f32 %v2399, %v2549
      %v2598 = vadd.f32 %v2400, %v2550
      %v2599 = vadd.f32 %v2401, %v2551
      %v2600 = vadd.f32 %v2402, %v2552
      %v2601 = vadd.f32 %v2403, %v2553
      %v2602 = vadd.f32 %v2404, %v2554
      %v2603 = vadd.f32 %v2405, %v2555
      %v2604 = vadd.f32 %v2406, %v2556
      %v2605 = vadd.f32 %v2407, %v2557
      %v2606 = vadd.f32 %v2408, %v2558
      %v2607 = vadd.f32 %v2409, %v2559
      %v2608 = vadd.f32 %v2410, %v2560
      %v2609 = vadd.f32 %v2411, %v2561
      %v2610 = vadd.f32 %v2412, %v2562
      %v2611 = vadd.f32 %v2413, %v2563
      %v2612 = vadd.f32 %v2414, %v2564
      %v2613 = vadd.f32 %v2415, %v2565
      %v2614 = vadd.f32 %v2416, %v2566
      %v2615 = vadd.f32 %v2417, %v2567
      %v2616 = vadd.f32 %v2418, %v2568
      %v2617 = vadd.f32 %v2419, %v2569
      %v2618 = vadd.f32 %v2420, %v2570
      %v2619 = vadd.f32 %v2421, %v2571
      %v2620 = vadd.f32 %v2422, %v2572
      %v2621 = vadd.f32 %v2423, %v2573
      %v2622 = vadd.f32 %v2424, %v2574
      %v2623 = vadd.f32 %v2425, %v2575
      %v2624 = vadd.f32 %v2426, %v2576
      %v2625 = vadd.f32 %v2427, %v2577
      %v2626 = vadd.f32 %v2428, %v2578
      %v2627 = vadd.f32 %v2429, %v2579
      %v2628 = vld [vmem:[%s3 + $0x7] sm:$0x1]
      %v2629 = vlaneseq
      %v2630 = vshrl.u32 %v2629, 7
      %v2631 = vsub.s32 0, %v2630
      %v2632 = vrot.slane %v2628, %v2631
      %v2633 = vmul.f32 %v2480, %v2632
      %v2634 = vmul.f32 %v2481, %v2632
      %v2635 = vmul.f32 %v2483, %v2632
      %v2636 = vmul.f32 %v2484, %v2632
      %v2637 = vmul.f32 %v2486, %v2632
      %v2638 = vmul.f32 %v2487, %v2632
      %v2639 = vmul.f32 %v2489, %v2632
      %v2640 = vmul.f32 %v2490, %v2632
      %v2641 = vmul.f32 %v2492, %v2632
      %v2642 = vmul.f32 %v2493, %v2632
      %v2643 = vmul.f32 %v2495, %v2632
      %v2644 = vmul.f32 %v2496, %v2632
      %v2645 = vmul.f32 %v2498, %v2632
      %v2646 = vmul.f32 %v2499, %v2632
      %v2647 = vmul.f32 %v2501, %v2632
      %v2648 = vmul.f32 %v2502, %v2632
      %v2649 = vmul.f32 %v2504, %v2632
      %v2650 = vmul.f32 %v2505, %v2632
      %v2651 = vmul.f32 %v2507, %v2632
      %v2652 = vmul.f32 %v2508, %v2632
      %v2653 = vmul.f32 %v2510, %v2632
      %v2654 = vmul.f32 %v2511, %v2632
      %v2655 = vmul.f32 %v2513, %v2632
      %v2656 = vmul.f32 %v2514, %v2632
      %v2657 = vmul.f32 %v2516, %v2632
      %v2658 = vmul.f32 %v2517, %v2632
      %v2659 = vmul.f32 %v2519, %v2632
      %v2660 = vmul.f32 %v2520, %v2632
      %v2661 = vmul.f32 %v2522, %v2632
      %v2662 = vmul.f32 %v2523, %v2632
      %v2663 = vmul.f32 %v2525, %v2632
      %v2664 = vmul.f32 %v2526, %v2632
      %v2697 = vrot.slane %v2633, 1
      %v2698 = vrot.slane %v2634, 1
      %v2699 = vsel %vm1256, %v2697, %v2698
      %v2700 = vrot.slane %v2635, 1
      %v2701 = vrot.slane %v2636, 1
      %v2702 = vsel %vm1256, %v2700, %v2701
      %v2703 = vrot.slane %v2637, 1
      %v2704 = vrot.slane %v2638, 1
      %v2705 = vsel %vm1256, %v2703, %v2704
      %v2706 = vrot.slane %v2639, 1
      %v2707 = vrot.slane %v2640, 1
      %v2708 = vsel %vm1256, %v2706, %v2707
      %v2709 = vrot.slane %v2641, 1
      %v2710 = vrot.slane %v2642, 1
      %v2711 = vsel %vm1256, %v2709, %v2710
      %v2712 = vrot.slane %v2643, 1
      %v2713 = vrot.slane %v2644, 1
      %v2714 = vsel %vm1256, %v2712, %v2713
      %v2715 = vrot.slane %v2645, 1
      %v2716 = vrot.slane %v2646, 1
      %v2717 = vsel %vm1256, %v2715, %v2716
      %v2718 = vrot.slane %v2647, 1
      %v2719 = vrot.slane %v2648, 1
      %v2720 = vsel %vm1256, %v2718, %v2719
      %v2721 = vrot.slane %v2649, 1
      %v2722 = vrot.slane %v2650, 1
      %v2723 = vsel %vm1256, %v2721, %v2722
      %v2724 = vrot.slane %v2651, 1
      %v2725 = vrot.slane %v2652, 1
      %v2726 = vsel %vm1256, %v2724, %v2725
      %v2727 = vrot.slane %v2653, 1
      %v2728 = vrot.slane %v2654, 1
      %v2729 = vsel %vm1256, %v2727, %v2728
      %v2730 = vrot.slane %v2655, 1
      %v2731 = vrot.slane %v2656, 1
      %v2732 = vsel %vm1256, %v2730, %v2731
      %v2733 = vrot.slane %v2657, 1
      %v2734 = vrot.slane %v2658, 1
      %v2735 = vsel %vm1256, %v2733, %v2734
      %v2736 = vrot.slane %v2659, 1
      %v2737 = vrot.slane %v2660, 1
      %v2738 = vsel %vm1256, %v2736, %v2737
      %v2739 = vrot.slane %v2661, 1
      %v2740 = vrot.slane %v2662, 1
      %v2741 = vsel %vm1256, %v2739, %v2740
      %v2742 = vrot.slane %v2663, 1
      %v2743 = vrot.slane %v2664, 1
      %v2744 = vsel %vm1256, %v2742, %v2743
      %v2793 = vadd.f32 %v2580, %v2697
      %v2794 = vadd.f32 %v2581, %v2699
      %v2795 = vadd.f32 %v2582, %v2698
      %v2796 = vadd.f32 %v2583, %v2700
      %v2797 = vadd.f32 %v2584, %v2702
      %v2798 = vadd.f32 %v2585, %v2701
      %v2799 = vadd.f32 %v2586, %v2703
      %v2800 = vadd.f32 %v2587, %v2705
      %v2801 = vadd.f32 %v2588, %v2704
      %v2802 = vadd.f32 %v2589, %v2706
      %v2803 = vadd.f32 %v2590, %v2708
      %v2804 = vadd.f32 %v2591, %v2707
      %v2805 = vadd.f32 %v2592, %v2709
      %v2806 = vadd.f32 %v2593, %v2711
      %v2807 = vadd.f32 %v2594, %v2710
      %v2808 = vadd.f32 %v2595, %v2712
      %v2809 = vadd.f32 %v2596, %v2714
      %v2810 = vadd.f32 %v2597, %v2713
      %v2811 = vadd.f32 %v2598, %v2715
      %v2812 = vadd.f32 %v2599, %v2717
      %v2813 = vadd.f32 %v2600, %v2716
      %v2814 = vadd.f32 %v2601, %v2718
      %v2815 = vadd.f32 %v2602, %v2720
      %v2816 = vadd.f32 %v2603, %v2719
      %v2817 = vadd.f32 %v2604, %v2721
      %v2818 = vadd.f32 %v2605, %v2723
      %v2819 = vadd.f32 %v2606, %v2722
      %v2820 = vadd.f32 %v2607, %v2724
      %v2821 = vadd.f32 %v2608, %v2726
      %v2822 = vadd.f32 %v2609, %v2725
      %v2823 = vadd.f32 %v2610, %v2727
      %v2824 = vadd.f32 %v2611, %v2729
      %v2825 = vadd.f32 %v2612, %v2728
      %v2826 = vadd.f32 %v2613, %v2730
      %v2827 = vadd.f32 %v2614, %v2732
      %v2828 = vadd.f32 %v2615, %v2731
      %v2829 = vadd.f32 %v2616, %v2733
      %v2830 = vadd.f32 %v2617, %v2735
      %v2831 = vadd.f32 %v2618, %v2734
      %v2832 = vadd.f32 %v2619, %v2736
      %v2833 = vadd.f32 %v2620, %v2738
      %v2834 = vadd.f32 %v2621, %v2737
      %v2835 = vadd.f32 %v2622, %v2739
      %v2836 = vadd.f32 %v2623, %v2741
      %v2837 = vadd.f32 %v2624, %v2740
      %v2838 = vadd.f32 %v2625, %v2742
      %v2839 = vadd.f32 %v2626, %v2744
      %v2840 = vadd.f32 %v2627, %v2743
      %v2841 = vld [vmem:[%s2430 + $0xc] sm:$0x1]
      %v2842 = vld [vmem:[%s2430 + $0x1c] sm:$0x1]
      %v2843 = vld [vmem:[%s2430 + $0x2c] sm:$0x1]
      %v2844 = vld [vmem:[%s2430 + $0x3c] sm:$0x1]
      %v2845 = vld [vmem:[%s2430 + $0x4c] sm:$0x1]
      %v2846 = vld [vmem:[%s2430 + $0x5c] sm:$0x1]
      %v2847 = vld [vmem:[%s2430 + $0x6c] sm:$0x1]
      %v2848 = vld [vmem:[%s2430 + $0x7c] sm:$0x1]
      %v2849 = vld [vmem:[%s2430 + $0x8c] sm:$0x1]
      %v2850 = vld [vmem:[%s2430 + $0x9c] sm:$0x1]
      %v2851 = vld [vmem:[%s2430 + $0xac] sm:$0x1]
      %v2852 = vld [vmem:[%s2430 + $0xbc] sm:$0x1]
      %v2853 = vld [vmem:[%s2430 + $0xcc] sm:$0x1]
      %v2854 = vld [vmem:[%s2430 + $0xdc] sm:$0x1]
      %v2855 = vld [vmem:[%s2430 + $0xec] sm:$0x1]
      %v2856 = vld [vmem:[%s2430 + $0xfc] sm:$0x1]
      %v2857 = vunpack.c.l.bf16 %v2841
      %v2858 = vunpack.c.l.bf16 %v2842
      %v2859 = vunpack.c.l.bf16 %v2843
      %v2860 = vunpack.c.l.bf16 %v2844
      %v2861 = vunpack.c.l.bf16 %v2845
      %v2862 = vunpack.c.l.bf16 %v2846
      %v2863 = vunpack.c.l.bf16 %v2847
      %v2864 = vunpack.c.l.bf16 %v2848
      %v2865 = vunpack.c.l.bf16 %v2849
      %v2866 = vunpack.c.l.bf16 %v2850
      %v2867 = vunpack.c.l.bf16 %v2851
      %v2868 = vunpack.c.l.bf16 %v2852
      %v2869 = vunpack.c.l.bf16 %v2853
      %v2870 = vunpack.c.l.bf16 %v2854
      %v2871 = vunpack.c.l.bf16 %v2855
      %v2872 = vunpack.c.l.bf16 %v2856
      %v2873 = vld [vmem:[%s3 + $0x8] sm:$0x1]
      %v2874 = vlaneseq
      %v2875 = vshrl.u32 %v2874, 7
      %v2876 = vsub.s32 0, %v2875
      %v2877 = vrot.slane %v2873, %v2876
      %v2878 = vmul.f32 %v2480, %v2877
      %v2879 = vmul.f32 %v2481, %v2877
      %v2880 = vmul.f32 %v2857, %v2877
      %v2881 = vmul.f32 %v2483, %v2877
      %v2882 = vmul.f32 %v2484, %v2877
      %v2883 = vmul.f32 %v2858, %v2877
      %v2884 = vmul.f32 %v2486, %v2877
      %v2885 = vmul.f32 %v2487, %v2877
      %v2886 = vmul.f32 %v2859, %v2877
      %v2887 = vmul.f32 %v2489, %v2877
      %v2888 = vmul.f32 %v2490, %v2877
      %v2889 = vmul.f32 %v2860, %v2877
      %v2890 = vmul.f32 %v2492, %v2877
      %v2891 = vmul.f32 %v2493, %v2877
      %v2892 = vmul.f32 %v2861, %v2877
      %v2893 = vmul.f32 %v2495, %v2877
      %v2894 = vmul.f32 %v2496, %v2877
      %v2895 = vmul.f32 %v2862, %v2877
      %v2896 = vmul.f32 %v2498, %v2877
      %v2897 = vmul.f32 %v2499, %v2877
      %v2898 = vmul.f32 %v2863, %v2877
      %v2899 = vmul.f32 %v2501, %v2877
      %v2900 = vmul.f32 %v2502, %v2877
      %v2901 = vmul.f32 %v2864, %v2877
      %v2902 = vmul.f32 %v2504, %v2877
      %v2903 = vmul.f32 %v2505, %v2877
      %v2904 = vmul.f32 %v2865, %v2877
      %v2905 = vmul.f32 %v2507, %v2877
      %v2906 = vmul.f32 %v2508, %v2877
      %v2907 = vmul.f32 %v2866, %v2877
      %v2908 = vmul.f32 %v2510, %v2877
      %v2909 = vmul.f32 %v2511, %v2877
      %v2910 = vmul.f32 %v2867, %v2877
      %v2911 = vmul.f32 %v2513, %v2877
      %v2912 = vmul.f32 %v2514, %v2877
      %v2913 = vmul.f32 %v2868, %v2877
      %v2914 = vmul.f32 %v2516, %v2877
      %v2915 = vmul.f32 %v2517, %v2877
      %v2916 = vmul.f32 %v2869, %v2877
      %v2917 = vmul.f32 %v2519, %v2877
      %v2918 = vmul.f32 %v2520, %v2877
      %v2919 = vmul.f32 %v2870, %v2877
      %v2920 = vmul.f32 %v2522, %v2877
      %v2921 = vmul.f32 %v2523, %v2877
      %v2922 = vmul.f32 %v2871, %v2877
      %v2923 = vmul.f32 %v2525, %v2877
      %v2924 = vmul.f32 %v2526, %v2877
      %v2925 = vmul.f32 %v2872, %v2877
      %v2974 = vrot.slane %v2878, 2
      %v2975 = vrot.slane %v2879, 2
      %v2976 = vsel %vm1534, %v2974, %v2975
      %v2977 = vrot.slane %v2880, 2
      %v2978 = vsel %vm1534, %v2975, %v2977
      %v2979 = vrot.slane %v2881, 2
      %v2980 = vrot.slane %v2882, 2
      %v2981 = vsel %vm1534, %v2979, %v2980
      %v2982 = vrot.slane %v2883, 2
      %v2983 = vsel %vm1534, %v2980, %v2982
      %v2984 = vrot.slane %v2884, 2
      %v2985 = vrot.slane %v2885, 2
      %v2986 = vsel %vm1534, %v2984, %v2985
      %v2987 = vrot.slane %v2886, 2
      %v2988 = vsel %vm1534, %v2985, %v2987
      %v2989 = vrot.slane %v2887, 2
      %v2990 = vrot.slane %v2888, 2
      %v2991 = vsel %vm1534, %v2989, %v2990
      %v2992 = vrot.slane %v2889, 2
      %v2993 = vsel %vm1534, %v2990, %v2992
      %v2994 = vrot.slane %v2890, 2
      %v2995 = vrot.slane %v2891, 2
      %v2996 = vsel %vm1534, %v2994, %v2995
      %v2997 = vrot.slane %v2892, 2
      %v2998 = vsel %vm1534, %v2995, %v2997
      %v2999 = vrot.slane %v2893, 2
      %v3000 = vrot.slane %v2894, 2
      %v3001 = vsel %vm1534, %v2999, %v3000
      %v3002 = vrot.slane %v2895, 2
      %v3003 = vsel %vm1534, %v3000, %v3002
      %v3004 = vrot.slane %v2896, 2
      %v3005 = vrot.slane %v2897, 2
      %v3006 = vsel %vm1534, %v3004, %v3005
      %v3007 = vrot.slane %v2898, 2
      %v3008 = vsel %vm1534, %v3005, %v3007
      %v3009 = vrot.slane %v2899, 2
      %v3010 = vrot.slane %v2900, 2
      %v3011 = vsel %vm1534, %v3009, %v3010
      %v3012 = vrot.slane %v2901, 2
      %v3013 = vsel %vm1534, %v3010, %v3012
      %v3014 = vrot.slane %v2902, 2
      %v3015 = vrot.slane %v2903, 2
      %v3016 = vsel %vm1534, %v3014, %v3015
      %v3017 = vrot.slane %v2904, 2
      %v3018 = vsel %vm1534, %v3015, %v3017
      %v3019 = vrot.slane %v2905, 2
      %v3020 = vrot.slane %v2906, 2
      %v3021 = vsel %vm1534, %v3019, %v3020
      %v3022 = vrot.slane %v2907, 2
      %v3023 = vsel %vm1534, %v3020, %v3022
      %v3024 = vrot.slane %v2908, 2
      %v3025 = vrot.slane %v2909, 2
      %v3026 = vsel %vm1534, %v3024, %v3025
      %v3027 = vrot.slane %v2910, 2
      %v3028 = vsel %vm1534, %v3025, %v3027
      %v3029 = vrot.slane %v2911, 2
      %v3030 = vrot.slane %v2912, 2
      %v3031 = vsel %vm1534, %v3029, %v3030
      %v3032 = vrot.slane %v2913, 2
      %v3033 = vsel %vm1534, %v3030, %v3032
      %v3034 = vrot.slane %v2914, 2
      %v3035 = vrot.slane %v2915, 2
      %v3036 = vsel %vm1534, %v3034, %v3035
      %v3037 = vrot.slane %v2916, 2
      %v3038 = vsel %vm1534, %v3035, %v3037
      %v3039 = vrot.slane %v2917, 2
      %v3040 = vrot.slane %v2918, 2
      %v3041 = vsel %vm1534, %v3039, %v3040
      %v3042 = vrot.slane %v2919, 2
      %v3043 = vsel %vm1534, %v3040, %v3042
      %v3044 = vrot.slane %v2920, 2
      %v3045 = vrot.slane %v2921, 2
      %v3046 = vsel %vm1534, %v3044, %v3045
      %v3047 = vrot.slane %v2922, 2
      %v3048 = vsel %vm1534, %v3045, %v3047
      %v3049 = vrot.slane %v2923, 2
      %v3050 = vrot.slane %v2924, 2
      %v3051 = vsel %vm1534, %v3049, %v3050
      %v3052 = vrot.slane %v2925, 2
      %v3053 = vsel %vm1534, %v3050, %v3052
      %v3102 = vadd.f32 %v2793, %v2974
      %v3103 = vadd.f32 %v2794, %v2976
      %v3104 = vadd.f32 %v2795, %v2978
      %v3105 = vadd.f32 %v2796, %v2979
      %v3106 = vadd.f32 %v2797, %v2981
      %v3107 = vadd.f32 %v2798, %v2983
      %v3108 = vadd.f32 %v2799, %v2984
      %v3109 = vadd.f32 %v2800, %v2986
      %v3110 = vadd.f32 %v2801, %v2988
      %v3111 = vadd.f32 %v2802, %v2989
      %v3112 = vadd.f32 %v2803, %v2991
      %v3113 = vadd.f32 %v2804, %v2993
      %v3114 = vadd.f32 %v2805, %v2994
      %v3115 = vadd.f32 %v2806, %v2996
      %v3116 = vadd.f32 %v2807, %v2998
      %v3117 = vadd.f32 %v2808, %v2999
      %v3118 = vadd.f32 %v2809, %v3001
      %v3119 = vadd.f32 %v2810, %v3003
      %v3120 = vadd.f32 %v2811, %v3004
      %v3121 = vadd.f32 %v2812, %v3006
      %v3122 = vadd.f32 %v2813, %v3008
      %v3123 = vadd.f32 %v2814, %v3009
      %v3124 = vadd.f32 %v2815, %v3011
      %v3125 = vadd.f32 %v2816, %v3013
      %v3126 = vadd.f32 %v2817, %v3014
      %v3127 = vadd.f32 %v2818, %v3016
      %v3128 = vadd.f32 %v2819, %v3018
      %v3129 = vadd.f32 %v2820, %v3019
      %v3130 = vadd.f32 %v2821, %v3021
      %v3131 = vadd.f32 %v2822, %v3023
      %v3132 = vadd.f32 %v2823, %v3024
      %v3133 = vadd.f32 %v2824, %v3026
      %v3134 = vadd.f32 %v2825, %v3028
      %v3135 = vadd.f32 %v2826, %v3029
      %v3136 = vadd.f32 %v2827, %v3031
      %v3137 = vadd.f32 %v2828, %v3033
      %v3138 = vadd.f32 %v2829, %v3034
      %v3139 = vadd.f32 %v2830, %v3036
      %v3140 = vadd.f32 %v2831, %v3038
      %v3141 = vadd.f32 %v2832, %v3039
      %v3142 = vadd.f32 %v2833, %v3041
      %v3143 = vadd.f32 %v2834, %v3043
      %v3144 = vadd.f32 %v2835, %v3044
      %v3145 = vadd.f32 %v2836, %v3046
      %v3146 = vadd.f32 %v2837, %v3048
      %v3147 = vadd.f32 %v2838, %v3049
      %v3148 = vadd.f32 %v2839, %v3051
      %v3149 = vadd.f32 %v2840, %v3053
      %v3150 = vld [vmem:[%s4] sm:$0x1]
      %v3152 = vlaneseq
      %v3153 = vshrl.u32 %v3152, 7
      %v3154 = vsub.s32 0, %v3153
      %v3155 = vrot.slane %v3150, %v3154
      %v3157 = vadd.f32 %v3102, %v3155
      %v3158 = vadd.f32 %v3103, %v3155
      %v3159 = vadd.f32 %v3104, %v3155
      %v3160 = vadd.f32 %v3105, %v3155
      %v3161 = vadd.f32 %v3106, %v3155
      %v3162 = vadd.f32 %v3107, %v3155
      %v3163 = vadd.f32 %v3108, %v3155
      %v3164 = vadd.f32 %v3109, %v3155
      %v3165 = vadd.f32 %v3110, %v3155
      %v3166 = vadd.f32 %v3111, %v3155
      %v3167 = vadd.f32 %v3112, %v3155
      %v3168 = vadd.f32 %v3113, %v3155
      %v3169 = vadd.f32 %v3114, %v3155
      %v3170 = vadd.f32 %v3115, %v3155
      %v3171 = vadd.f32 %v3116, %v3155
      %v3172 = vadd.f32 %v3117, %v3155
      %v3173 = vadd.f32 %v3118, %v3155
      %v3174 = vadd.f32 %v3119, %v3155
      %v3175 = vadd.f32 %v3120, %v3155
      %v3176 = vadd.f32 %v3121, %v3155
      %v3177 = vadd.f32 %v3122, %v3155
      %v3178 = vadd.f32 %v3123, %v3155
      %v3179 = vadd.f32 %v3124, %v3155
      %v3180 = vadd.f32 %v3125, %v3155
      %v3181 = vadd.f32 %v3126, %v3155
      %v3182 = vadd.f32 %v3127, %v3155
      %v3183 = vadd.f32 %v3128, %v3155
      %v3184 = vadd.f32 %v3129, %v3155
      %v3185 = vadd.f32 %v3130, %v3155
      %v3186 = vadd.f32 %v3131, %v3155
      %v3187 = vadd.f32 %v3132, %v3155
      %v3188 = vadd.f32 %v3133, %v3155
      %v3189 = vadd.f32 %v3134, %v3155
      %v3190 = vadd.f32 %v3135, %v3155
      %v3191 = vadd.f32 %v3136, %v3155
      %v3192 = vadd.f32 %v3137, %v3155
      %v3193 = vadd.f32 %v3138, %v3155
      %v3194 = vadd.f32 %v3139, %v3155
      %v3195 = vadd.f32 %v3140, %v3155
      %v3196 = vadd.f32 %v3141, %v3155
      %v3197 = vadd.f32 %v3142, %v3155
      %v3198 = vadd.f32 %v3143, %v3155
      %v3199 = vadd.f32 %v3144, %v3155
      %v3200 = vadd.f32 %v3145, %v3155
      %v3201 = vadd.f32 %v3146, %v3155
      %v3202 = vadd.f32 %v3147, %v3155
      %v3203 = vadd.f32 %v3148, %v3155
      %v3204 = vadd.f32 %v3149, %v3155
      %vm3253 = vcmask 1040384
      %v3254 = vrot.slane %v3157, 7
      %v3255 = vrot.slane %v3158, 7
      %v3256 = vsel %vm3253, %v3254, %v3255
      %v3257 = vrot.slane %v3159, 7
      %v3258 = vsel %vm3253, %v3255, %v3257
      %v3259 = vrot.slane %v3160, 7
      %v3260 = vrot.slane %v3161, 7
      %v3261 = vsel %vm3253, %v3259, %v3260
      %v3262 = vrot.slane %v3162, 7
      %v3263 = vsel %vm3253, %v3260, %v3262
      %v3264 = vrot.slane %v3163, 7
      %v3265 = vrot.slane %v3164, 7
      %v3266 = vsel %vm3253, %v3264, %v3265
      %v3267 = vrot.slane %v3165, 7
      %v3268 = vsel %vm3253, %v3265, %v3267
      %v3269 = vrot.slane %v3166, 7
      %v3270 = vrot.slane %v3167, 7
      %v3271 = vsel %vm3253, %v3269, %v3270
      %v3272 = vrot.slane %v3168, 7
      %v3273 = vsel %vm3253, %v3270, %v3272
      %v3274 = vrot.slane %v3169, 7
      %v3275 = vrot.slane %v3170, 7
      %v3276 = vsel %vm3253, %v3274, %v3275
      %v3277 = vrot.slane %v3171, 7
      %v3278 = vsel %vm3253, %v3275, %v3277
      %v3279 = vrot.slane %v3172, 7
      %v3280 = vrot.slane %v3173, 7
      %v3281 = vsel %vm3253, %v3279, %v3280
      %v3282 = vrot.slane %v3174, 7
      %v3283 = vsel %vm3253, %v3280, %v3282
      %v3284 = vrot.slane %v3175, 7
      %v3285 = vrot.slane %v3176, 7
      %v3286 = vsel %vm3253, %v3284, %v3285
      %v3287 = vrot.slane %v3177, 7
      %v3288 = vsel %vm3253, %v3285, %v3287
      %v3289 = vrot.slane %v3178, 7
      %v3290 = vrot.slane %v3179, 7
      %v3291 = vsel %vm3253, %v3289, %v3290
      %v3292 = vrot.slane %v3180, 7
      %v3293 = vsel %vm3253, %v3290, %v3292
      %v3294 = vrot.slane %v3181, 7
      %v3295 = vrot.slane %v3182, 7
      %v3296 = vsel %vm3253, %v3294, %v3295
      %v3297 = vrot.slane %v3183, 7
      %v3298 = vsel %vm3253, %v3295, %v3297
      %v3299 = vrot.slane %v3184, 7
      %v3300 = vrot.slane %v3185, 7
      %v3301 = vsel %vm3253, %v3299, %v3300
      %v3302 = vrot.slane %v3186, 7
      %v3303 = vsel %vm3253, %v3300, %v3302
      %v3304 = vrot.slane %v3187, 7
      %v3305 = vrot.slane %v3188, 7
      %v3306 = vsel %vm3253, %v3304, %v3305
      %v3307 = vrot.slane %v3189, 7
      %v3308 = vsel %vm3253, %v3305, %v3307
      %v3309 = vrot.slane %v3190, 7
      %v3310 = vrot.slane %v3191, 7
      %v3311 = vsel %vm3253, %v3309, %v3310
      %v3312 = vrot.slane %v3192, 7
      %v3313 = vsel %vm3253, %v3310, %v3312
      %v3314 = vrot.slane %v3193, 7
      %v3315 = vrot.slane %v3194, 7
      %v3316 = vsel %vm3253, %v3314, %v3315
      %v3317 = vrot.slane %v3195, 7
      %v3318 = vsel %vm3253, %v3315, %v3317
      %v3319 = vrot.slane %v3196, 7
      %v3320 = vrot.slane %v3197, 7
      %v3321 = vsel %vm3253, %v3319, %v3320
      %v3322 = vrot.slane %v3198, 7
      %v3323 = vsel %vm3253, %v3320, %v3322
      %v3324 = vrot.slane %v3199, 7
      %v3325 = vrot.slane %v3200, 7
      %v3326 = vsel %vm3253, %v3324, %v3325
      %v3327 = vrot.slane %v3201, 7
      %v3328 = vsel %vm3253, %v3325, %v3327
      %v3329 = vrot.slane %v3202, 7
      %v3330 = vrot.slane %v3203, 7
      %v3331 = vsel %vm3253, %v3329, %v3330
      %v3332 = vrot.slane %v3204, 7
      %v3333 = vsel %vm3253, %v3330, %v3332
      %v3366 = vpack.c.bf16 %v3258, %v3256
      %v3367 = vpack.c.bf16 %v3263, %v3261
      %v3368 = vpack.c.bf16 %v3268, %v3266
      %v3369 = vpack.c.bf16 %v3273, %v3271
      %v3370 = vpack.c.bf16 %v3278, %v3276
      %v3371 = vpack.c.bf16 %v3283, %v3281
      %v3372 = vpack.c.bf16 %v3288, %v3286
      %v3373 = vpack.c.bf16 %v3293, %v3291
      %v3374 = vpack.c.bf16 %v3298, %v3296
      %v3375 = vpack.c.bf16 %v3303, %v3301
      %v3376 = vpack.c.bf16 %v3308, %v3306
      %v3377 = vpack.c.bf16 %v3313, %v3311
      %v3378 = vpack.c.bf16 %v3318, %v3316
      %v3379 = vpack.c.bf16 %v3323, %v3321
      %v3380 = vpack.c.bf16 %v3328, %v3326
      %v3381 = vpack.c.bf16 %v3333, %v3331
      %v3382 = vld [vmem:[%s5] sm:$0xf]
      %v3383 = vld [vmem:[%s5 + $0x4] sm:$0xf]
      %v3384 = vld [vmem:[%s5 + $0x8] sm:$0xf]
      %v3385 = vld [vmem:[%s5 + $0xc] sm:$0xf]
      %v3386 = vld [vmem:[%s5 + $0x10] sm:$0xf]
      %v3387 = vld [vmem:[%s5 + $0x14] sm:$0xf]
      %v3388 = vld [vmem:[%s5 + $0x18] sm:$0xf]
      %v3389 = vld [vmem:[%s5 + $0x1c] sm:$0xf]
      %v3390 = vld [vmem:[%s5 + $0x20] sm:$0xf]
      %v3391 = vld [vmem:[%s5 + $0x24] sm:$0xf]
      %v3392 = vld [vmem:[%s5 + $0x28] sm:$0xf]
      %v3393 = vld [vmem:[%s5 + $0x2c] sm:$0xf]
      %v3394 = vld [vmem:[%s5 + $0x30] sm:$0xf]
      %v3395 = vld [vmem:[%s5 + $0x34] sm:$0xf]
      %v3396 = vld [vmem:[%s5 + $0x38] sm:$0xf]
      %v3397 = vld [vmem:[%s5 + $0x3c] sm:$0xf]
      %v3398 = vld [vmem:[%s6] sm:$0x1]
      %v3400 = vlaneseq
      %v3401 = vshrl.u32 %v3400, 7
      %v3402 = vsub.s32 0, %v3401
      %v3403 = vrot.slane %v3398, %v3402
      %v3421 = vunpack.c.l.b16 %v3382
      %v3422 = vunpack.c.l.b16 %v3383
      %v3423 = vunpack.c.l.b16 %v3384
      %v3424 = vunpack.c.l.b16 %v3385
      %v3425 = vunpack.c.l.b16 %v3386
      %v3426 = vunpack.c.l.b16 %v3387
      %v3427 = vunpack.c.l.b16 %v3388
      %v3428 = vunpack.c.l.b16 %v3389
      %v3429 = vunpack.c.l.b16 %v3390
      %v3430 = vunpack.c.l.b16 %v3391
      %v3431 = vunpack.c.l.b16 %v3392
      %v3432 = vunpack.c.l.b16 %v3393
      %v3433 = vunpack.c.l.b16 %v3394
      %v3434 = vunpack.c.l.b16 %v3395
      %v3435 = vunpack.c.l.b16 %v3396
      %v3436 = vunpack.c.l.b16 %v3397
      %v3437 = vpack.c.b16 %v3422, %v3421
      %v3438 = vpack.c.b16 %v3424, %v3423
      %v3439 = vpack.c.b16 %v3426, %v3425
      %v3440 = vpack.c.b16 %v3428, %v3427
      %v3441 = vpack.c.b16 %v3430, %v3429
      %v3442 = vpack.c.b16 %v3432, %v3431
      %v3443 = vpack.c.b16 %v3434, %v3433
      %v3444 = vpack.c.b16 %v3436, %v3435
      %3453 = vmatprep.subr.bf16.mxu0 0
      %3454 = vmatpush1.bf16.msra.mxu0 %v3437
      %3455 = vmatprep.subr.bf16.mxu0 0
      %3456 = vmatpush1.bf16.msra.mxu0 %v3438
      %3457 = vmatprep.subr.bf16.mxu0 0
      %3458 = vmatpush1.bf16.msra.mxu0 %v3439
      %3459 = vmatprep.subr.bf16.mxu0 0
      %3460 = vmatpush1.bf16.msra.mxu0 %v3440
      %3461 = vmatprep.subr.bf16.mxu0 0
      %3462 = vmatpush1.bf16.msra.mxu0 %v3441
      %3463 = vmatprep.subr.bf16.mxu0 0
      %3464 = vmatpush1.bf16.msra.mxu0 %v3442
      %3465 = vmatprep.subr.bf16.mxu0 0
      %3466 = vmatpush1.bf16.msra.mxu0 %v3443
      %3467 = vmatprep.subr.bf16.mxu0 0
      %3468 = vmatpush1.bf16.msra.mxu0 %v3444
      %3469 = vmatprep.subr.bf16.mxu0 0
      %3470 = vmatpush1.bf16.msra.mxu0 0
      %3471 = vmatprep.subr.bf16.mxu0 0
      %3472 = vmatpush1.bf16.msra.mxu0 0
      %3473 = vmatprep.subr.bf16.mxu0 0
      %3474 = vmatpush1.bf16.msra.mxu0 0
      %3475 = vmatprep.subr.bf16.mxu0 0
      %3476 = vmatpush1.bf16.msra.mxu0 0
      %3477 = vmatprep.subr.bf16.mxu0 0
      %3478 = vmatpush1.bf16.msra.mxu0 0
      %3479 = vmatprep.subr.bf16.mxu0 0
      %3480 = vmatpush1.bf16.msra.mxu0 0
      %3481 = vmatprep.subr.bf16.mxu0 0
      %3482 = vmatpush1.bf16.msra.mxu0 0
      %3483 = vmatprep.subr.bf16.mxu0 0
      %3484 = vmatpush1.bf16.msra.mxu0 0
      %3485 = vmatprep.mubr.bf16.mxu0 0
      %3486 = vmatmul.mubr.bf16.gmra.mrb[0].mxu0 %v3366
      %v3487 = vpop.f32.mrb[0].mxu0
      %v3488 = vadd.f32 %v3403, %v3487
      %v3489 = vpop.f32.mrb[0].mxu0
      %v3490 = vpop.f32.mrb[0].mxu0
      %v3491 = vadd.f32 %v3403, %v3490
      %v3492 = vpop.f32.mrb[0].mxu0
      %3493 = vmatprep.mubr.bf16.mxu0 0
      %3494 = vmatmul.mubr.bf16.gmra.mrb[0].mxu0 %v3367
      %v3495 = vpop.f32.mrb[0].mxu0
      %v3496 = vadd.f32 %v3403, %v3495
      %v3497 = vpop.f32.mrb[0].mxu0
      %v3498 = vpop.f32.mrb[0].mxu0
      %v3499 = vadd.f32 %v3403, %v3498
      %v3500 = vpop.f32.mrb[0].mxu0
      %3501 = vmatprep.mubr.bf16.mxu0 0
      %3502 = vmatmul.mubr.bf16.gmra.mrb[0].mxu0 %v3368
      %v3503 = vpop.f32.mrb[0].mxu0
      %v3504 = vadd.f32 %v3403, %v3503
      %v3505 = vpop.f32.mrb[0].mxu0
      %v3506 = vpop.f32.mrb[0].mxu0
      %v3507 = vadd.f32 %v3403, %v3506
      %v3508 = vpop.f32.mrb[0].mxu0
      %3509 = vmatprep.mubr.bf16.mxu0 0
      %3510 = vmatmul.mubr.bf16.gmra.mrb[0].mxu0 %v3369
      %v3511 = vpop.f32.mrb[0].mxu0
      %v3512 = vadd.f32 %v3403, %v3511
      %v3513 = vpop.f32.mrb[0].mxu0
      %v3514 = vpop.f32.mrb[0].mxu0
      %v3515 = vadd.f32 %v3403, %v3514
      %v3516 = vpop.f32.mrb[0].mxu0
      %3517 = vmatprep.mubr.bf16.mxu0 0
      %3518 = vmatmul.mubr.bf16.gmra.mrb[0].mxu0 %v3370
      %v3519 = vpop.f32.mrb[0].mxu0
      %v3520 = vadd.f32 %v3403, %v3519
      %v3521 = vpop.f32.mrb[0].mxu0
      %v3522 = vpop.f32.mrb[0].mxu0
      %v3523 = vadd.f32 %v3403, %v3522
      %v3524 = vpop.f32.mrb[0].mxu0
      %3525 = vmatprep.mubr.bf16.mxu0 0
      %3526 = vmatmul.mubr.bf16.gmra.mrb[0].mxu0 %v3371
      %v3527 = vpop.f32.mrb[0].mxu0
      %v3528 = vadd.f32 %v3403, %v3527
      %v3529 = vpop.f32.mrb[0].mxu0
      %v3530 = vpop.f32.mrb[0].mxu0
      %v3531 = vadd.f32 %v3403, %v3530
      %v3532 = vpop.f32.mrb[0].mxu0
      %3533 = vmatprep.mubr.bf16.mxu0 0
      %3534 = vmatmul.mubr.bf16.gmra.mrb[0].mxu0 %v3372
      %v3535 = vpop.f32.mrb[0].mxu0
      %v3536 = vadd.f32 %v3403, %v3535
      %v3537 = vpop.f32.mrb[0].mxu0
      %v3538 = vpop.f32.mrb[0].mxu0
      %v3539 = vadd.f32 %v3403, %v3538
      %v3540 = vpop.f32.mrb[0].mxu0
      %3541 = vmatprep.mubr.bf16.mxu0 0
      %3542 = vmatmul.mubr.bf16.gmra.mrb[0].mxu0 %v3373
      %v3543 = vpop.f32.mrb[0].mxu0
      %v3544 = vadd.f32 %v3403, %v3543
      %v3545 = vpop.f32.mrb[0].mxu0
      %v3546 = vpop.f32.mrb[0].mxu0
      %v3547 = vadd.f32 %v3403, %v3546
      %v3548 = vpop.f32.mrb[0].mxu0
      %3549 = vmatprep.mubr.bf16.mxu0 0
      %3550 = vmatmul.mubr.bf16.gmra.mrb[0].mxu0 %v3374
      %v3551 = vpop.f32.mrb[0].mxu0
      %v3552 = vadd.f32 %v3403, %v3551
      %v3553 = vpop.f32.mrb[0].mxu0
      %v3554 = vpop.f32.mrb[0].mxu0
      %v3555 = vadd.f32 %v3403, %v3554
      %v3556 = vpop.f32.mrb[0].mxu0
      %3557 = vmatprep.mubr.bf16.mxu0 0
      %3558 = vmatmul.mubr.bf16.gmra.mrb[0].mxu0 %v3375
      %v3559 = vpop.f32.mrb[0].mxu0
      %v3560 = vadd.f32 %v3403, %v3559
      %v3561 = vpop.f32.mrb[0].mxu0
      %v3562 = vpop.f32.mrb[0].mxu0
      %v3563 = vadd.f32 %v3403, %v3562
      %v3564 = vpop.f32.mrb[0].mxu0
      %3565 = vmatprep.mubr.bf16.mxu0 0
      %3566 = vmatmul.mubr.bf16.gmra.mrb[0].mxu0 %v3376
      %v3567 = vpop.f32.mrb[0].mxu0
      %v3568 = vadd.f32 %v3403, %v3567
      %v3569 = vpop.f32.mrb[0].mxu0
      %v3570 = vpop.f32.mrb[0].mxu0
      %v3571 = vadd.f32 %v3403, %v3570
      %v3572 = vpop.f32.mrb[0].mxu0
      %3573 = vmatprep.mubr.bf16.mxu0 0
      %3574 = vmatmul.mubr.bf16.gmra.mrb[0].mxu0 %v3377
      %v3575 = vpop.f32.mrb[0].mxu0
      %v3576 = vadd.f32 %v3403, %v3575
      %v3577 = vpop.f32.mrb[0].mxu0
      %v3578 = vpop.f32.mrb[0].mxu0
      %v3579 = vadd.f32 %v3403, %v3578
      %v3580 = vpop.f32.mrb[0].mxu0
      %3581 = vmatprep.mubr.bf16.mxu0 0
      %3582 = vmatmul.mubr.bf16.gmra.mrb[0].mxu0 %v3378
      %v3583 = vpop.f32.mrb[0].mxu0
      %v3584 = vadd.f32 %v3403, %v3583
      %v3585 = vpop.f32.mrb[0].mxu0
      %v3586 = vpop.f32.mrb[0].mxu0
      %v3587 = vadd.f32 %v3403, %v3586
      %v3588 = vpop.f32.mrb[0].mxu0
      %3589 = vmatprep.mubr.bf16.mxu0 0
      %3590 = vmatmul.mubr.bf16.gmra.mrb[0].mxu0 %v3379
      %v3591 = vpop.f32.mrb[0].mxu0
      %v3592 = vadd.f32 %v3403, %v3591
      %v3593 = vpop.f32.mrb[0].mxu0
      %v3594 = vpop.f32.mrb[0].mxu0
      %v3595 = vadd.f32 %v3403, %v3594
      %v3596 = vpop.f32.mrb[0].mxu0
      %3597 = vmatprep.mubr.bf16.mxu0 0
      %3598 = vmatmul.mubr.bf16.gmra.mrb[0].mxu0 %v3380
      %v3599 = vpop.f32.mrb[0].mxu0
      %v3600 = vadd.f32 %v3403, %v3599
      %v3601 = vpop.f32.mrb[0].mxu0
      %v3602 = vpop.f32.mrb[0].mxu0
      %v3603 = vadd.f32 %v3403, %v3602
      %v3604 = vpop.f32.mrb[0].mxu0
      %3605 = vmatprep.mubr.bf16.mxu0 0
      %3606 = vmatmul.mubr.bf16.gmra.mrb[0].mxu0 %v3381
      %v3607 = vpop.f32.mrb[0].mxu0
      %v3608 = vadd.f32 %v3403, %v3607
      %v3609 = vpop.f32.mrb[0].mxu0
      %v3610 = vpop.f32.mrb[0].mxu0
      %v3611 = vadd.f32 %v3403, %v3610
      %v3612 = vpop.f32.mrb[0].mxu0
      %3613 = vdwg.mxu0
      %v3614 = vmax.f32 %v3488, 0.0
      %v3615 = vmax.f32 %v3491, 0.0
      %v3616 = vmax.f32 %v3496, 0.0
      %v3617 = vmax.f32 %v3499, 0.0
      %v3618 = vmax.f32 %v3504, 0.0
      %v3619 = vmax.f32 %v3507, 0.0
      %v3620 = vmax.f32 %v3512, 0.0
      %v3621 = vmax.f32 %v3515, 0.0
      %v3622 = vmax.f32 %v3520, 0.0
      %v3623 = vmax.f32 %v3523, 0.0
      %v3624 = vmax.f32 %v3528, 0.0
      %v3625 = vmax.f32 %v3531, 0.0
      %v3626 = vmax.f32 %v3536, 0.0
      %v3627 = vmax.f32 %v3539, 0.0
      %v3628 = vmax.f32 %v3544, 0.0
      %v3629 = vmax.f32 %v3547, 0.0
      %v3630 = vmax.f32 %v3552, 0.0
      %v3631 = vmax.f32 %v3555, 0.0
      %v3632 = vmax.f32 %v3560, 0.0
      %v3633 = vmax.f32 %v3563, 0.0
      %v3634 = vmax.f32 %v3568, 0.0
      %v3635 = vmax.f32 %v3571, 0.0
      %v3636 = vmax.f32 %v3576, 0.0
      %v3637 = vmax.f32 %v3579, 0.0
      %v3638 = vmax.f32 %v3584, 0.0
      %v3639 = vmax.f32 %v3587, 0.0
      %v3640 = vmax.f32 %v3592, 0.0
      %v3641 = vmax.f32 %v3595, 0.0
      %v3642 = vmax.f32 %v3600, 0.0
      %v3643 = vmax.f32 %v3603, 0.0
      %v3644 = vmax.f32 %v3608, 0.0
      %v3645 = vmax.f32 %v3611, 0.0
      %v3646 = vmin.f32 %v3614, 6.0
      %v3647 = vmin.f32 %v3615, 6.0
      %v3648 = vmin.f32 %v3616, 6.0
      %v3649 = vmin.f32 %v3617, 6.0
      %v3650 = vmin.f32 %v3618, 6.0
      %v3651 = vmin.f32 %v3619, 6.0
      %v3652 = vmin.f32 %v3620, 6.0
      %v3653 = vmin.f32 %v3621, 6.0
      %v3654 = vmin.f32 %v3622, 6.0
      %v3655 = vmin.f32 %v3623, 6.0
      %v3656 = vmin.f32 %v3624, 6.0
      %v3657 = vmin.f32 %v3625, 6.0
      %v3658 = vmin.f32 %v3626, 6.0
      %v3659 = vmin.f32 %v3627, 6.0
      %v3660 = vmin.f32 %v3628, 6.0
      %v3661 = vmin.f32 %v3629, 6.0
      %v3662 = vmin.f32 %v3630, 6.0
      %v3663 = vmin.f32 %v3631, 6.0
      %v3664 = vmin.f32 %v3632, 6.0
      %v3665 = vmin.f32 %v3633, 6.0
      %v3666 = vmin.f32 %v3634, 6.0
      %v3667 = vmin.f32 %v3635, 6.0
      %v3668 = vmin.f32 %v3636, 6.0
      %v3669 = vmin.f32 %v3637, 6.0
      %v3670 = vmin.f32 %v3638, 6.0
      %v3671 = vmin.f32 %v3639, 6.0
      %v3672 = vmin.f32 %v3640, 6.0
      %v3673 = vmin.f32 %v3641, 6.0
      %v3674 = vmin.f32 %v3642, 6.0
      %v3675 = vmin.f32 %v3643, 6.0
      %v3676 = vmin.f32 %v3644, 6.0
      %v3677 = vmin.f32 %v3645, 6.0
      %v3678 = vpack.c.bf16 %v3647, %v3646
      %v3679 = vpack.c.bf16 %v3649, %v3648
      %v3680 = vpack.c.bf16 %v3651, %v3650
      %v3681 = vpack.c.bf16 %v3653, %v3652
      %v3682 = vpack.c.bf16 %v3655, %v3654
      %v3683 = vpack.c.bf16 %v3657, %v3656
      %v3684 = vpack.c.bf16 %v3659, %v3658
      %v3685 = vpack.c.bf16 %v3661, %v3660
      %v3686 = vpack.c.bf16 %v3663, %v3662
      %v3687 = vpack.c.bf16 %v3665, %v3664
      %v3688 = vpack.c.bf16 %v3667, %v3666
      %v3689 = vpack.c.bf16 %v3669, %v3668
      %v3690 = vpack.c.bf16 %v3671, %v3670
      %v3691 = vpack.c.bf16 %v3673, %v3672
      %v3692 = vpack.c.bf16 %v3675, %v3674
      %v3693 = vpack.c.bf16 %v3677, %v3676
      %v3694 = vld [vmem:[%s7] sm:$0xf]
      %v3695 = vld [vmem:[%s7 + $0x4] sm:$0xf]
      %v3696 = vld [vmem:[%s7 + $0x8] sm:$0xf]
      %v3697 = vld [vmem:[%s7 + $0xc] sm:$0xf]
      %v3698 = vld [vmem:[%s7 + $0x10] sm:$0xf]
      %v3699 = vld [vmem:[%s7 + $0x14] sm:$0xf]
      %v3700 = vld [vmem:[%s7 + $0x18] sm:$0xf]
      %v3701 = vld [vmem:[%s7 + $0x1c] sm:$0xf]
      %v3702 = vld [vmem:[%s7 + $0x20] sm:$0xf]
      %v3703 = vld [vmem:[%s7 + $0x24] sm:$0xf]
      %v3704 = vld [vmem:[%s7 + $0x28] sm:$0xf]
      %v3705 = vld [vmem:[%s7 + $0x2c] sm:$0xf]
      %v3706 = vld [vmem:[%s7 + $0x30] sm:$0xf]
      %v3707 = vld [vmem:[%s7 + $0x34] sm:$0xf]
      %v3708 = vld [vmem:[%s7 + $0x38] sm:$0xf]
      %v3709 = vld [vmem:[%s7 + $0x3c] sm:$0xf]
      %v3710 = vld [vmem:[%s8] sm:$0x1]
      %v3712 = vlaneseq
      %v3713 = vshrl.u32 %v3712, 7
      %v3714 = vsub.s32 0, %v3713
      %v3715 = vrot.slane %v3710, %v3714
      %v3733 = vunpack.c.l.b16 %v3694
      %v3734 = vunpack.c.l.b16 %v3695
      %v3735 = vunpack.c.l.b16 %v3696
      %v3736 = vunpack.c.l.b16 %v3697
      %v3737 = vunpack.c.l.b16 %v3698
      %v3738 = vunpack.c.l.b16 %v3699
      %v3739 = vunpack.c.l.b16 %v3700
      %v3740 = vunpack.c.l.b16 %v3701
      %v3741 = vunpack.c.l.b16 %v3702
      %v3742 = vunpack.c.l.b16 %v3703
      %v3743 = vunpack.c.l.b16 %v3704
      %v3744 = vunpack.c.l.b16 %v3705
      %v3745 = vunpack.c.l.b16 %v3706
      %v3746 = vunpack.c.l.b16 %v3707
      %v3747 = vunpack.c.l.b16 %v3708
      %v3748 = vunpack.c.l.b16 %v3709
      %v3749 = vpack.c.b16 %v3734, %v3733
      %v3750 = vpack.c.b16 %v3736, %v3735
      %v3751 = vpack.c.b16 %v3738, %v3737
      %v3752 = vpack.c.b16 %v3740, %v3739
      %v3753 = vpack.c.b16 %v3742, %v3741
      %v3754 = vpack.c.b16 %v3744, %v3743
      %v3755 = vpack.c.b16 %v3746, %v3745
      %v3756 = vpack.c.b16 %v3748, %v3747
      %3765 = vmatprep.subr.bf16.mxu0 0
      %3766 = vmatpush1.bf16.msra.mxu0 %v3749
      %3767 = vmatprep.subr.bf16.mxu0 0
      %3768 = vmatpush1.bf16.msra.mxu0 %v3750
      %3769 = vmatprep.subr.bf16.mxu0 0
      %3770 = vmatpush1.bf16.msra.mxu0 %v3751
      %3771 = vmatprep.subr.bf16.mxu0 0
      %3772 = vmatpush1.bf16.msra.mxu0 %v3752
      %3773 = vmatprep.subr.bf16.mxu0 0
      %3774 = vmatpush1.bf16.msra.mxu0 %v3753
      %3775 = vmatprep.subr.bf16.mxu0 0
      %3776 = vmatpush1.bf16.msra.mxu0 %v3754
      %3777 = vmatprep.subr.bf16.mxu0 0
      %3778 = vmatpush1.bf16.msra.mxu0 %v3755
      %3779 = vmatprep.subr.bf16.mxu0 0
      %3780 = vmatpush1.bf16.msra.mxu0 %v3756
      %3781 = vmatprep.subr.bf16.mxu0 0
      %3782 = vmatpush1.bf16.msra.mxu0 0
      %3783 = vmatprep.subr.bf16.mxu0 0
      %3784 = vmatpush1.bf16.msra.mxu0 0
      %3785 = vmatprep.subr.bf16.mxu0 0
      %3786 = vmatpush1.bf16.msra.mxu0 0
      %3787 = vmatprep.subr.bf16.mxu0 0
      %3788 = vmatpush1.bf16.msra.mxu0 0
      %3789 = vmatprep.subr.bf16.mxu0 0
      %3790 = vmatpush1.bf16.msra.mxu0 0
      %3791 = vmatprep.subr.bf16.mxu0 0
      %3792 = vmatpush1.bf16.msra.mxu0 0
      %3793 = vmatprep.subr.bf16.mxu0 0
      %3794 = vmatpush1.bf16.msra.mxu0 0
      %3795 = vmatprep.subr.bf16.mxu0 0
      %3796 = vmatpush1.bf16.msra.mxu0 0
      %3797 = vmatprep.mubr.bf16.mxu0 0
      %3798 = vmatmul.mubr.bf16.gmra.mrb[0].mxu0 %v3678
      %v3799 = vpop.f32.mrb[0].mxu0
      %v3800 = vadd.f32 %v3715, %v3799
      %v3801 = vpop.f32.mrb[0].mxu0
      %v3802 = vpop.f32.mrb[0].mxu0
      %v3803 = vadd.f32 %v3715, %v3802
      %v3804 = vpop.f32.mrb[0].mxu0
      %3805 = vmatprep.mubr.bf16.mxu0 0
      %3806 = vmatmul.mubr.bf16.gmra.mrb[0].mxu0 %v3679
      %v3807 = vpop.f32.mrb[0].mxu0
      %v3808 = vadd.f32 %v3715, %v3807
      %v3809 = vpop.f32.mrb[0].mxu0
      %v3810 = vpop.f32.mrb[0].mxu0
      %v3811 = vadd.f32 %v3715, %v3810
      %v3812 = vpop.f32.mrb[0].mxu0
      %3813 = vmatprep.mubr.bf16.mxu0 0
      %3814 = vmatmul.mubr.bf16.gmra.mrb[0].mxu0 %v3680
      %v3815 = vpop.f32.mrb[0].mxu0
      %v3816 = vadd.f32 %v3715, %v3815
      %v3817 = vpop.f32.mrb[0].mxu0
      %v3818 = vpop.f32.mrb[0].mxu0
      %v3819 = vadd.f32 %v3715, %v3818
      %v3820 = vpop.f32.mrb[0].mxu0
      %3821 = vmatprep.mubr.bf16.mxu0 0
      %3822 = vmatmul.mubr.bf16.gmra.mrb[0].mxu0 %v3681
      %v3823 = vpop.f32.mrb[0].mxu0
      %v3824 = vadd.f32 %v3715, %v3823
      %v3825 = vpop.f32.mrb[0].mxu0
      %v3826 = vpop.f32.mrb[0].mxu0
      %v3827 = vadd.f32 %v3715, %v3826
      %v3828 = vpop.f32.mrb[0].mxu0
      %3829 = vmatprep.mubr.bf16.mxu0 0
      %3830 = vmatmul.mubr.bf16.gmra.mrb[0].mxu0 %v3682
      %v3831 = vpop.f32.mrb[0].mxu0
      %v3832 = vadd.f32 %v3715, %v3831
      %v3833 = vpop.f32.mrb[0].mxu0
      %v3834 = vpop.f32.mrb[0].mxu0
      %v3835 = vadd.f32 %v3715, %v3834
      %v3836 = vpop.f32.mrb[0].mxu0
      %3837 = vmatprep.mubr.bf16.mxu0 0
      %3838 = vmatmul.mubr.bf16.gmra.mrb[0].mxu0 %v3683
      %v3839 = vpop.f32.mrb[0].mxu0
      %v3840 = vadd.f32 %v3715, %v3839
      %v3841 = vpop.f32.mrb[0].mxu0
      %v3842 = vpop.f32.mrb[0].mxu0
      %v3843 = vadd.f32 %v3715, %v3842
      %v3844 = vpop.f32.mrb[0].mxu0
      %3845 = vmatprep.mubr.bf16.mxu0 0
      %3846 = vmatmul.mubr.bf16.gmra.mrb[0].mxu0 %v3684
      %v3847 = vpop.f32.mrb[0].mxu0
      %v3848 = vadd.f32 %v3715, %v3847
      %v3849 = vpop.f32.mrb[0].mxu0
      %v3850 = vpop.f32.mrb[0].mxu0
      %v3851 = vadd.f32 %v3715, %v3850
      %v3852 = vpop.f32.mrb[0].mxu0
      %3853 = vmatprep.mubr.bf16.mxu0 0
      %3854 = vmatmul.mubr.bf16.gmra.mrb[0].mxu0 %v3685
      %v3855 = vpop.f32.mrb[0].mxu0
      %v3856 = vadd.f32 %v3715, %v3855
      %v3857 = vpop.f32.mrb[0].mxu0
      %v3858 = vpop.f32.mrb[0].mxu0
      %v3859 = vadd.f32 %v3715, %v3858
      %v3860 = vpop.f32.mrb[0].mxu0
      %3861 = vmatprep.mubr.bf16.mxu0 0
      %3862 = vmatmul.mubr.bf16.gmra.mrb[0].mxu0 %v3686
      %v3863 = vpop.f32.mrb[0].mxu0
      %v3864 = vadd.f32 %v3715, %v3863
      %v3865 = vpop.f32.mrb[0].mxu0
      %v3866 = vpop.f32.mrb[0].mxu0
      %v3867 = vadd.f32 %v3715, %v3866
      %v3868 = vpop.f32.mrb[0].mxu0
      %3869 = vmatprep.mubr.bf16.mxu0 0
      %3870 = vmatmul.mubr.bf16.gmra.mrb[0].mxu0 %v3687
      %v3871 = vpop.f32.mrb[0].mxu0
      %v3872 = vadd.f32 %v3715, %v3871
      %v3873 = vpop.f32.mrb[0].mxu0
      %v3874 = vpop.f32.mrb[0].mxu0
      %v3875 = vadd.f32 %v3715, %v3874
      %v3876 = vpop.f32.mrb[0].mxu0
      %3877 = vmatprep.mubr.bf16.mxu0 0
      %3878 = vmatmul.mubr.bf16.gmra.mrb[0].mxu0 %v3688
      %v3879 = vpop.f32.mrb[0].mxu0
      %v3880 = vadd.f32 %v3715, %v3879
      %v3881 = vpop.f32.mrb[0].mxu0
      %v3882 = vpop.f32.mrb[0].mxu0
      %v3883 = vadd.f32 %v3715, %v3882
      %v3884 = vpop.f32.mrb[0].mxu0
      %3885 = vmatprep.mubr.bf16.mxu0 0
      %3886 = vmatmul.mubr.bf16.gmra.mrb[0].mxu0 %v3689
      %v3887 = vpop.f32.mrb[0].mxu0
      %v3888 = vadd.f32 %v3715, %v3887
      %v3889 = vpop.f32.mrb[0].mxu0
      %v3890 = vpop.f32.mrb[0].mxu0
      %v3891 = vadd.f32 %v3715, %v3890
      %v3892 = vpop.f32.mrb[0].mxu0
      %3893 = vmatprep.mubr.bf16.mxu0 0
      %3894 = vmatmul.mubr.bf16.gmra.mrb[0].mxu0 %v3690
      %v3895 = vpop.f32.mrb[0].mxu0
      %v3896 = vadd.f32 %v3715, %v3895
      %v3897 = vpop.f32.mrb[0].mxu0
      %v3898 = vpop.f32.mrb[0].mxu0
      %v3899 = vadd.f32 %v3715, %v3898
      %v3900 = vpop.f32.mrb[0].mxu0
      %3901 = vmatprep.mubr.bf16.mxu0 0
      %3902 = vmatmul.mubr.bf16.gmra.mrb[0].mxu0 %v3691
      %v3903 = vpop.f32.mrb[0].mxu0
      %v3904 = vadd.f32 %v3715, %v3903
      %v3905 = vpop.f32.mrb[0].mxu0
      %v3906 = vpop.f32.mrb[0].mxu0
      %v3907 = vadd.f32 %v3715, %v3906
      %v3908 = vpop.f32.mrb[0].mxu0
      %3909 = vmatprep.mubr.bf16.mxu0 0
      %3910 = vmatmul.mubr.bf16.gmra.mrb[0].mxu0 %v3692
      %v3911 = vpop.f32.mrb[0].mxu0
      %v3912 = vadd.f32 %v3715, %v3911
      %v3913 = vpop.f32.mrb[0].mxu0
      %v3914 = vpop.f32.mrb[0].mxu0
      %v3915 = vadd.f32 %v3715, %v3914
      %v3916 = vpop.f32.mrb[0].mxu0
      %3917 = vmatprep.mubr.bf16.mxu0 0
      %3918 = vmatmul.mubr.bf16.gmra.mrb[0].mxu0 %v3693
      %v3919 = vpop.f32.mrb[0].mxu0
      %v3920 = vadd.f32 %v3715, %v3919
      %v3921 = vpop.f32.mrb[0].mxu0
      %v3922 = vpop.f32.mrb[0].mxu0
      %v3923 = vadd.f32 %v3715, %v3922
      %v3924 = vpop.f32.mrb[0].mxu0
      %3925 = vdwg.mxu0
      %v3926 = vld [vmem:[%s9] sm:$0xf]
      %v3927 = vld [vmem:[%s9 + $0x4] sm:$0xf]
      %v3930 = vunpack.c.l.b16 %v3926
      %v3931 = vunpack.c.l.b16 %v3927
      %v3932 = vpack.c.b16 %v3931, %v3930
      %3934 = vmatprep.subr.bf16.mxu0 0
      %3935 = vmatpush1.bf16.msra.mxu0 %v3932
      %3936 = vmatprep.subr.bf16.mxu0 0
      %3937 = vmatpush1.bf16.msra.mxu0 0
      %3938 = vmatprep.subr.bf16.mxu0 0
      %3939 = vmatpush1.bf16.msra.mxu0 0
      %3940 = vmatprep.subr.bf16.mxu0 0
      %3941 = vmatpush1.bf16.msra.mxu0 0
      %3942 = vmatprep.subr.bf16.mxu0 0
      %3943 = vmatpush1.bf16.msra.mxu0 0
      %3944 = vmatprep.subr.bf16.mxu0 0
      %3945 = vmatpush1.bf16.msra.mxu0 0
      %3946 = vmatprep.subr.bf16.mxu0 0
      %3947 = vmatpush1.bf16.msra.mxu0 0
      %3948 = vmatprep.subr.bf16.mxu0 0
      %3949 = vmatpush1.bf16.msra.mxu0 0
      %3950 = vmatprep.subr.bf16.mxu0 0
      %3951 = vmatpush1.bf16.msra.mxu0 0
      %3952 = vmatprep.subr.bf16.mxu0 0
      %3953 = vmatpush1.bf16.msra.mxu0 0
      %3954 = vmatprep.subr.bf16.mxu0 0
      %3955 = vmatpush1.bf16.msra.mxu0 0
      %3956 = vmatprep.subr.bf16.mxu0 0
      %3957 = vmatpush1.bf16.msra.mxu0 0
      %3958 = vmatprep.subr.bf16.mxu0 0
      %3959 = vmatpush1.bf16.msra.mxu0 0
      %3960 = vmatprep.subr.bf16.mxu0 0
      %3961 = vmatpush1.bf16.msra.mxu0 0
      %3962 = vmatprep.subr.bf16.mxu0 0
      %3963 = vmatpush1.bf16.msra.mxu0 0
      %3964 = vmatprep.subr.bf16.mxu0 0
      %3965 = vmatpush1.bf16.msra.mxu0 0
      %3966 = vmatprep.mubr.bf16.mxu0 0
      %3967 = vmatmul.mubr.bf16.gmra.mrb[0].mxu0 %v605
      %v3968 = vpop.f32.mrb[0].mxu0
      %v3969 = vadd.f32 0.0, %v3968
      %v3970 = vpop.f32.mrb[0].mxu0
      %v3971 = vpop.f32.mrb[0].mxu0
      %v3972 = vadd.f32 0.0, %v3971
      %v3973 = vpop.f32.mrb[0].mxu0
      %3974 = vmatprep.mubr.bf16.mxu0 0
      %3975 = vmatmul.mubr.bf16.gmra.mrb[0].mxu0 %v608
      %v3976 = vpop.f32.mrb[0].mxu0
      %v3977 = vadd.f32 0.0, %v3976
      %v3978 = vpop.f32.mrb[0].mxu0
      %v3979 = vpop.f32.mrb[0].mxu0
      %v3980 = vadd.f32 0.0, %v3979
      %v3981 = vpop.f32.mrb[0].mxu0
      %3982 = vmatprep.mubr.bf16.mxu0 0
      %3983 = vmatmul.mubr.bf16.gmra.mrb[0].mxu0 %v611
      %v3984 = vpop.f32.mrb[0].mxu0
      %v3985 = vadd.f32 0.0, %v3984
      %v3986 = vpop.f32.mrb[0].mxu0
      %v3987 = vpop.f32.mrb[0].mxu0
      %v3988 = vadd.f32 0.0, %v3987
      %v3989 = vpop.f32.mrb[0].mxu0
      %3990 = vmatprep.mubr.bf16.mxu0 0
      %3991 = vmatmul.mubr.bf16.gmra.mrb[0].mxu0 %v614
      %v3992 = vpop.f32.mrb[0].mxu0
      %v3993 = vadd.f32 0.0, %v3992
      %v3994 = vpop.f32.mrb[0].mxu0
      %v3995 = vpop.f32.mrb[0].mxu0
      %v3996 = vadd.f32 0.0, %v3995
      %v3997 = vpop.f32.mrb[0].mxu0
      %3998 = vmatprep.mubr.bf16.mxu0 0
      %3999 = vmatmul.mubr.bf16.gmra.mrb[0].mxu0 %v617
      %v4000 = vpop.f32.mrb[0].mxu0
      %v4001 = vadd.f32 0.0, %v4000
      %v4002 = vpop.f32.mrb[0].mxu0
      %v4003 = vpop.f32.mrb[0].mxu0
      %v4004 = vadd.f32 0.0, %v4003
      %v4005 = vpop.f32.mrb[0].mxu0
      %4006 = vmatprep.mubr.bf16.mxu0 0
      %4007 = vmatmul.mubr.bf16.gmra.mrb[0].mxu0 %v620
      %v4008 = vpop.f32.mrb[0].mxu0
      %v4009 = vadd.f32 0.0, %v4008
      %v4010 = vpop.f32.mrb[0].mxu0
      %v4011 = vpop.f32.mrb[0].mxu0
      %v4012 = vadd.f32 0.0, %v4011
      %v4013 = vpop.f32.mrb[0].mxu0
      %4014 = vmatprep.mubr.bf16.mxu0 0
      %4015 = vmatmul.mubr.bf16.gmra.mrb[0].mxu0 %v623
      %v4016 = vpop.f32.mrb[0].mxu0
      %v4017 = vadd.f32 0.0, %v4016
      %v4018 = vpop.f32.mrb[0].mxu0
      %v4019 = vpop.f32.mrb[0].mxu0
      %v4020 = vadd.f32 0.0, %v4019
      %v4021 = vpop.f32.mrb[0].mxu0
      %4022 = vmatprep.mubr.bf16.mxu0 0
      %4023 = vmatmul.mubr.bf16.gmra.mrb[0].mxu0 %v626
      %v4024 = vpop.f32.mrb[0].mxu0
      %v4025 = vadd.f32 0.0, %v4024
      %v4026 = vpop.f32.mrb[0].mxu0
      %v4027 = vpop.f32.mrb[0].mxu0
      %v4028 = vadd.f32 0.0, %v4027
      %v4029 = vpop.f32.mrb[0].mxu0
      %4030 = vmatprep.mubr.bf16.mxu0 0
      %4031 = vmatmul.mubr.bf16.gmra.mrb[0].mxu0 %v629
      %v4032 = vpop.f32.mrb[0].mxu0
      %v4033 = vadd.f32 0.0, %v4032
      %v4034 = vpop.f32.mrb[0].mxu0
      %v4035 = vpop.f32.mrb[0].mxu0
      %v4036 = vadd.f32 0.0, %v4035
      %v4037 = vpop.f32.mrb[0].mxu0
      %4038 = vmatprep.mubr.bf16.mxu0 0
      %4039 = vmatmul.mubr.bf16.gmra.mrb[0].mxu0 %v632
      %v4040 = vpop.f32.mrb[0].mxu0
      %v4041 = vadd.f32 0.0, %v4040
      %v4042 = vpop.f32.mrb[0].mxu0
      %v4043 = vpop.f32.mrb[0].mxu0
      %v4044 = vadd.f32 0.0, %v4043
      %v4045 = vpop.f32.mrb[0].mxu0
      %4046 = vmatprep.mubr.bf16.mxu0 0
      %4047 = vmatmul.mubr.bf16.gmra.mrb[0].mxu0 %v635
      %v4048 = vpop.f32.mrb[0].mxu0
      %v4049 = vadd.f32 0.0, %v4048
      %v4050 = vpop.f32.mrb[0].mxu0
      %v4051 = vpop.f32.mrb[0].mxu0
      %v4052 = vadd.f32 0.0, %v4051
      %v4053 = vpop.f32.mrb[0].mxu0
      %4054 = vmatprep.mubr.bf16.mxu0 0
      %4055 = vmatmul.mubr.bf16.gmra.mrb[0].mxu0 %v638
      %v4056 = vpop.f32.mrb[0].mxu0
      %v4057 = vadd.f32 0.0, %v4056
      %v4058 = vpop.f32.mrb[0].mxu0
      %v4059 = vpop.f32.mrb[0].mxu0
      %v4060 = vadd.f32 0.0, %v4059
      %v4061 = vpop.f32.mrb[0].mxu0
      %4062 = vmatprep.mubr.bf16.mxu0 0
      %4063 = vmatmul.mubr.bf16.gmra.mrb[0].mxu0 %v641
      %v4064 = vpop.f32.mrb[0].mxu0
      %v4065 = vadd.f32 0.0, %v4064
      %v4066 = vpop.f32.mrb[0].mxu0
      %v4067 = vpop.f32.mrb[0].mxu0
      %v4068 = vadd.f32 0.0, %v4067
      %v4069 = vpop.f32.mrb[0].mxu0
      %4070 = vmatprep.mubr.bf16.mxu0 0
      %4071 = vmatmul.mubr.bf16.gmra.mrb[0].mxu0 %v644
      %v4072 = vpop.f32.mrb[0].mxu0
      %v4073 = vadd.f32 0.0, %v4072
      %v4074 = vpop.f32.mrb[0].mxu0
      %v4075 = vpop.f32.mrb[0].mxu0
      %v4076 = vadd.f32 0.0, %v4075
      %v4077 = vpop.f32.mrb[0].mxu0
      %4078 = vmatprep.mubr.bf16.mxu0 0
      %4079 = vmatmul.mubr.bf16.gmra.mrb[0].mxu0 %v647
      %v4080 = vpop.f32.mrb[0].mxu0
      %v4081 = vadd.f32 0.0, %v4080
      %v4082 = vpop.f32.mrb[0].mxu0
      %v4083 = vpop.f32.mrb[0].mxu0
      %v4084 = vadd.f32 0.0, %v4083
      %v4085 = vpop.f32.mrb[0].mxu0
      %4086 = vmatprep.mubr.bf16.mxu0 0
      %4087 = vmatmul.mubr.bf16.gmra.mrb[0].mxu0 %v650
      %v4088 = vpop.f32.mrb[0].mxu0
      %v4089 = vadd.f32 0.0, %v4088
      %v4090 = vpop.f32.mrb[0].mxu0
      %v4091 = vpop.f32.mrb[0].mxu0
      %v4092 = vadd.f32 0.0, %v4091
      %v4093 = vpop.f32.mrb[0].mxu0
      %4094 = vdwg.mxu0
      %v4095 = vadd.f32 %v3800, %v3969
      %v4096 = vadd.f32 %v3803, %v3972
      %v4097 = vadd.f32 %v3808, %v3977
      %v4098 = vadd.f32 %v3811, %v3980
      %v4099 = vadd.f32 %v3816, %v3985
      %v4100 = vadd.f32 %v3819, %v3988
      %v4101 = vadd.f32 %v3824, %v3993
      %v4102 = vadd.f32 %v3827, %v3996
      %v4103 = vadd.f32 %v3832, %v4001
      %v4104 = vadd.f32 %v3835, %v4004
      %v4105 = vadd.f32 %v3840, %v4009
      %v4106 = vadd.f32 %v3843, %v4012
      %v4107 = vadd.f32 %v3848, %v4017
      %v4108 = vadd.f32 %v3851, %v4020
      %v4109 = vadd.f32 %v3856, %v4025
      %v4110 = vadd.f32 %v3859, %v4028
      %v4111 = vadd.f32 %v3864, %v4033
      %v4112 = vadd.f32 %v3867, %v4036
      %v4113 = vadd.f32 %v3872, %v4041
      %v4114 = vadd.f32 %v3875, %v4044
      %v4115 = vadd.f32 %v3880, %v4049
      %v4116 = vadd.f32 %v3883, %v4052
      %v4117 = vadd.f32 %v3888, %v4057
      %v4118 = vadd.f32 %v3891, %v4060
      %v4119 = vadd.f32 %v3896, %v4065
      %v4120 = vadd.f32 %v3899, %v4068
      %v4121 = vadd.f32 %v3904, %v4073
      %v4122 = vadd.f32 %v3907, %v4076
      %v4123 = vadd.f32 %v3912, %v4081
      %v4124 = vadd.f32 %v3915, %v4084
      %v4125 = vadd.f32 %v3920, %v4089
      %v4126 = vadd.f32 %v3923, %v4092
      %4127 = vst [vmem:[%s359] sm:$0xff] %v4095
      %4128 = vst [vmem:[%s359 + $0x8] sm:$0xff] %v4096
      %4129 = vst [vmem:[%s359 + $0x10] sm:$0xff] %v4097
      %4130 = vst [vmem:[%s359 + $0x18] sm:$0xff] %v4098
      %4131 = vst [vmem:[%s359 + $0x20] sm:$0xff] %v4099
      %4132 = vst [vmem:[%s359 + $0x28] sm:$0xff] %v4100
      %4133 = vst [vmem:[%s359 + $0x30] sm:$0xff] %v4101
      %4134 = vst [vmem:[%s359 + $0x38] sm:$0xff] %v4102
      %4135 = vst [vmem:[%s359 + $0x40] sm:$0xff] %v4103
      %4136 = vst [vmem:[%s359 + $0x48] sm:$0xff] %v4104
      %4137 = vst [vmem:[%s359 + $0x50] sm:$0xff] %v4105
      %4138 = vst [vmem:[%s359 + $0x58] sm:$0xff] %v4106
      %4139 = vst [vmem:[%s359 + $0x60] sm:$0xff] %v4107
      %4140 = vst [vmem:[%s359 + $0x68] sm:$0xff] %v4108
      %4141 = vst [vmem:[%s359 + $0x70] sm:$0xff] %v4109
      %4142 = vst [vmem:[%s359 + $0x78] sm:$0xff] %v4110
      %4143 = vst [vmem:[%s359 + $0x80] sm:$0xff] %v4111
      %4144 = vst [vmem:[%s359 + $0x88] sm:$0xff] %v4112
      %4145 = vst [vmem:[%s359 + $0x90] sm:$0xff] %v4113
      %4146 = vst [vmem:[%s359 + $0x98] sm:$0xff] %v4114
      %4147 = vst [vmem:[%s359 + $0xa0] sm:$0xff] %v4115
      %4148 = vst [vmem:[%s359 + $0xa8] sm:$0xff] %v4116
      %4149 = vst [vmem:[%s359 + $0xb0] sm:$0xff] %v4117
      %4150 = vst [vmem:[%s359 + $0xb8] sm:$0xff] %v4118
      %4151 = vst [vmem:[%s359 + $0xc0] sm:$0xff] %v4119
      %4152 = vst [vmem:[%s359 + $0xc8] sm:$0xff] %v4120
      %4153 = vst [vmem:[%s359 + $0xd0] sm:$0xff] %v4121
      %4154 = vst [vmem:[%s359 + $0xd8] sm:$0xff] %v4122
      %4155 = vst [vmem:[%s359 + $0xe0] sm:$0xff] %v4123
      %4156 = vst [vmem:[%s359 + $0xe8] sm:$0xff] %v4124
      %4157 = vst [vmem:[%s359 + $0xf0] sm:$0xff] %v4125
      %4158 = vst [vmem:[%s359 + $0xf8] sm:$0xff] %v4126
      %p4159 = scmp.lt.s32.totalorder %s21, 1
      %s4160 = scalar_select %p4159, %s21, 1
      %s4161 = smul.addr %s4160, 32
      %s4162 = smul.addr %s4161, 8
      %s4163 = scalar_lea.vmem %s10, %s4162
      // Predicated region
      $region65: #{bottleneck_forward.1} parent=59 // pred_check
        %p4164 = pneg %p254
      $region66: #{bottleneck_forward.1} parent=59 // pred_check_branch
        %4166 = sbr.rel (%p4164) target = $region68
      $region67: #{bottleneck_forward.1} parent=59 // pred_region
        _
      $region68: #{bottleneck_forward.1} parent=59 // pred_fallthru
        _
    $region60: #{bottleneck_forward.1} parent=5 // pred_fallthru
      _
    %p4167 = scmp.le.s32.totalorder 2, %s16
    // Predicated region
    $region69: #{bottleneck_forward.1} parent=5 // pred_check
      %p4168 = pneg %p4167
    $region70: #{bottleneck_forward.1} parent=5 // pred_check_branch
      %4170 = sbr.rel (%p4168) target = $region72
    $region71: #{bottleneck_forward.1} parent=5 // pred_region
      %s4171 = ssub.s32 %s16, 2
      // Predicated region
      $region73: #{bottleneck_forward.1} parent=71 // pred_check
        %p4172 = pneg %p260
      $region74: #{bottleneck_forward.1} parent=71 // pred_check_branch
        %4174 = sbr.rel (%p4172) target = $region76
      $region75: #{bottleneck_forward.1} parent=71 // pred_region
        %p4175 = scmp.lt.s32.totalorder %s22, 1
        %s4176 = scalar_select %p4175, %s22, 1
        %s4177 = smul.addr %s4176, 32
        %s4178 = smul.addr %s4177, 8
        %s4179 = scalar_lea.vmem %s10, %s4178
      $region76: #{bottleneck_forward.1} parent=71 // pred_fallthru
        _
    $region72: #{bottleneck_forward.1} parent=5 // pred_fallthru
      _
  $region6: #{bottleneck_forward.1} parent=0 // loop_footer
    %s20 = sadd.s32 1, %s16
  $region7: #{bottleneck_forward.1} parent=0 // loop_footer_branch
    %15 = sbr.rel target = $region3
  $region8: #{bottleneck_forward.1} parent=0 // loop_exit
    _

</llo_original>
